<compile_context>
chip_gen: v7x
topology: tpu7x:2x2x1
jax: 0.10.0
libtpu: 0.0.40
codegen_flags: <defaults>
</compile_context>

<pallas_src>
import functools

import numpy as np
import jax
import jax.numpy as jnp
from jax.experimental import pallas as pl
from jax.experimental.pallas import tpu as pltpu


LN_EPS = 1e-5  # torch.nn.LayerNorm default


def _round_up(x, m):
    return (x + m - 1) // m * m


def _grouped_mlp_ln_kernel(gid_ref, x_ref, w1_ref, b1_ref, w2_ref, b2_ref,
                           g_ref, bt_ref, o_ref):
    """One row-tile of LayerNorm(W2 @ SiLU(W1 @ x + b1) + b2) for group gid[i]."""
    del gid_ref  # only consumed by the index_maps

    # x is already bf16 (cast in the wrapper); MXU matmul with f32 accumulation.
    x = x_ref[...]

    # Linear 1 (+ bias in f32), then SiLU in bf16 (operand of the 2nd matmul
    # is bf16 anyway; bf16 EUP keeps the transcendental slot cheap on v6e/v7x).
    h = jnp.dot(x, w1_ref[0], preferred_element_type=jnp.float32) + b1_ref[0]
    h = h.astype(jnp.bfloat16)
    h = h * jax.nn.sigmoid(h)

    # Linear 2 (+ bias in f32).
    y = jnp.dot(h, w2_ref[0], preferred_element_type=jnp.float32) + b2_ref[0]

    # LayerNorm over the feature (lane) axis — two-pass statistics in f32.
    d = y.shape[-1]
    mean = jnp.sum(y, axis=-1, keepdims=True) * (1.0 / d)
    yc = y - mean
    var = jnp.sum(yc * yc, axis=-1, keepdims=True) * (1.0 / d)
    y_norm = yc * jax.lax.rsqrt(var + LN_EPS)
    o_ref[...] = (y_norm * g_ref[0] + bt_ref[0]).astype(o_ref.dtype)


def _stack_mlp_params(param_list, d_in_pad):
    """Stack per-MLP params into [G, ...] arrays; zero-pad w1 along d_in."""
    def pad_w1(w):
        w = w.astype(jnp.bfloat16)
        return jnp.pad(w, ((0, d_in_pad - w.shape[0]), (0, 0)))
    w1s = jnp.stack([pad_w1(p["w1"]) for p in param_list])                 # [G, d_in_pad, H] bf16
    b1s = jnp.stack([p["b1"].astype(jnp.float32) for p in param_list])     # [G, 1, H]  f32
    w2s = jnp.stack([p["w2"].astype(jnp.bfloat16) for p in param_list])    # [G, H, D]  bf16
    b2s = jnp.stack([p["b2"].astype(jnp.float32) for p in param_list])     # [G, 1, D]  f32
    gs = jnp.stack([p["gamma"].astype(jnp.float32) for p in param_list])   # [G, 1, D]  f32
    bts = jnp.stack([p["beta"].astype(jnp.float32) for p in param_list])   # [G, 1, D]  f32
    return w1s, b1s, w2s, b2s, gs, bts


def _choose_tile_and_vmem(tile_rows, n_rows_max, d_in_pad, hidden, d_out,
                          out_itemsize):
    """Pick a row tile that fits VMEM and a matching vmem_limit_bytes."""
    try:
        vmem_cap = int(pltpu.get_tpu_info().vmem_capacity_bytes)
    except Exception:
        vmem_cap = 64 * 2 ** 20          # assume v7x (smallest per-TC VMEM)
    budget = (vmem_cap * 3) // 4         # ~25% headroom for compiler scratch

    lane = 128

    def footprint(tile):
        return (2 * tile * max(_round_up(d_in_pad, lane), lane) * 2        # bf16 x, double-buffered
                + 2 * tile * _round_up(d_out, lane) * out_itemsize         # out, double-buffered
                + 2 * tile * (hidden + d_out) * 4                          # f32 h / y temporaries
                + 2 * (d_in_pad * hidden + hidden * d_out) * 2             # bf16 weights, dbl-buffered
                + 2 * 4 * 8 * (hidden + 3 * d_out))                        # biases / LN params

    # Tile is a multiple of 16 (bf16 sublane packing), clamped to the data so
    # tiny demo inputs are not over-padded.
    tile = max(16, min(_round_up(tile_rows, 16), _round_up(n_rows_max, 16)))
    while tile > 16 and footprint(tile) > (vmem_cap * 3) // 5:             # keep <= ~0.6 * VMEM
        tile = max(16, _round_up(tile // 2, 16))

    vmem_limit = min(budget, max(32 * 2 ** 20, 2 * footprint(tile)))
    vmem_limit = max(vmem_limit, footprint(tile) + (8 << 20))
    vmem_limit = min(vmem_limit, budget)
    return tile, int(vmem_limit)


def grouped_mesh_graph_mlp(xs, param_list, *, tile_rows=2048,
                           out_dtype=jnp.bfloat16, return_packed=False):
    """Run G independent MeshGraphMLPs (shared hidden/out dims) in one pallas_call.

    xs          : sequence of [N_g, d_in_g] arrays (features padded only to the
                  max d_in within THIS call, rounded to a multiple of 8)
    param_list  : matching sequence of param dicts (w1 [d_in, H], b1 [1, H],
                  w2 [H, D], b2 [1, D], gamma [1, D], beta [1, D])
    returns     : tuple of [N_g, D] arrays (or packed output + offsets when
                  return_packed=True, which avoids the per-group slice copies)
    """
    assert len(xs) == len(param_list) and len(xs) >= 1
    hidden = param_list[0]["w1"].shape[1]
    d_out = param_list[0]["w2"].shape[1]
    d_in_pad = _round_up(max(x.shape[1] for x in xs), 8)
    n_rows = [x.shape[0] for x in xs]

    tile, vmem_limit = _choose_tile_and_vmem(
        tile_rows, max(n_rows), d_in_pad, hidden, d_out,
        jnp.dtype(out_dtype).itemsize)

    # Pad each group's rows to a multiple of `tile` (so tile boundaries coincide
    # with group boundaries) and features to d_in_pad, all in bf16.
    # NOTE: padded rows produce degenerate LN stats (out = beta); they are
    # sliced away below and must never be reduced over.
    xs_pad, tiles_per_group, starts = [], [], []
    offset = 0
    for x in xs:
        n, d = x.shape
        n_pad = _round_up(n, tile)
        xb = x.astype(jnp.bfloat16)
        if n_pad != n or d_in_pad != d:
            xb = jnp.pad(xb, ((0, n_pad - n), (0, d_in_pad - d)))
        xs_pad.append(xb)
        tiles_per_group.append(n_pad // tile)
        starts.append(offset)
        offset += n_pad
    x_cat = xs_pad[0] if len(xs_pad) == 1 else jnp.concatenate(xs_pad, axis=0)
    n_total = x_cat.shape[0]
    num_tiles = n_total // tile

    # Per-tile group id, scalar-prefetched into SMEM for the weight index_maps.
    group_ids = jnp.asarray(
        np.concatenate([np.full(t, gi, np.int32)
                        for gi, t in enumerate(tiles_per_group)]))

    w1s, b1s, w2s, b2s, gammas, betas = _stack_mlp_params(param_list, d_in_pad)

    per_tile = lambda i, gid: (i, 0)
    per_group = lambda i, gid: (gid[i], 0, 0)

    out = pl.pallas_call(
        _grouped_mlp_ln_kernel,
        out_shape=jax.ShapeDtypeStruct((n_total, d_out), out_dtype),
        grid_spec=pltpu.PrefetchScalarGridSpec(
            num_scalar_prefetch=1,
            grid=(num_tiles,),
            in_specs=[
                pl.BlockSpec((tile, d_in_pad), per_tile),        # x tile (bf16)
                pl.BlockSpec((1, d_in_pad, hidden), per_group),  # w1  (bf16)
                pl.BlockSpec((1, 1, hidden), per_group),         # b1  (f32)
                pl.BlockSpec((1, hidden, d_out), per_group),     # w2  (bf16)
                pl.BlockSpec((1, 1, d_out), per_group),          # b2  (f32)
                pl.BlockSpec((1, 1, d_out), per_group),          # gamma
                pl.BlockSpec((1, 1, d_out), per_group),          # beta
            ],
            out_specs=pl.BlockSpec((tile, d_out), per_tile),
        ),
        compiler_params=pltpu.CompilerParams(
            dimension_semantics=("parallel",),
            vmem_limit_bytes=vmem_limit,
        ),
    )(group_ids, x_cat, w1s, b1s, w2s, b2s, gammas, betas)

    if return_packed:
        return out, tuple(starts), tuple(n_rows)
    if len(xs) == 1 and n_rows[0] == n_total:
        return (out,)
    return tuple(out[s:s + n] for s, n in zip(starts, n_rows))


def graphcast_encoder_embedder(grid_nfeat, mesh_nfeat, g2m_efeat, mesh_efeat,
                               params, *, tile_rows=2048,
                               out_dtype=jnp.bfloat16):
    """Forward pass of GraphCastEncoderEmbedder.

    The wide-feature grid-node MLP runs in its own pallas_call so the narrow
    (3/4-feature) mesh-node / edge inputs are NOT padded to the grid-node
    feature width; the three narrow MLPs are fused into one grouped call.
    Outputs are bf16 by default (f32 LN math, cast only on the final store);
    pass out_dtype=jnp.float32 to match the PyTorch module's dtype exactly.
    """
    (grid_out,) = grouped_mesh_graph_mlp(
        (grid_nfeat,), (params["grid_node_mlp"],),
        tile_rows=tile_rows, out_dtype=out_dtype)
    mesh_out, g2m_out, me_out = grouped_mesh_graph_mlp(
        (mesh_nfeat, g2m_efeat, mesh_efeat),
        (params["mesh_node_mlp"], params["grid2mesh_edge_mlp"],
         params["mesh_edge_mlp"]),
        tile_rows=tile_rows, out_dtype=out_dtype)
    return grid_out, mesh_out, g2m_out, me_out


def _init_mlp_params(key, d_in, hidden, d_out, dtype=jnp.float32,
                     w_dtype=jnp.bfloat16):
    """Deterministic synthetic init (shapes match MeshGraphMLP, hidden_layers=1)."""
    k1, k2, k3, k4 = jax.random.split(key, 4)
    scale1 = 1.0 / jnp.sqrt(jnp.float32(d_in))
    scale2 = 1.0 / jnp.sqrt(jnp.float32(hidden))
    return {
        "w1": (jax.random.normal(k1, (d_in, hidden), dtype) * scale1).astype(w_dtype),
        "b1": jax.random.normal(k2, (1, hidden), dtype) * 0.01,
        "w2": (jax.random.normal(k3, (hidden, d_out), dtype) * scale2).astype(w_dtype),
        "b2": jax.random.normal(k4, (1, d_out), dtype) * 0.01,
        "gamma": jnp.ones((1, d_out), dtype),
        "beta": jnp.zeros((1, d_out), dtype),
    }


def _mlp_reference(x, p, out_dtype):
    """Pure-JAX reference matching the kernel math (bf16 operands/SiLU, f32 LN)."""
    h = jnp.dot(x.astype(jnp.bfloat16), p["w1"].astype(jnp.bfloat16),
                preferred_element_type=jnp.float32) + p["b1"].astype(jnp.float32)
    h = h.astype(jnp.bfloat16)
    h = h * jax.nn.sigmoid(h)
    y = jnp.dot(h, p["w2"].astype(jnp.bfloat16),
                preferred_element_type=jnp.float32) + p["b2"].astype(jnp.float32)
    mean = jnp.mean(y, axis=-1, keepdims=True)
    yc = y - mean
    var = jnp.mean(yc * yc, axis=-1, keepdims=True)
    out = yc * jax.lax.rsqrt(var + LN_EPS) * p["gamma"] + p["beta"]
    return out.astype(out_dtype)


if __name__ == "__main__":
    # Module defaults for the feature / hidden dims; small row counts
    # (including non-multiples of 8 / of the tile) for the demo.
    INPUT_DIM_GRID = 10
    INPUT_DIM_MESH = 3
    INPUT_DIM_EDGE = 4
    HIDDEN = 512
    OUT = 512

    N_GRID_NODES = 64
    N_MESH_NODES = 37   # not a multiple of 8 -> exercises row padding
    N_G2M_EDGES = 48
    N_MESH_EDGES = 72

    root = jax.random.PRNGKey(0)
    k_in, k_p = jax.random.split(root)
    k_g, k_m, k_ge, k_me = jax.random.split(k_in, 4)
    kp_g, kp_m, kp_g2m, kp_me = jax.random.split(k_p, 4)

    grid_nfeat = jax.random.normal(k_g, (N_GRID_NODES, INPUT_DIM_GRID), jnp.float32)
    mesh_nfeat = jax.random.normal(k_m, (N_MESH_NODES, INPUT_DIM_MESH), jnp.float32)
    g2m_efeat = jax.random.normal(k_ge, (N_G2M_EDGES, INPUT_DIM_EDGE), jnp.float32)
    mesh_efeat = jax.random.normal(k_me, (N_MESH_EDGES, INPUT_DIM_EDGE), jnp.float32)

    params = {
        "grid_node_mlp": _init_mlp_params(kp_g, INPUT_DIM_GRID, HIDDEN, OUT),
        "mesh_node_mlp": _init_mlp_params(kp_m, INPUT_DIM_MESH, HIDDEN, OUT),
        "grid2mesh_edge_mlp": _init_mlp_params(kp_g2m, INPUT_DIM_EDGE, HIDDEN, OUT),
        "mesh_edge_mlp": _init_mlp_params(kp_me, INPUT_DIM_EDGE, HIDDEN, OUT),
    }

    out_dtype = jnp.bfloat16  # default per perf review; pass jnp.float32 for exact module dtype
    fwd = jax.jit(functools.partial(graphcast_encoder_embedder, params=params,
                                    out_dtype=out_dtype))
    outs = fwd(grid_nfeat, mesh_nfeat, g2m_efeat, mesh_efeat)
    outs = jax.block_until_ready(outs)

    # Verify against a pure-JAX reference using the same bf16 matmul/SiLU precision.
    refs = (
        _mlp_reference(grid_nfeat, params["grid_node_mlp"], out_dtype),
        _mlp_reference(mesh_nfeat, params["mesh_node_mlp"], out_dtype),
        _mlp_reference(g2m_efeat, params["grid2mesh_edge_mlp"], out_dtype),
        _mlp_reference(mesh_efeat, params["mesh_edge_mlp"], out_dtype),
    )
    for o, r in zip(outs, refs):
        assert o.shape == r.shape and o.dtype == r.dtype
        err = float(jnp.max(jnp.abs(o.astype(jnp.float32) - r.astype(jnp.float32))))
        assert err < 7e-2, f"max abs error {err}"

    print("KERNEL_OK")
</pallas_src>

<mosaic_0001>
module attributes {stable_mosaic.version = 11 : i64} {
  func.func @_grouped_mlp_ln_kernel(%arg0: i32, %arg1: memref<3xi32, #tpu.memory_space<smem>>, %arg2: memref<80x8xbf16, #tpu.memory_space<vmem>>, %arg3: memref<1x8x512xbf16, #tpu.memory_space<vmem>>, %arg4: memref<1x1x512xf32, #tpu.memory_space<vmem>>, %arg5: memref<1x512x512xbf16, #tpu.memory_space<vmem>>, %arg6: memref<1x1x512xf32, #tpu.memory_space<vmem>>, %arg7: memref<1x1x512xf32, #tpu.memory_space<vmem>>, %arg8: memref<1x1x512xf32, #tpu.memory_space<vmem>>, %arg9: memref<80x512xbf16, #tpu.memory_space<vmem>>) attributes {dimension_semantics = [#tpu.dimension_semantics<parallel>], iteration_bounds = array<i64: 3>, scalar_prefetch = 1 : i64, scratch_operands = 0 : i64, tpu.core_type = #tpu.core_type<tc>, window_params = [{transform_indices = @transform_0, window_bounds = array<i64: 80, 8>}, {transform_indices = @transform_1, window_bounds = array<i64: 1, 8, 512>}, {transform_indices = @transform_2, window_bounds = array<i64: 1, 1, 512>}, {transform_indices = @transform_3, window_bounds = array<i64: 1, 512, 512>}, {transform_indices = @transform_4, window_bounds = array<i64: 1, 1, 512>}, {transform_indices = @transform_5, window_bounds = array<i64: 1, 1, 512>}, {transform_indices = @transform_6, window_bounds = array<i64: 1, 1, 512>}, {transform_indices = @transform_7, window_bounds = array<i64: 80, 512>}]} {
    %c0 = arith.constant 0 : index
    %c0_0 = arith.constant 0 : index
    %0 = vector.load %arg2[%c0, %c0_0] : memref<80x8xbf16, #tpu.memory_space<vmem>>, vector<80x8xbf16>
    %c0_1 = arith.constant 0 : index
    %c0_2 = arith.constant 0 : index
    %c0_3 = arith.constant 0 : index
    %1 = vector.load %arg3[%c0_1, %c0_2, %c0_3] : memref<1x8x512xbf16, #tpu.memory_space<vmem>>, vector<1x8x512xbf16>
    %2 = vector.shape_cast %1 : vector<1x8x512xbf16> to vector<8x512xbf16>
    %cst = arith.constant dense<0.000000e+00> : vector<80x512xf32>
    %3 = tpu.matmul %0, %2, %cst {dimension_numbers = #tpu.dot_dimension_numbers<[1], [0], [0], [1], [0, 0, 1, 1], [], []>} : vector<80x8xbf16>, vector<8x512xbf16>, vector<80x512xf32> -> vector<80x512xf32>
    %c0_4 = arith.constant 0 : index
    %c0_5 = arith.constant 0 : index
    %c0_6 = arith.constant 0 : index
    %4 = vector.load %arg4[%c0_4, %c0_5, %c0_6] : memref<1x1x512xf32, #tpu.memory_space<vmem>>, vector<1x1x512xf32>
    %5 = vector.shape_cast %4 : vector<1x1x512xf32> to vector<1x512xf32>
    %6 = vector.broadcast %5 : vector<1x512xf32> to vector<80x512xf32>
    %7 = arith.addf %3, %6 : vector<80x512xf32>
    %8 = arith.truncf %7 : vector<80x512xf32> to vector<80x512xbf16>
    %9 = arith.negf %8 : vector<80x512xbf16>
    %10 = math.exp %9 : vector<80x512xbf16>
    %cst_7 = arith.constant 1.000000e+00 : bf16
    %11 = vector.broadcast %cst_7 : bf16 to vector<80x512xbf16>
    %12 = arith.addf %11, %10 : vector<80x512xbf16>
    %13 = arith.divf %11, %12 : vector<80x512xbf16>
    %14 = arith.mulf %8, %13 : vector<80x512xbf16>
    %c0_8 = arith.constant 0 : index
    %c0_9 = arith.constant 0 : index
    %c0_10 = arith.constant 0 : index
    %15 = vector.load %arg5[%c0_8, %c0_9, %c0_10] : memref<1x512x512xbf16, #tpu.memory_space<vmem>>, vector<1x512x512xbf16>
    %16 = vector.shape_cast %15 : vector<1x512x512xbf16> to vector<512x512xbf16>
    %cst_11 = arith.constant dense<0.000000e+00> : vector<80x512xf32>
    %17 = tpu.matmul %14, %16, %cst_11 {dimension_numbers = #tpu.dot_dimension_numbers<[1], [0], [0], [1], [0, 0, 1, 1], [], []>} : vector<80x512xbf16>, vector<512x512xbf16>, vector<80x512xf32> -> vector<80x512xf32>
    %c0_12 = arith.constant 0 : index
    %c0_13 = arith.constant 0 : index
    %c0_14 = arith.constant 0 : index
    %18 = vector.load %arg6[%c0_12, %c0_13, %c0_14] : memref<1x1x512xf32, #tpu.memory_space<vmem>>, vector<1x1x512xf32>
    %19 = vector.shape_cast %18 : vector<1x1x512xf32> to vector<1x512xf32>
    %20 = vector.broadcast %19 : vector<1x512xf32> to vector<80x512xf32>
    %21 = arith.addf %17, %20 : vector<80x512xf32>
    %cst_15 = arith.constant dense<0.000000e+00> : vector<80xf32>
    %22 = vector.multi_reduction <add>, %21, %cst_15 [1] : vector<80x512xf32> to vector<80xf32>
    %23 = vector.shape_cast %22 : vector<80xf32> to vector<80x1xf32>
    %cst_16 = arith.constant 0.001953125 : f32
    %24 = vector.broadcast %cst_16 : f32 to vector<80x1xf32>
    %25 = arith.mulf %23, %24 : vector<80x1xf32>
    %26 = vector.broadcast %25 : vector<80x1xf32> to vector<80x512xf32>
    %27 = arith.subf %21, %26 : vector<80x512xf32>
    %28 = arith.mulf %27, %27 : vector<80x512xf32>
    %cst_17 = arith.constant dense<0.000000e+00> : vector<80xf32>
    %29 = vector.multi_reduction <add>, %28, %cst_17 [1] : vector<80x512xf32> to vector<80xf32>
    %30 = vector.shape_cast %29 : vector<80xf32> to vector<80x1xf32>
    %cst_18 = arith.constant 0.001953125 : f32
    %31 = vector.broadcast %cst_18 : f32 to vector<80x1xf32>
    %32 = arith.mulf %30, %31 : vector<80x1xf32>
    %cst_19 = arith.constant 9.99999974E-6 : f32
    %33 = vector.broadcast %cst_19 : f32 to vector<80x1xf32>
    %34 = arith.addf %32, %33 : vector<80x1xf32>
    %35 = math.rsqrt %34 : vector<80x1xf32>
    %36 = vector.broadcast %35 : vector<80x1xf32> to vector<80x512xf32>
    %37 = arith.mulf %27, %36 : vector<80x512xf32>
    %c0_20 = arith.constant 0 : index
    %c0_21 = arith.constant 0 : index
    %c0_22 = arith.constant 0 : index
    %38 = vector.load %arg7[%c0_20, %c0_21, %c0_22] : memref<1x1x512xf32, #tpu.memory_space<vmem>>, vector<1x1x512xf32>
    %39 = vector.shape_cast %38 : vector<1x1x512xf32> to vector<1x512xf32>
    %40 = vector.broadcast %39 : vector<1x512xf32> to vector<80x512xf32>
    %41 = arith.mulf %37, %40 : vector<80x512xf32>
    %c0_23 = arith.constant 0 : index
    %c0_24 = arith.constant 0 : index
    %c0_25 = arith.constant 0 : index
    %42 = vector.load %arg8[%c0_23, %c0_24, %c0_25] : memref<1x1x512xf32, #tpu.memory_space<vmem>>, vector<1x1x512xf32>
    %43 = vector.shape_cast %42 : vector<1x1x512xf32> to vector<1x512xf32>
    %44 = vector.broadcast %43 : vector<1x512xf32> to vector<80x512xf32>
    %45 = arith.addf %41, %44 : vector<80x512xf32>
    %46 = arith.truncf %45 : vector<80x512xf32> to vector<80x512xbf16>
    %c0_26 = arith.constant 0 : index
    %c0_27 = arith.constant 0 : index
    %47 = vector.load %arg9[%c0_26, %c0_27] : memref<80x512xbf16, #tpu.memory_space<vmem>>, vector<80x512xbf16>
    tpu.vector_store %arg9[%c0_26, %c0_27], %46 {strides = array<i32>} : memref<80x512xbf16, #tpu.memory_space<vmem>>, vector<80x512xbf16>,
    return
  }
  func.func @transform_0(%arg0: i32, %arg1: memref<3xi32, #tpu.memory_space<smem>>) -> (i32, i32) {
    %c0_i32 = arith.constant 0 : i32
    %c0_i32_0 = arith.constant 0 : i32
    return %arg0, %c0_i32 : i32, i32
  }
  func.func @transform_1(%arg0: i32, %arg1: memref<3xi32, #tpu.memory_space<smem>>) -> (i32, i32, i32) {
    %0 = arith.index_cast %arg0 : i32 to index
    %1 = memref.load %arg1[%0] : memref<3xi32, #tpu.memory_space<smem>>
    %c0_i32 = arith.constant 0 : i32
    %c0_i32_0 = arith.constant 0 : i32
    %c0_i32_1 = arith.constant 0 : i32
    return %1, %c0_i32, %c0_i32_0 : i32, i32, i32
  }
  func.func @transform_2(%arg0: i32, %arg1: memref<3xi32, #tpu.memory_space<smem>>) -> (i32, i32, i32) {
    %0 = arith.index_cast %arg0 : i32 to index
    %1 = memref.load %arg1[%0] : memref<3xi32, #tpu.memory_space<smem>>
    %c0_i32 = arith.constant 0 : i32
    %c0_i32_0 = arith.constant 0 : i32
    %c0_i32_1 = arith.constant 0 : i32
    return %1, %c0_i32, %c0_i32_0 : i32, i32, i32
  }
  func.func @transform_3(%arg0: i32, %arg1: memref<3xi32, #tpu.memory_space<smem>>) -> (i32, i32, i32) {
    %0 = arith.index_cast %arg0 : i32 to index
    %1 = memref.load %arg1[%0] : memref<3xi32, #tpu.memory_space<smem>>
    %c0_i32 = arith.constant 0 : i32
    %c0_i32_0 = arith.constant 0 : i32
    %c0_i32_1 = arith.constant 0 : i32
    return %1, %c0_i32, %c0_i32_0 : i32, i32, i32
  }
  func.func @transform_4(%arg0: i32, %arg1: memref<3xi32, #tpu.memory_space<smem>>) -> (i32, i32, i32) {
    %0 = arith.index_cast %arg0 : i32 to index
    %1 = memref.load %arg1[%0] : memref<3xi32, #tpu.memory_space<smem>>
    %c0_i32 = arith.constant 0 : i32
    %c0_i32_0 = arith.constant 0 : i32
    %c0_i32_1 = arith.constant 0 : i32
    return %1, %c0_i32, %c0_i32_0 : i32, i32, i32
  }
  func.func @transform_5(%arg0: i32, %arg1: memref<3xi32, #tpu.memory_space<smem>>) -> (i32, i32, i32) {
    %0 = arith.index_cast %arg0 : i32 to index
    %1 = memref.load %arg1[%0] : memref<3xi32, #tpu.memory_space<smem>>
    %c0_i32 = arith.constant 0 : i32
    %c0_i32_0 = arith.constant 0 : i32
    %c0_i32_1 = arith.constant 0 : i32
    return %1, %c0_i32, %c0_i32_0 : i32, i32, i32
  }
  func.func @transform_6(%arg0: i32, %arg1: memref<3xi32, #tpu.memory_space<smem>>) -> (i32, i32, i32) {
    %0 = arith.index_cast %arg0 : i32 to index
    %1 = memref.load %arg1[%0] : memref<3xi32, #tpu.memory_space<smem>>
    %c0_i32 = arith.constant 0 : i32
    %c0_i32_0 = arith.constant 0 : i32
    %c0_i32_1 = arith.constant 0 : i32
    return %1, %c0_i32, %c0_i32_0 : i32, i32, i32
  }
  func.func @transform_7(%arg0: i32, %arg1: memref<3xi32, #tpu.memory_space<smem>>) -> (i32, i32) {
    %c0_i32 = arith.constant 0 : i32
    %c0_i32_0 = arith.constant 0 : i32
    return %arg0, %c0_i32 : i32, i32
  }
}

module attributes {stable_mosaic.version = 11 : i64} {
  func.func @_grouped_mlp_ln_kernel(%arg0: i32, %arg1: memref<1xi32, #tpu.memory_space<smem>>, %arg2: memref<64x16xbf16, #tpu.memory_space<vmem>>, %arg3: memref<1x16x512xbf16, #tpu.memory_space<vmem>>, %arg4: memref<1x1x512xf32, #tpu.memory_space<vmem>>, %arg5: memref<1x512x512xbf16, #tpu.memory_space<vmem>>, %arg6: memref<1x1x512xf32, #tpu.memory_space<vmem>>, %arg7: memref<1x1x512xf32, #tpu.memory_space<vmem>>, %arg8: memref<1x1x512xf32, #tpu.memory_space<vmem>>, %arg9: memref<64x512xbf16, #tpu.memory_space<vmem>>) attributes {dimension_semantics = [#tpu.dimension_semantics<parallel>], iteration_bounds = array<i64: 1>, scalar_prefetch = 1 : i64, scratch_operands = 0 : i64, tpu.core_type = #tpu.core_type<tc>, window_params = [{transform_indices = @transform_0, window_bounds = array<i64: 64, 16>}, {transform_indices = @transform_1, window_bounds = array<i64: 1, 16, 512>}, {transform_indices = @transform_2, window_bounds = array<i64: 1, 1, 512>}, {transform_indices = @transform_3, window_bounds = array<i64: 1, 512, 512>}, {transform_indices = @transform_4, window_bounds = array<i64: 1, 1, 512>}, {transform_indices = @transform_5, window_bounds = array<i64: 1, 1, 512>}, {transform_indices = @transform_6, window_bounds = array<i64: 1, 1, 512>}, {transform_indices = @transform_7, window_bounds = array<i64: 64, 512>}]} {
    %c0 = arith.constant 0 : index
    %c0_0 = arith.constant 0 : index
    %0 = vector.load %arg2[%c0, %c0_0] : memref<64x16xbf16, #tpu.memory_space<vmem>>, vector<64x16xbf16>
    %c0_1 = arith.constant 0 : index
    %c0_2 = arith.constant 0 : index
    %c0_3 = arith.constant 0 : index
    %1 = vector.load %arg3[%c0_1, %c0_2, %c0_3] : memref<1x16x512xbf16, #tpu.memory_space<vmem>>, vector<1x16x512xbf16>
    %2 = vector.shape_cast %1 : vector<1x16x512xbf16> to vector<16x512xbf16>
    %cst = arith.constant dense<0.000000e+00> : vector<64x512xf32>
    %3 = tpu.matmul %0, %2, %cst {dimension_numbers = #tpu.dot_dimension_numbers<[1], [0], [0], [1], [0, 0, 1, 1], [], []>} : vector<64x16xbf16>, vector<16x512xbf16>, vector<64x512xf32> -> vector<64x512xf32>
    %c0_4 = arith.constant 0 : index
    %c0_5 = arith.constant 0 : index
    %c0_6 = arith.constant 0 : index
    %4 = vector.load %arg4[%c0_4, %c0_5, %c0_6] : memref<1x1x512xf32, #tpu.memory_space<vmem>>, vector<1x1x512xf32>
    %5 = vector.shape_cast %4 : vector<1x1x512xf32> to vector<1x512xf32>
    %6 = vector.broadcast %5 : vector<1x512xf32> to vector<64x512xf32>
    %7 = arith.addf %3, %6 : vector<64x512xf32>
    %8 = arith.truncf %7 : vector<64x512xf32> to vector<64x512xbf16>
    %9 = arith.negf %8 : vector<64x512xbf16>
    %10 = math.exp %9 : vector<64x512xbf16>
    %cst_7 = arith.constant 1.000000e+00 : bf16
    %11 = vector.broadcast %cst_7 : bf16 to vector<64x512xbf16>
    %12 = arith.addf %11, %10 : vector<64x512xbf16>
    %13 = arith.divf %11, %12 : vector<64x512xbf16>
    %14 = arith.mulf %8, %13 : vector<64x512xbf16>
    %c0_8 = arith.constant 0 : index
    %c0_9 = arith.constant 0 : index
    %c0_10 = arith.constant 0 : index
    %15 = vector.load %arg5[%c0_8, %c0_9, %c0_10] : memref<1x512x512xbf16, #tpu.memory_space<vmem>>, vector<1x512x512xbf16>
    %16 = vector.shape_cast %15 : vector<1x512x512xbf16> to vector<512x512xbf16>
    %cst_11 = arith.constant dense<0.000000e+00> : vector<64x512xf32>
    %17 = tpu.matmul %14, %16, %cst_11 {dimension_numbers = #tpu.dot_dimension_numbers<[1], [0], [0], [1], [0, 0, 1, 1], [], []>} : vector<64x512xbf16>, vector<512x512xbf16>, vector<64x512xf32> -> vector<64x512xf32>
    %c0_12 = arith.constant 0 : index
    %c0_13 = arith.constant 0 : index
    %c0_14 = arith.constant 0 : index
    %18 = vector.load %arg6[%c0_12, %c0_13, %c0_14] : memref<1x1x512xf32, #tpu.memory_space<vmem>>, vector<1x1x512xf32>
    %19 = vector.shape_cast %18 : vector<1x1x512xf32> to vector<1x512xf32>
    %20 = vector.broadcast %19 : vector<1x512xf32> to vector<64x512xf32>
    %21 = arith.addf %17, %20 : vector<64x512xf32>
    %cst_15 = arith.constant dense<0.000000e+00> : vector<64xf32>
    %22 = vector.multi_reduction <add>, %21, %cst_15 [1] : vector<64x512xf32> to vector<64xf32>
    %23 = vector.shape_cast %22 : vector<64xf32> to vector<64x1xf32>
    %cst_16 = arith.constant 0.001953125 : f32
    %24 = vector.broadcast %cst_16 : f32 to vector<64x1xf32>
    %25 = arith.mulf %23, %24 : vector<64x1xf32>
    %26 = vector.broadcast %25 : vector<64x1xf32> to vector<64x512xf32>
    %27 = arith.subf %21, %26 : vector<64x512xf32>
    %28 = arith.mulf %27, %27 : vector<64x512xf32>
    %cst_17 = arith.constant dense<0.000000e+00> : vector<64xf32>
    %29 = vector.multi_reduction <add>, %28, %cst_17 [1] : vector<64x512xf32> to vector<64xf32>
    %30 = vector.shape_cast %29 : vector<64xf32> to vector<64x1xf32>
    %cst_18 = arith.constant 0.001953125 : f32
    %31 = vector.broadcast %cst_18 : f32 to vector<64x1xf32>
    %32 = arith.mulf %30, %31 : vector<64x1xf32>
    %cst_19 = arith.constant 9.99999974E-6 : f32
    %33 = vector.broadcast %cst_19 : f32 to vector<64x1xf32>
    %34 = arith.addf %32, %33 : vector<64x1xf32>
    %35 = math.rsqrt %34 : vector<64x1xf32>
    %36 = vector.broadcast %35 : vector<64x1xf32> to vector<64x512xf32>
    %37 = arith.mulf %27, %36 : vector<64x512xf32>
    %c0_20 = arith.constant 0 : index
    %c0_21 = arith.constant 0 : index
    %c0_22 = arith.constant 0 : index
    %38 = vector.load %arg7[%c0_20, %c0_21, %c0_22] : memref<1x1x512xf32, #tpu.memory_space<vmem>>, vector<1x1x512xf32>
    %39 = vector.shape_cast %38 : vector<1x1x512xf32> to vector<1x512xf32>
    %40 = vector.broadcast %39 : vector<1x512xf32> to vector<64x512xf32>
    %41 = arith.mulf %37, %40 : vector<64x512xf32>
    %c0_23 = arith.constant 0 : index
    %c0_24 = arith.constant 0 : index
    %c0_25 = arith.constant 0 : index
    %42 = vector.load %arg8[%c0_23, %c0_24, %c0_25] : memref<1x1x512xf32, #tpu.memory_space<vmem>>, vector<1x1x512xf32>
    %43 = vector.shape_cast %42 : vector<1x1x512xf32> to vector<1x512xf32>
    %44 = vector.broadcast %43 : vector<1x512xf32> to vector<64x512xf32>
    %45 = arith.addf %41, %44 : vector<64x512xf32>
    %46 = arith.truncf %45 : vector<64x512xf32> to vector<64x512xbf16>
    %c0_26 = arith.constant 0 : index
    %c0_27 = arith.constant 0 : index
    %47 = vector.load %arg9[%c0_26, %c0_27] : memref<64x512xbf16, #tpu.memory_space<vmem>>, vector<64x512xbf16>
    tpu.vector_store %arg9[%c0_26, %c0_27], %46 {strides = array<i32>} : memref<64x512xbf16, #tpu.memory_space<vmem>>, vector<64x512xbf16>,
    return
  }
  func.func @transform_0(%arg0: i32, %arg1: memref<1xi32, #tpu.memory_space<smem>>) -> (i32, i32) {
    %c0_i32 = arith.constant 0 : i32
    %c0_i32_0 = arith.constant 0 : i32
    return %arg0, %c0_i32 : i32, i32
  }
  func.func @transform_1(%arg0: i32, %arg1: memref<1xi32, #tpu.memory_space<smem>>) -> (i32, i32, i32) {
    %0 = arith.index_cast %arg0 : i32 to index
    %1 = memref.load %arg1[%0] : memref<1xi32, #tpu.memory_space<smem>>
    %c0_i32 = arith.constant 0 : i32
    %c0_i32_0 = arith.constant 0 : i32
    %c0_i32_1 = arith.constant 0 : i32
    return %1, %c0_i32, %c0_i32_0 : i32, i32, i32
  }
  func.func @transform_2(%arg0: i32, %arg1: memref<1xi32, #tpu.memory_space<smem>>) -> (i32, i32, i32) {
    %0 = arith.index_cast %arg0 : i32 to index
    %1 = memref.load %arg1[%0] : memref<1xi32, #tpu.memory_space<smem>>
    %c0_i32 = arith.constant 0 : i32
    %c0_i32_0 = arith.constant 0 : i32
    %c0_i32_1 = arith.constant 0 : i32
    return %1, %c0_i32, %c0_i32_0 : i32, i32, i32
  }
  func.func @transform_3(%arg0: i32, %arg1: memref<1xi32, #tpu.memory_space<smem>>) -> (i32, i32, i32) {
    %0 = arith.index_cast %arg0 : i32 to index
    %1 = memref.load %arg1[%0] : memref<1xi32, #tpu.memory_space<smem>>
    %c0_i32 = arith.constant 0 : i32
    %c0_i32_0 = arith.constant 0 : i32
    %c0_i32_1 = arith.constant 0 : i32
    return %1, %c0_i32, %c0_i32_0 : i32, i32, i32
  }
  func.func @transform_4(%arg0: i32, %arg1: memref<1xi32, #tpu.memory_space<smem>>) -> (i32, i32, i32) {
    %0 = arith.index_cast %arg0 : i32 to index
    %1 = memref.load %arg1[%0] : memref<1xi32, #tpu.memory_space<smem>>
    %c0_i32 = arith.constant 0 : i32
    %c0_i32_0 = arith.constant 0 : i32
    %c0_i32_1 = arith.constant 0 : i32
    return %1, %c0_i32, %c0_i32_0 : i32, i32, i32
  }
  func.func @transform_5(%arg0: i32, %arg1: memref<1xi32, #tpu.memory_space<smem>>) -> (i32, i32, i32) {
    %0 = arith.index_cast %arg0 : i32 to index
    %1 = memref.load %arg1[%0] : memref<1xi32, #tpu.memory_space<smem>>
    %c0_i32 = arith.constant 0 : i32
    %c0_i32_0 = arith.constant 0 : i32
    %c0_i32_1 = arith.constant 0 : i32
    return %1, %c0_i32, %c0_i32_0 : i32, i32, i32
  }
  func.func @transform_6(%arg0: i32, %arg1: memref<1xi32, #tpu.memory_space<smem>>) -> (i32, i32, i32) {
    %0 = arith.index_cast %arg0 : i32 to index
    %1 = memref.load %arg1[%0] : memref<1xi32, #tpu.memory_space<smem>>
    %c0_i32 = arith.constant 0 : i32
    %c0_i32_0 = arith.constant 0 : i32
    %c0_i32_1 = arith.constant 0 : i32
    return %1, %c0_i32, %c0_i32_0 : i32, i32, i32
  }
  func.func @transform_7(%arg0: i32, %arg1: memref<1xi32, #tpu.memory_space<smem>>) -> (i32, i32) {
    %c0_i32 = arith.constant 0 : i32
    %c0_i32_0 = arith.constant 0 : i32
    return %arg0, %c0_i32 : i32, i32
  }
}

</mosaic_0001>

<llo_original>
// kernel: graphcast_encoder_embedder.3
$region0: #{graphcast_encoder_embedder.3}
  #allocation0 [shape = 'u32[]', space=smem, size = 0x4, offset = 0x4, fixed_abs, tag = 'smem constant byte address 0x4 - core index']
  #allocation1 [shape = 'u32[144,128]{1,0:T(1,128)}', space=vmem, size = 0x12000, scoped, tag = 'internal scratch']
  #allocation2 [shape = 's32[1]{0}', space=sflag, size = 0x4, scoped, tag = 'scoped memory for graphcast_encoder_embedder.3']
  #allocation3 [shape = 'u8[512]{0}', space=smem, size = 0x200, scoped, tag = 'prefetched SMEM operand 0']
  %s0 = inlined_call_operand.vmem [shape: s32[3], index: 0, kind: input, shape index: {}]
  %s1 = inlined_call_operand.vmem [shape: bf16[240,8], index: 1, kind: input, shape index: {}]
  %s2 = inlined_call_operand.vmem [shape: bf16[3,8,512], index: 2, kind: input, shape index: {}]
  %s3 = inlined_call_operand.vmem [shape: f32[3,1,512], index: 3, kind: input, shape index: {}]
  %s4 = inlined_call_operand.vmem [shape: bf16[3,512,512], index: 4, kind: input, shape index: {}]
  %s5 = inlined_call_operand.vmem [shape: f32[3,1,512], index: 5, kind: input, shape index: {}]
  %s6 = inlined_call_operand.vmem [shape: f32[3,1,512], index: 6, kind: input, shape index: {}]
  %s7 = inlined_call_operand.vmem [shape: f32[3,1,512], index: 7, kind: input, shape index: {}]
  %s8 = inlined_call_operand.vmem [shape: bf16[240,512], index: 8, kind: output, shape index: {}]
  %s9 = sld [smem:[#allocation0]]
  $region61: #{graphcast_encoder_embedder.3} parent=0
    _
  %s11 = ssub.s32 1, %s9
  %s12 = scalar_select 0, %s11, %s9
  %s13 = sshll.u32 %s0, 4
  %s14 = int_to_ptr.vmem [resolvable:$true] %s13
  %16 = dma.vmem_to_smem %s14, 16, [#allocation3], [#allocation2]
  %17 = dma.done [#allocation2], 16
  %18 = sfence
  loop: start=0, step=1, limit=5
  $region2: #{graphcast_encoder_embedder.3} parent=0 // loop_pre_header
    _
  $region3: #{graphcast_encoder_embedder.3} parent=0 // loop_header
    %s20 = sphi 0, %s24
    %p21 = scmp.ge.s32.totalorder %s20, 5
    %s30 = sphi 0, %s32
    %s33 = sphi 0, %s30
    %s34 = sphi 0, %s33
    %s50 = sphi 0, %s34
    %s58 = sphi 0, %s60
    %s61 = sphi 0, %s58
    %s62 = sphi 0, %s61
    %s78 = sphi 0, %s62
    %s86 = sphi 0, %s88
    %s89 = sphi 0, %s86
    %s90 = sphi 0, %s89
    %s106 = sphi 0, %s90
    %s114 = sphi 0, %s116
    %s117 = sphi 0, %s114
    %s118 = sphi 0, %s117
    %s134 = sphi 0, %s118
    %s142 = sphi 0, %s144
    %s145 = sphi 0, %s142
    %s146 = sphi 0, %s145
    %s162 = sphi 0, %s146
    %s170 = sphi 0, %s172
    %s173 = sphi 0, %s170
    %s174 = sphi 0, %s173
    %s190 = sphi 0, %s174
    %s198 = sphi 0, %s200
    %s201 = sphi 0, %s198
    %s202 = sphi 0, %s201
    %s218 = sphi 0, %s202
    %s224 = sphi 0, %s226
    %s227 = sphi 0, %s224
    %s228 = sphi 0, %s227
    %s244 = sphi 0, %s228
  $region4: #{graphcast_encoder_embedder.3} parent=0 // loop_header_branch
    %23 = sbr.rel (%p21) target = $region8
  $region5: #{graphcast_encoder_embedder.3} parent=0 // loop_body
    %s25 = ssub.s32 %s20, 1
    %s26 = ssub.s32 %s20, 2
    %s27 = sadd.s32 %s20, 1
    %s28 = ssub.s32 %s20, %s27
    %p29 = scmp.eq.s32.totalorder %s28, 0
    %s31 = sadd.s32 %s30, 1
    %s32 = scalar_select %p29, %s30, %s31
    %p35 = pneg %p29
    %p36 = scmp.eq.s32.totalorder %s20, 2
    %p37 = por %p35, %p36
    %p38 = scmp.ne.s32.totalorder %s30, %s33
    %p39 = scmp.eq.s32.totalorder %s20, 0
    %p40 = por %p38, %p39
    %p41 = scmp.ne.s32.totalorder %s30, %s33
    %p42 = scmp.eq.s32.totalorder %s25, 2
    %p43 = por %p41, %p42
    %p44 = scmp.ne.s32.totalorder %s33, %s34
    %p45 = scmp.eq.s32.totalorder %s25, 0
    %p46 = por %p44, %p45
    %p47 = scmp.ne.s32.totalorder %s33, %s34
    %p48 = scmp.eq.s32.totalorder %s26, 2
    %p49 = por %p47, %p48
    %p51 = scmp.ne.s32.totalorder %s34, %s50
    %p52 = scmp.eq.s32.totalorder %s26, 0
    %p53 = por %p51, %p52
    %s54 = sld [smem:[#allocation3 + %s20]]
    %s55 = sld [smem:[#allocation3 + %s27]]
    %s56 = ssub.s32 %s54, %s55
    %p57 = scmp.eq.s32.totalorder %s56, 0
    %s59 = sadd.s32 %s58, 1
    %s60 = scalar_select %p57, %s58, %s59
    %p63 = pneg %p57
    %p64 = scmp.eq.s32.totalorder %s20, 2
    %p65 = por %p63, %p64
    %p66 = scmp.ne.s32.totalorder %s58, %s61
    %p67 = scmp.eq.s32.totalorder %s20, 0
    %p68 = por %p66, %p67
    %p69 = scmp.ne.s32.totalorder %s58, %s61
    %p70 = scmp.eq.s32.totalorder %s25, 2
    %p71 = por %p69, %p70
    %p72 = scmp.ne.s32.totalorder %s61, %s62
    %p73 = scmp.eq.s32.totalorder %s25, 0
    %p74 = por %p72, %p73
    %p75 = scmp.ne.s32.totalorder %s61, %s62
    %p76 = scmp.eq.s32.totalorder %s26, 2
    %p77 = por %p75, %p76
    %p79 = scmp.ne.s32.totalorder %s62, %s78
    %p80 = scmp.eq.s32.totalorder %s26, 0
    %p81 = por %p79, %p80
    %s82 = sld [smem:[#allocation3 + %s20]]
    %s83 = sld [smem:[#allocation3 + %s27]]
    %s84 = ssub.s32 %s82, %s83
    %p85 = scmp.eq.s32.totalorder %s84, 0
    %s87 = sadd.s32 %s86, 1
    %s88 = scalar_select %p85, %s86, %s87
    %p91 = pneg %p85
    %p92 = scmp.eq.s32.totalorder %s20, 2
    %p93 = por %p91, %p92
    %p94 = scmp.ne.s32.totalorder %s86, %s89
    %p95 = scmp.eq.s32.totalorder %s20, 0
    %p96 = por %p94, %p95
    %p97 = scmp.ne.s32.totalorder %s86, %s89
    %p98 = scmp.eq.s32.totalorder %s25, 2
    %p99 = por %p97, %p98
    %p100 = scmp.ne.s32.totalorder %s89, %s90
    %p101 = scmp.eq.s32.totalorder %s25, 0
    %p102 = por %p100, %p101
    %p103 = scmp.ne.s32.totalorder %s89, %s90
    %p104 = scmp.eq.s32.totalorder %s26, 2
    %p105 = por %p103, %p104
    %p107 = scmp.ne.s32.totalorder %s90, %s106
    %p108 = scmp.eq.s32.totalorder %s26, 0
    %p109 = por %p107, %p108
    %s110 = sld [smem:[#allocation3 + %s20]]
    %s111 = sld [smem:[#allocation3 + %s27]]
    %s112 = ssub.s32 %s110, %s111
    %p113 = scmp.eq.s32.totalorder %s112, 0
    %s115 = sadd.s32 %s114, 1
    %s116 = scalar_select %p113, %s114, %s115
    %p119 = pneg %p113
    %p120 = scmp.eq.s32.totalorder %s20, 2
    %p121 = por %p119, %p120
    %p122 = scmp.ne.s32.totalorder %s114, %s117
    %p123 = scmp.eq.s32.totalorder %s20, 0
    %p124 = por %p122, %p123
    %p125 = scmp.ne.s32.totalorder %s114, %s117
    %p126 = scmp.eq.s32.totalorder %s25, 2
    %p127 = por %p125, %p126
    %p128 = scmp.ne.s32.totalorder %s117, %s118
    %p129 = scmp.eq.s32.totalorder %s25, 0
    %p130 = por %p128, %p129
    %p131 = scmp.ne.s32.totalorder %s117, %s118
    %p132 = scmp.eq.s32.totalorder %s26, 2
    %p133 = por %p131, %p132
    %p135 = scmp.ne.s32.totalorder %s118, %s134
    %p136 = scmp.eq.s32.totalorder %s26, 0
    %p137 = por %p135, %p136
    %s138 = sld [smem:[#allocation3 + %s20]]
    %s139 = sld [smem:[#allocation3 + %s27]]
    %s140 = ssub.s32 %s138, %s139
    %p141 = scmp.eq.s32.totalorder %s140, 0
    %s143 = sadd.s32 %s142, 1
    %s144 = scalar_select %p141, %s142, %s143
    %p147 = pneg %p141
    %p148 = scmp.eq.s32.totalorder %s20, 2
    %p149 = por %p147, %p148
    %p150 = scmp.ne.s32.totalorder %s142, %s145
    %p151 = scmp.eq.s32.totalorder %s20, 0
    %p152 = por %p150, %p151
    %p153 = scmp.ne.s32.totalorder %s142, %s145
    %p154 = scmp.eq.s32.totalorder %s25, 2
    %p155 = por %p153, %p154
    %p156 = scmp.ne.s32.totalorder %s145, %s146
    %p157 = scmp.eq.s32.totalorder %s25, 0
    %p158 = por %p156, %p157
    %p159 = scmp.ne.s32.totalorder %s145, %s146
    %p160 = scmp.eq.s32.totalorder %s26, 2
    %p161 = por %p159, %p160
    %p163 = scmp.ne.s32.totalorder %s146, %s162
    %p164 = scmp.eq.s32.totalorder %s26, 0
    %p165 = por %p163, %p164
    %s166 = sld [smem:[#allocation3 + %s20]]
    %s167 = sld [smem:[#allocation3 + %s27]]
    %s168 = ssub.s32 %s166, %s167
    %p169 = scmp.eq.s32.totalorder %s168, 0
    %s171 = sadd.s32 %s170, 1
    %s172 = scalar_select %p169, %s170, %s171
    %p175 = pneg %p169
    %p176 = scmp.eq.s32.totalorder %s20, 2
    %p177 = por %p175, %p176
    %p178 = scmp.ne.s32.totalorder %s170, %s173
    %p179 = scmp.eq.s32.totalorder %s20, 0
    %p180 = por %p178, %p179
    %p181 = scmp.ne.s32.totalorder %s170, %s173
    %p182 = scmp.eq.s32.totalorder %s25, 2
    %p183 = por %p181, %p182
    %p184 = scmp.ne.s32.totalorder %s173, %s174
    %p185 = scmp.eq.s32.totalorder %s25, 0
    %p186 = por %p184, %p185
    %p187 = scmp.ne.s32.totalorder %s173, %s174
    %p188 = scmp.eq.s32.totalorder %s26, 2
    %p189 = por %p187, %p188
    %p191 = scmp.ne.s32.totalorder %s174, %s190
    %p192 = scmp.eq.s32.totalorder %s26, 0
    %p193 = por %p191, %p192
    %s194 = sld [smem:[#allocation3 + %s20]]
    %s195 = sld [smem:[#allocation3 + %s27]]
    %s196 = ssub.s32 %s194, %s195
    %p197 = scmp.eq.s32.totalorder %s196, 0
    %s199 = sadd.s32 %s198, 1
    %s200 = scalar_select %p197, %s198, %s199
    %p203 = pneg %p197
    %p204 = scmp.eq.s32.totalorder %s20, 2
    %p205 = por %p203, %p204
    %p206 = scmp.ne.s32.totalorder %s198, %s201
    %p207 = scmp.eq.s32.totalorder %s20, 0
    %p208 = por %p206, %p207
    %p209 = scmp.ne.s32.totalorder %s198, %s201
    %p210 = scmp.eq.s32.totalorder %s25, 2
    %p211 = por %p209, %p210
    %p212 = scmp.ne.s32.totalorder %s201, %s202
    %p213 = scmp.eq.s32.totalorder %s25, 0
    %p214 = por %p212, %p213
    %p215 = scmp.ne.s32.totalorder %s201, %s202
    %p216 = scmp.eq.s32.totalorder %s26, 2
    %p217 = por %p215, %p216
    %p219 = scmp.ne.s32.totalorder %s202, %s218
    %p220 = scmp.eq.s32.totalorder %s26, 0
    %p221 = por %p219, %p220
    %s222 = ssub.s32 %s20, %s27
    %p223 = scmp.eq.s32.totalorder %s222, 0
    %s225 = sadd.s32 %s224, 1
    %s226 = scalar_select %p223, %s224, %s225
    %p229 = pneg %p223
    %p230 = scmp.eq.s32.totalorder %s20, 2
    %p231 = por %p229, %p230
    %p232 = scmp.ne.s32.totalorder %s224, %s227
    %p233 = scmp.eq.s32.totalorder %s20, 0
    %p234 = por %p232, %p233
    %p235 = scmp.ne.s32.totalorder %s224, %s227
    %p236 = scmp.eq.s32.totalorder %s25, 2
    %p237 = por %p235, %p236
    %p238 = scmp.ne.s32.totalorder %s227, %s228
    %p239 = scmp.eq.s32.totalorder %s25, 0
    %p240 = por %p238, %p239
    %p241 = scmp.ne.s32.totalorder %s227, %s228
    %p242 = scmp.eq.s32.totalorder %s26, 2
    %p243 = por %p241, %p242
    %p245 = scmp.ne.s32.totalorder %s228, %s244
    %p246 = scmp.eq.s32.totalorder %s26, 0
    %p247 = por %p245, %p246
    %p248 = scmp.le.s32.totalorder 1, %s20
    %p249 = scmp.lt.s32.totalorder %s20, 4
    %p250 = pnand %p248, %p249
    %p251 = pneg %p250
    // Predicated region
    $region9: #{graphcast_encoder_embedder.3} parent=5 // pred_check
      _
    $region10: #{graphcast_encoder_embedder.3} parent=5 // pred_check_branch
      %253 = sbr.rel (%p250) target = $region12
    $region11: #{graphcast_encoder_embedder.3} parent=5 // pred_region
      %s254 = ssub.s32 %s20, 1
    $region12: #{graphcast_encoder_embedder.3} parent=5 // pred_fallthru
      _
    %p255 = scmp.lt.s32.totalorder %s20, 3
    // Predicated region
    $region13: #{graphcast_encoder_embedder.3} parent=5 // pred_check
      %p256 = pneg %p255
    $region14: #{graphcast_encoder_embedder.3} parent=5 // pred_check_branch
      %258 = sbr.rel (%p256) target = $region16
    $region15: #{graphcast_encoder_embedder.3} parent=5 // pred_region
      // Predicated region
      $region17: #{graphcast_encoder_embedder.3} parent=15 // pred_check
        %p259 = pneg %p40
      $region18: #{graphcast_encoder_embedder.3} parent=15 // pred_check_branch
        %261 = sbr.rel (%p259) target = $region20
      $region19: #{graphcast_encoder_embedder.3} parent=15 // pred_region
        %s262 = smul.u32 10, %s20
        %p263 = scmp.lt.s32.totalorder %s262, 29
        %s264 = scalar_select %p263, %s262, 29
        %s265 = smul.addr %s264, 4
        %s266 = scalar_lea.vmem %s1, %s265
        %s267 = smul.u32 10, %s20
      $region20: #{graphcast_encoder_embedder.3} parent=15 // pred_fallthru
        _
      // Predicated region
      $region21: #{graphcast_encoder_embedder.3} parent=15 // pred_check
        %p268 = pneg %p68
      $region22: #{graphcast_encoder_embedder.3} parent=15 // pred_check_branch
        %270 = sbr.rel (%p268) target = $region24
      $region23: #{graphcast_encoder_embedder.3} parent=15 // pred_region
        %s271 = sld [smem:[#allocation3 + %s20]]
        %p272 = scmp.lt.s32.totalorder %s271, 2
        %s273 = scalar_select %p272, %s271, 2
        %s274 = smul.addr %s273, 4
        %s275 = smul.addr %s274, 4
        %s276 = scalar_lea.vmem %s2, %s275
        %s277 = sld [smem:[#allocation3 + %s20]]
      $region24: #{graphcast_encoder_embedder.3} parent=15 // pred_fallthru
        _
      // Predicated region
      $region25: #{graphcast_encoder_embedder.3} parent=15 // pred_check
        %p278 = pneg %p96
      $region26: #{graphcast_encoder_embedder.3} parent=15 // pred_check_branch
        %280 = sbr.rel (%p278) target = $region28
      $region27: #{graphcast_encoder_embedder.3} parent=15 // pred_region
        %s281 = sld [smem:[#allocation3 + %s20]]
        %p282 = scmp.lt.s32.totalorder %s281, 2
        %s283 = scalar_select %p282, %s281, 2
        %s284 = smul.addr %s283, 4
        %s285 = scalar_lea.vmem %s3, %s284
        %s286 = sld [smem:[#allocation3 + %s20]]
      $region28: #{graphcast_encoder_embedder.3} parent=15 // pred_fallthru
        _
      // Predicated region
      $region29: #{graphcast_encoder_embedder.3} parent=15 // pred_check
        %p287 = pneg %p124
      $region30: #{graphcast_encoder_embedder.3} parent=15 // pred_check_branch
        %289 = sbr.rel (%p287) target = $region32
      $region31: #{graphcast_encoder_embedder.3} parent=15 // pred_region
        %s290 = sld [smem:[#allocation3 + %s20]]
        %p291 = scmp.lt.s32.totalorder %s290, 2
        %s292 = scalar_select %p291, %s290, 2
        %s293 = smul.addr %s292, 256
        %s294 = smul.addr %s293, 4
        %s295 = scalar_lea.vmem %s4, %s294
        %s296 = sld [smem:[#allocation3 + %s20]]
      $region32: #{graphcast_encoder_embedder.3} parent=15 // pred_fallthru
        _
      // Predicated region
      $region33: #{graphcast_encoder_embedder.3} parent=15 // pred_check
        %p297 = pneg %p152
      $region34: #{graphcast_encoder_embedder.3} parent=15 // pred_check_branch
        %299 = sbr.rel (%p297) target = $region36
      $region35: #{graphcast_encoder_embedder.3} parent=15 // pred_region
        %s300 = sld [smem:[#allocation3 + %s20]]
        %p301 = scmp.lt.s32.totalorder %s300, 2
        %s302 = scalar_select %p301, %s300, 2
        %s303 = smul.addr %s302, 4
        %s304 = scalar_lea.vmem %s5, %s303
        %s305 = sld [smem:[#allocation3 + %s20]]
      $region36: #{graphcast_encoder_embedder.3} parent=15 // pred_fallthru
        _
      // Predicated region
      $region37: #{graphcast_encoder_embedder.3} parent=15 // pred_check
        %p306 = pneg %p180
      $region38: #{graphcast_encoder_embedder.3} parent=15 // pred_check_branch
        %308 = sbr.rel (%p306) target = $region40
      $region39: #{graphcast_encoder_embedder.3} parent=15 // pred_region
        %s309 = sld [smem:[#allocation3 + %s20]]
        %p310 = scmp.lt.s32.totalorder %s309, 2
        %s311 = scalar_select %p310, %s309, 2
        %s312 = smul.addr %s311, 4
        %s313 = scalar_lea.vmem %s6, %s312
        %s314 = sld [smem:[#allocation3 + %s20]]
      $region40: #{graphcast_encoder_embedder.3} parent=15 // pred_fallthru
        _
      // Predicated region
      $region41: #{graphcast_encoder_embedder.3} parent=15 // pred_check
        %p315 = pneg %p208
      $region42: #{graphcast_encoder_embedder.3} parent=15 // pred_check_branch
        %317 = sbr.rel (%p315) target = $region44
      $region43: #{graphcast_encoder_embedder.3} parent=15 // pred_region
        %s318 = sld [smem:[#allocation3 + %s20]]
        %p319 = scmp.lt.s32.totalorder %s318, 2
        %s320 = scalar_select %p319, %s318, 2
        %s321 = smul.addr %s320, 4
        %s322 = scalar_lea.vmem %s7, %s321
        %s323 = sld [smem:[#allocation3 + %s20]]
      $region44: #{graphcast_encoder_embedder.3} parent=15 // pred_fallthru
        _
    $region16: #{graphcast_encoder_embedder.3} parent=5 // pred_fallthru
      _
    %p324 = scmp.le.s32.totalorder 1, %s20
    %p325 = scmp.lt.s32.totalorder %s20, 4
    %p326 = pnand %p324, %p325
    %p327 = pneg %p326
    // Predicated region
    $region45: #{graphcast_encoder_embedder.3} parent=5 // pred_check
      _
    $region46: #{graphcast_encoder_embedder.3} parent=5 // pred_check_branch
      %329 = sbr.rel (%p326) target = $region48
    $region47: #{graphcast_encoder_embedder.3} parent=5 // pred_region
      %s330 = ssub.s32 %s20, 1
      %s331 = smul.u32 10, %s25
      %p332 = scmp.lt.s32.totalorder %s331, 29
      %s333 = scalar_select %p332, %s331, 29
      %s334 = smul.addr %s333, 4
      %s335 = scalar_lea.vmem %s1, %s334
      %p336 = pneg %p46
      %p337 = pneg %p43
      %s338 = sld [smem:[#allocation3 + %s25]]
      %p339 = scmp.lt.s32.totalorder %s338, 2
      %s340 = scalar_select %p339, %s338, 2
      %s341 = smul.addr %s340, 4
      %s342 = smul.addr %s341, 4
      %s343 = scalar_lea.vmem %s2, %s342
      %p344 = pneg %p74
      %p345 = pneg %p71
      %s346 = sld [smem:[#allocation3 + %s25]]
      %p347 = scmp.lt.s32.totalorder %s346, 2
      %s348 = scalar_select %p347, %s346, 2
      %s349 = smul.addr %s348, 4
      %s350 = scalar_lea.vmem %s3, %s349
      %p351 = pneg %p102
      %p352 = pneg %p99
      %s353 = sld [smem:[#allocation3 + %s25]]
      %p354 = scmp.lt.s32.totalorder %s353, 2
      %s355 = scalar_select %p354, %s353, 2
      %s356 = smul.addr %s355, 256
      %s357 = smul.addr %s356, 4
      %s358 = scalar_lea.vmem %s4, %s357
      %p359 = pneg %p130
      %p360 = pneg %p127
      %s361 = sld [smem:[#allocation3 + %s25]]
      %p362 = scmp.lt.s32.totalorder %s361, 2
      %s363 = scalar_select %p362, %s361, 2
      %s364 = smul.addr %s363, 4
      %s365 = scalar_lea.vmem %s5, %s364
      %p366 = pneg %p158
      %p367 = pneg %p155
      %s368 = sld [smem:[#allocation3 + %s25]]
      %p369 = scmp.lt.s32.totalorder %s368, 2
      %s370 = scalar_select %p369, %s368, 2
      %s371 = smul.addr %s370, 4
      %s372 = scalar_lea.vmem %s6, %s371
      %p373 = pneg %p186
      %p374 = pneg %p183
      %s375 = sld [smem:[#allocation3 + %s25]]
      %p376 = scmp.lt.s32.totalorder %s375, 2
      %s377 = scalar_select %p376, %s375, 2
      %s378 = smul.addr %s377, 4
      %s379 = scalar_lea.vmem %s7, %s378
      %p380 = pneg %p214
      %p381 = pneg %p211
      %p382 = pneg %p240
      %p383 = pneg %p237
      %s384 = smul.u32 10, %s25
      %p385 = scmp.lt.s32.totalorder %s384, 29
      %s386 = scalar_select %p385, %s384, 29
      %s387 = smul.addr %s386, 4
      %s388 = smul.addr %s387, 4
      %s389 = scalar_lea.vmem %s8, %s388
      %s390 = smul.u32 10, %s25
      %p391 = scmp.lt.s32.totalorder %s390, 29
      %s392 = scalar_select %p391, %s390, 29
      %s393 = smul.addr %s392, 4
      %s394 = scalar_lea.vmem %s1, %s393
      %s395 = smul.u32 10, %s25
      %s396 = sld [smem:[#allocation3 + %s25]]
      %p397 = scmp.lt.s32.totalorder %s396, 2
      %s398 = scalar_select %p397, %s396, 2
      %s399 = smul.addr %s398, 4
      %s400 = smul.addr %s399, 4
      %s401 = scalar_lea.vmem %s2, %s400
      %s402 = sld [smem:[#allocation3 + %s25]]
      %s403 = sld [smem:[#allocation3 + %s25]]
      %p404 = scmp.lt.s32.totalorder %s403, 2
      %s405 = scalar_select %p404, %s403, 2
      %s406 = smul.addr %s405, 4
      %s407 = scalar_lea.vmem %s3, %s406
      %s408 = sld [smem:[#allocation3 + %s25]]
      %s409 = sld [smem:[#allocation3 + %s25]]
      %p410 = scmp.lt.s32.totalorder %s409, 2
      %s411 = scalar_select %p410, %s409, 2
      %s412 = smul.addr %s411, 256
      %s413 = smul.addr %s412, 4
      %s414 = scalar_lea.vmem %s4, %s413
      %s415 = sld [smem:[#allocation3 + %s25]]
      %s416 = sld [smem:[#allocation3 + %s25]]
      %p417 = scmp.lt.s32.totalorder %s416, 2
      %s418 = scalar_select %p417, %s416, 2
      %s419 = smul.addr %s418, 4
      %s420 = scalar_lea.vmem %s5, %s419
      %s421 = sld [smem:[#allocation3 + %s25]]
      %s422 = sld [smem:[#allocation3 + %s25]]
      %p423 = scmp.lt.s32.totalorder %s422, 2
      %s424 = scalar_select %p423, %s422, 2
      %s425 = smul.addr %s424, 4
      %s426 = scalar_lea.vmem %s6, %s425
      %s427 = sld [smem:[#allocation3 + %s25]]
      %s428 = sld [smem:[#allocation3 + %s25]]
      %p429 = scmp.lt.s32.totalorder %s428, 2
      %s430 = scalar_select %p429, %s428, 2
      %s431 = smul.addr %s430, 4
      %s432 = scalar_lea.vmem %s7, %s431
      %s433 = sld [smem:[#allocation3 + %s25]]
      %s434 = smul.u32 10, %s25
      %p435 = scmp.lt.s32.totalorder %s434, 29
      %s436 = scalar_select %p435, %s434, 29
      %s437 = smul.addr %s436, 4
      %s438 = smul.addr %s437, 4
      %s439 = scalar_lea.vmem %s8, %s438
      %s440 = smul.u32 10, %s25
      %v443 = vld [vmem:[%s394] sm:$0xf]
      %v444 = vld [vmem:[%s394 + $0x4] sm:$0xf]
      %v445 = vld [vmem:[%s394 + $0x8] sm:$0xf]
      %v446 = vld [vmem:[%s394 + $0xc] sm:$0xf]
      %v447 = vld [vmem:[%s394 + $0x10] sm:$0xf]
      %v448 = vld [vmem:[%s394 + $0x14] sm:$0xf]
      %v449 = vld [vmem:[%s394 + $0x18] sm:$0xf]
      %v450 = vld [vmem:[%s394 + $0x1c] sm:$0xf]
      %v451 = vld [vmem:[%s394 + $0x20] sm:$0xf]
      %v452 = vld [vmem:[%s394 + $0x24] sm:$0xf]
      %v453 = vld [vmem:[%s401] sm:$0xff]
      %v454 = vld [vmem:[%s401 + $0x8] sm:$0xff]
      %v455 = vld [vmem:[%s407] sm:$0xf]
      %v457 = vlaneseq
      %v458 = vshrl.u32 %v457, 7
      %v459 = vsub.s32 0, %v458
      %v460 = vrot.slane %v455, %v459
      %v461 = vlaneseq
      %v462 = vshrl.u32 %v461, 7
      %v463 = vsub.s32 1, %v462
      %v464 = vrot.slane %v455, %v463
      %v465 = vlaneseq
      %v466 = vshrl.u32 %v465, 7
      %v467 = vsub.s32 2, %v466
      %v468 = vrot.slane %v455, %v467
      %v469 = vlaneseq
      %v470 = vshrl.u32 %v469, 7
      %v471 = vsub.s32 3, %v470
      %v472 = vrot.slane %v455, %v471
      %v487 = vunpack.c.l.b16 %v443
      %v488 = vunpack.c.l.b16 %v444
      %v489 = vunpack.c.l.b16 %v445
      %v490 = vunpack.c.l.b16 %v446
      %v491 = vunpack.c.l.b16 %v447
      %v492 = vunpack.c.l.b16 %v448
      %v493 = vunpack.c.l.b16 %v449
      %v494 = vunpack.c.l.b16 %v450
      %v495 = vunpack.c.l.b16 %v451
      %v496 = vunpack.c.l.b16 %v452
      %v497 = vpack.c.b16 %v488, %v487
      %v498 = vpack.c.b16 %v490, %v489
      %v499 = vpack.c.b16 %v492, %v491
      %v500 = vpack.c.b16 %v494, %v493
      %v501 = vpack.c.b16 %v496, %v495
      %v504 = vunpack.c.l.b16 %v453
      %v505 = vunpack.c.h.b16 %v453
      %v506 = vunpack.c.l.b16 %v454
      %v507 = vunpack.c.h.b16 %v454
      %v508 = vpack.c.b16 %v504, %v504
      %v509 = vpack.c.b16 %v505, %v505
      %v510 = vpack.c.b16 %v506, %v506
      %v511 = vpack.c.b16 %v507, %v507
      %vm512 = vcmask 64512
      %v514 = vsel %vm512, %v497, 0
      %v517 = vsel %vm512, %v498, 0
      %v520 = vsel %vm512, %v499, 0
      %v523 = vsel %vm512, %v500, 0
      %v526 = vsel %vm512, %v501, 0
      %vm528 = vcmask 1043456
      %v530 = vsel %vm528, %v508, 0
      %v533 = vsel %vm528, %v509, 0
      %v536 = vsel %vm528, %v510, 0
      %v539 = vsel %vm528, %v511, 0
      %541 = vmatprep.subr.bf16.mxu0 %v533
      %542 = vmatpush1.bf16.msra.mxu0 %v530
      %543 = vmatprep.subr.bf16.mxu0 0
      %544 = vmatpush1.bf16.msra.mxu0 0
      %545 = vmatprep.subr.bf16.mxu0 0
      %546 = vmatpush1.bf16.msra.mxu0 0
      %547 = vmatprep.subr.bf16.mxu0 0
      %548 = vmatpush1.bf16.msra.mxu0 0
      %549 = vmatprep.subr.bf16.mxu0 0
      %550 = vmatpush1.bf16.msra.mxu0 0
      %551 = vmatprep.subr.bf16.mxu0 0
      %552 = vmatpush1.bf16.msra.mxu0 0
      %553 = vmatprep.subr.bf16.mxu0 0
      %554 = vmatpush1.bf16.msra.mxu0 0
      %555 = vmatprep.subr.bf16.mxu0 0
      %556 = vmatpush1.bf16.msra.mxu0 0
      %557 = vmatprep.subr.bf16.mxu0 0
      %558 = vmatpush1.bf16.msra.mxu0 0
      %559 = vmatprep.subr.bf16.mxu0 0
      %560 = vmatpush1.bf16.msra.mxu0 0
      %561 = vmatprep.subr.bf16.mxu0 0
      %562 = vmatpush1.bf16.msra.mxu0 0
      %563 = vmatprep.subr.bf16.mxu0 0
      %564 = vmatpush1.bf16.msra.mxu0 0
      %565 = vmatprep.subr.bf16.mxu0 0
      %566 = vmatpush1.bf16.msra.mxu0 0
      %567 = vmatprep.subr.bf16.mxu0 0
      %568 = vmatpush1.bf16.msra.mxu0 0
      %569 = vmatprep.subr.bf16.mxu0 0
      %570 = vmatpush1.bf16.msra.mxu0 0
      %571 = vmatprep.subr.bf16.mxu0 0
      %572 = vmatpush1.bf16.msra.mxu0 0
      %573 = vmatprep.mubr.bf16.mxu0 0
      %574 = vmatmul.mubr.bf16.gmra.mrb[0].mxu0 %v514
      %v575 = vpop.f32.mrb[0].mxu0
      %v576 = vadd.f32 %v460, %v575
      %v577 = vpop.f32.mrb[0].mxu0
      %v578 = vadd.f32 %v464, %v577
      %v579 = vpop.f32.mrb[0].mxu0
      %v580 = vadd.f32 %v460, %v579
      %v581 = vpop.f32.mrb[0].mxu0
      %v582 = vadd.f32 %v464, %v581
      %583 = vmatprep.mubr.bf16.mxu0 0
      %584 = vmatmul.mubr.bf16.gmra.mrb[0].mxu0 %v517
      %v585 = vpop.f32.mrb[0].mxu0
      %v586 = vadd.f32 %v460, %v585
      %v587 = vpop.f32.mrb[0].mxu0
      %v588 = vadd.f32 %v464, %v587
      %v589 = vpop.f32.mrb[0].mxu0
      %v590 = vadd.f32 %v460, %v589
      %v591 = vpop.f32.mrb[0].mxu0
      %v592 = vadd.f32 %v464, %v591
      %593 = vmatprep.mubr.bf16.mxu0 0
      %594 = vmatmul.mubr.bf16.gmra.mrb[0].mxu0 %v520
      %v595 = vpop.f32.mrb[0].mxu0
      %v596 = vadd.f32 %v460, %v595
      %v597 = vpop.f32.mrb[0].mxu0
      %v598 = vadd.f32 %v464, %v597
      %v599 = vpop.f32.mrb[0].mxu0
      %v600 = vadd.f32 %v460, %v599
      %v601 = vpop.f32.mrb[0].mxu0
      %v602 = vadd.f32 %v464, %v601
      %603 = vmatprep.mubr.bf16.mxu0 0
      %604 = vmatmul.mubr.bf16.gmra.mrb[0].mxu0 %v523
      %v605 = vpop.f32.mrb[0].mxu0
      %v606 = vadd.f32 %v460, %v605
      %v607 = vpop.f32.mrb[0].mxu0
      %v608 = vadd.f32 %v464, %v607
      %v609 = vpop.f32.mrb[0].mxu0
      %v610 = vadd.f32 %v460, %v609
      %v611 = vpop.f32.mrb[0].mxu0
      %v612 = vadd.f32 %v464, %v611
      %613 = vmatprep.mubr.bf16.mxu0 0
      %614 = vmatmul.mubr.bf16.gmra.mrb[0].mxu0 %v526
      %v615 = vpop.f32.mrb[0].mxu0
      %v616 = vadd.f32 %v460, %v615
      %v617 = vpop.f32.mrb[0].mxu0
      %v618 = vadd.f32 %v464, %v617
      %v619 = vpop.f32.mrb[0].mxu0
      %v620 = vadd.f32 %v460, %v619
      %v621 = vpop.f32.mrb[0].mxu0
      %v622 = vadd.f32 %v464, %v621
      %623 = vdwg.mxu0
      %624 = vmatprep.subr.bf16.mxu0 %v539
      %625 = vmatpush1.bf16.msra.mxu0 %v536
      %626 = vmatprep.subr.bf16.mxu0 0
      %627 = vmatpush1.bf16.msra.mxu0 0
      %628 = vmatprep.subr.bf16.mxu0 0
      %629 = vmatpush1.bf16.msra.mxu0 0
      %630 = vmatprep.subr.bf16.mxu0 0
      %631 = vmatpush1.bf16.msra.mxu0 0
      %632 = vmatprep.subr.bf16.mxu0 0
      %633 = vmatpush1.bf16.msra.mxu0 0
      %634 = vmatprep.subr.bf16.mxu0 0
      %635 = vmatpush1.bf16.msra.mxu0 0
      %636 = vmatprep.subr.bf16.mxu0 0
      %637 = vmatpush1.bf16.msra.mxu0 0
      %638 = vmatprep.subr.bf16.mxu0 0
      %639 = vmatpush1.bf16.msra.mxu0 0
      %640 = vmatprep.subr.bf16.mxu0 0
      %641 = vmatpush1.bf16.msra.mxu0 0
      %642 = vmatprep.subr.bf16.mxu0 0
      %643 = vmatpush1.bf16.msra.mxu0 0
      %644 = vmatprep.subr.bf16.mxu0 0
      %645 = vmatpush1.bf16.msra.mxu0 0
      %646 = vmatprep.subr.bf16.mxu0 0
      %647 = vmatpush1.bf16.msra.mxu0 0
      %648 = vmatprep.subr.bf16.mxu0 0
      %649 = vmatpush1.bf16.msra.mxu0 0
      %650 = vmatprep.subr.bf16.mxu0 0
      %651 = vmatpush1.bf16.msra.mxu0 0
      %652 = vmatprep.subr.bf16.mxu0 0
      %653 = vmatpush1.bf16.msra.mxu0 0
      %654 = vmatprep.subr.bf16.mxu0 0
      %655 = vmatpush1.bf16.msra.mxu0 0
      %656 = vmatprep.mubr.bf16.mxu0 0
      %657 = vmatmul.mubr.bf16.gmra.mrb[0].mxu0 %v514
      %v658 = vpop.f32.mrb[0].mxu0
      %v659 = vadd.f32 %v468, %v658
      %v660 = vpop.f32.mrb[0].mxu0
      %v661 = vadd.f32 %v472, %v660
      %v662 = vpop.f32.mrb[0].mxu0
      %v663 = vadd.f32 %v468, %v662
      %v664 = vpop.f32.mrb[0].mxu0
      %v665 = vadd.f32 %v472, %v664
      %666 = vmatprep.mubr.bf16.mxu0 0
      %667 = vmatmul.mubr.bf16.gmra.mrb[0].mxu0 %v517
      %v668 = vpop.f32.mrb[0].mxu0
      %v669 = vadd.f32 %v468, %v668
      %v670 = vpop.f32.mrb[0].mxu0
      %v671 = vadd.f32 %v472, %v670
      %v672 = vpop.f32.mrb[0].mxu0
      %v673 = vadd.f32 %v468, %v672
      %v674 = vpop.f32.mrb[0].mxu0
      %v675 = vadd.f32 %v472, %v674
      %676 = vmatprep.mubr.bf16.mxu0 0
      %677 = vmatmul.mubr.bf16.gmra.mrb[0].mxu0 %v520
      %v678 = vpop.f32.mrb[0].mxu0
      %v679 = vadd.f32 %v468, %v678
      %v680 = vpop.f32.mrb[0].mxu0
      %v681 = vadd.f32 %v472, %v680
      %v682 = vpop.f32.mrb[0].mxu0
      %v683 = vadd.f32 %v468, %v682
      %v684 = vpop.f32.mrb[0].mxu0
      %v685 = vadd.f32 %v472, %v684
      %686 = vmatprep.mubr.bf16.mxu0 0
      %687 = vmatmul.mubr.bf16.gmra.mrb[0].mxu0 %v523
      %v688 = vpop.f32.mrb[0].mxu0
      %v689 = vadd.f32 %v468, %v688
      %v690 = vpop.f32.mrb[0].mxu0
      %v691 = vadd.f32 %v472, %v690
      %v692 = vpop.f32.mrb[0].mxu0
      %v693 = vadd.f32 %v468, %v692
      %v694 = vpop.f32.mrb[0].mxu0
      %v695 = vadd.f32 %v472, %v694
      %696 = vmatprep.mubr.bf16.mxu0 0
      %697 = vmatmul.mubr.bf16.gmra.mrb[0].mxu0 %v526
      %v698 = vpop.f32.mrb[0].mxu0
      %v699 = vadd.f32 %v468, %v698
      %v700 = vpop.f32.mrb[0].mxu0
      %v701 = vadd.f32 %v472, %v700
      %v702 = vpop.f32.mrb[0].mxu0
      %v703 = vadd.f32 %v468, %v702
      %v704 = vpop.f32.mrb[0].mxu0
      %v705 = vadd.f32 %v472, %v704
      %706 = vdwg.mxu0
      %v707 = vpack.c.bf16 %v580, %v576
      %v708 = vpack.c.bf16 %v582, %v578
      %v709 = vpack.c.bf16 %v663, %v659
      %v710 = vpack.c.bf16 %v665, %v661
      %v711 = vpack.c.bf16 %v590, %v586
      %v712 = vpack.c.bf16 %v592, %v588
      %v713 = vpack.c.bf16 %v673, %v669
      %v714 = vpack.c.bf16 %v675, %v671
      %v715 = vpack.c.bf16 %v600, %v596
      %v716 = vpack.c.bf16 %v602, %v598
      %v717 = vpack.c.bf16 %v683, %v679
      %v718 = vpack.c.bf16 %v685, %v681
      %v719 = vpack.c.bf16 %v610, %v606
      %v720 = vpack.c.bf16 %v612, %v608
      %v721 = vpack.c.bf16 %v693, %v689
      %v722 = vpack.c.bf16 %v695, %v691
      %v723 = vpack.c.bf16 %v620, %v616
      %v724 = vpack.c.bf16 %v622, %v618
      %v725 = vpack.c.bf16 %v703, %v699
      %v726 = vpack.c.bf16 %v705, %v701
      %v727 = vxor.u32 %v707, 2147516416
      %v728 = vxor.u32 %v708, 2147516416
      %v729 = vxor.u32 %v709, 2147516416
      %v730 = vxor.u32 %v710, 2147516416
      %v731 = vxor.u32 %v711, 2147516416
      %v732 = vxor.u32 %v712, 2147516416
      %v733 = vxor.u32 %v713, 2147516416
      %v734 = vxor.u32 %v714, 2147516416
      %v735 = vxor.u32 %v715, 2147516416
      %v736 = vxor.u32 %v716, 2147516416
      %v737 = vxor.u32 %v717, 2147516416
      %v738 = vxor.u32 %v718, 2147516416
      %v739 = vxor.u32 %v719, 2147516416
      %v740 = vxor.u32 %v720, 2147516416
      %v741 = vxor.u32 %v721, 2147516416
      %v742 = vxor.u32 %v722, 2147516416
      %v743 = vxor.u32 %v723, 2147516416
      %v744 = vxor.u32 %v724, 2147516416
      %v745 = vxor.u32 %v725, 2147516416
      %v746 = vxor.u32 %v726, 2147516416
      %v748 = vmul.bf16 %v727, 1069105081
      %v749 = vpow.bf16.pop %v748
      %v751 = vmul.bf16 %v728, 1069105081
      %v752 = vpow.bf16.pop %v751
      %v754 = vmul.bf16 %v729, 1069105081
      %v755 = vpow.bf16.pop %v754
      %v757 = vmul.bf16 %v730, 1069105081
      %v758 = vpow.bf16.pop %v757
      %v760 = vmul.bf16 %v731, 1069105081
      %v761 = vpow.bf16.pop %v760
      %v763 = vmul.bf16 %v732, 1069105081
      %v764 = vpow.bf16.pop %v763
      %v766 = vmul.bf16 %v733, 1069105081
      %v767 = vpow.bf16.pop %v766
      %v769 = vmul.bf16 %v734, 1069105081
      %v770 = vpow.bf16.pop %v769
      %v772 = vmul.bf16 %v735, 1069105081
      %v773 = vpow.bf16.pop %v772
      %v775 = vmul.bf16 %v736, 1069105081
      %v776 = vpow.bf16.pop %v775
      %v778 = vmul.bf16 %v737, 1069105081
      %v779 = vpow.bf16.pop %v778
      %v781 = vmul.bf16 %v738, 1069105081
      %v782 = vpow.bf16.pop %v781
      %v784 = vmul.bf16 %v739, 1069105081
      %v785 = vpow.bf16.pop %v784
      %v787 = vmul.bf16 %v740, 1069105081
      %v788 = vpow.bf16.pop %v787
      %v790 = vmul.bf16 %v741, 1069105081
      %v791 = vpow.bf16.pop %v790
      %v793 = vmul.bf16 %v742, 1069105081
      %v794 = vpow.bf16.pop %v793
      %v796 = vmul.bf16 %v743, 1069105081
      %v797 = vpow.bf16.pop %v796
      %v799 = vmul.bf16 %v744, 1069105081
      %v800 = vpow.bf16.pop %v799
      %v802 = vmul.bf16 %v745, 1069105081
      %v803 = vpow.bf16.pop %v802
      %v805 = vmul.bf16 %v746, 1069105081
      %v806 = vpow.bf16.pop %v805
      %v807 = vadd.bf16 %v749, 1065369472
      %v808 = vadd.bf16 %v752, 1065369472
      %v809 = vadd.bf16 %v755, 1065369472
      %v810 = vadd.bf16 %v758, 1065369472
      %v811 = vadd.bf16 %v761, 1065369472
      %v812 = vadd.bf16 %v764, 1065369472
      %v813 = vadd.bf16 %v767, 1065369472
      %v814 = vadd.bf16 %v770, 1065369472
      %v815 = vadd.bf16 %v773, 1065369472
      %v816 = vadd.bf16 %v776, 1065369472
      %v817 = vadd.bf16 %v779, 1065369472
      %v818 = vadd.bf16 %v782, 1065369472
      %v819 = vadd.bf16 %v785, 1065369472
      %v820 = vadd.bf16 %v788, 1065369472
      %v821 = vadd.bf16 %v791, 1065369472
      %v822 = vadd.bf16 %v794, 1065369472
      %v823 = vadd.bf16 %v797, 1065369472
      %v824 = vadd.bf16 %v800, 1065369472
      %v825 = vadd.bf16 %v803, 1065369472
      %v826 = vadd.bf16 %v806, 1065369472
      %v827 = vrcp.bf16.pop %v807
      %v828 = vmul.bf16 1065369472, %v827
      %v829 = vrcp.bf16.pop %v808
      %v830 = vmul.bf16 1065369472, %v829
      %v831 = vrcp.bf16.pop %v809
      %v832 = vmul.bf16 1065369472, %v831
      %v833 = vrcp.bf16.pop %v810
      %v834 = vmul.bf16 1065369472, %v833
      %v835 = vrcp.bf16.pop %v811
      %v836 = vmul.bf16 1065369472, %v835
      %v837 = vrcp.bf16.pop %v812
      %v838 = vmul.bf16 1065369472, %v837
      %v839 = vrcp.bf16.pop %v813
      %v840 = vmul.bf16 1065369472, %v839
      %v841 = vrcp.bf16.pop %v814
      %v842 = vmul.bf16 1065369472, %v841
      %v843 = vrcp.bf16.pop %v815
      %v844 = vmul.bf16 1065369472, %v843
      %v845 = vrcp.bf16.pop %v816
      %v846 = vmul.bf16 1065369472, %v845
      %v847 = vrcp.bf16.pop %v817
      %v848 = vmul.bf16 1065369472, %v847
      %v849 = vrcp.bf16.pop %v818
      %v850 = vmul.bf16 1065369472, %v849
      %v851 = vrcp.bf16.pop %v819
      %v852 = vmul.bf16 1065369472, %v851
      %v853 = vrcp.bf16.pop %v820
      %v854 = vmul.bf16 1065369472, %v853
      %v855 = vrcp.bf16.pop %v821
      %v856 = vmul.bf16 1065369472, %v855
      %v857 = vrcp.bf16.pop %v822
      %v858 = vmul.bf16 1065369472, %v857
      %v859 = vrcp.bf16.pop %v823
      %v860 = vmul.bf16 1065369472, %v859
      %v861 = vrcp.bf16.pop %v824
      %v862 = vmul.bf16 1065369472, %v861
      %v863 = vrcp.bf16.pop %v825
      %v864 = vmul.bf16 1065369472, %v863
      %v865 = vrcp.bf16.pop %v826
      %v866 = vmul.bf16 1065369472, %v865
      %v867 = vmul.bf16 %v707, %v828
      %v868 = vmul.bf16 %v708, %v830
      %v869 = vmul.bf16 %v709, %v832
      %v870 = vmul.bf16 %v710, %v834
      %v871 = vmul.bf16 %v711, %v836
      %v872 = vmul.bf16 %v712, %v838
      %v873 = vmul.bf16 %v713, %v840
      %v874 = vmul.bf16 %v714, %v842
      %v875 = vmul.bf16 %v715, %v844
      %v876 = vmul.bf16 %v716, %v846
      %v877 = vmul.bf16 %v717, %v848
      %v878 = vmul.bf16 %v718, %v850
      %v879 = vmul.bf16 %v719, %v852
      %v880 = vmul.bf16 %v720, %v854
      %v881 = vmul.bf16 %v721, %v856
      %v882 = vmul.bf16 %v722, %v858
      %v883 = vmul.bf16 %v723, %v860
      %v884 = vmul.bf16 %v724, %v862
      %v885 = vmul.bf16 %v725, %v864
      %v886 = vmul.bf16 %v726, %v866
      %v887 = vld [vmem:[%s414] sm:$0xff]
      %v888 = vld [vmem:[%s414 + $0x8] sm:$0xff]
      %v889 = vld [vmem:[%s414 + $0x10] sm:$0xff]
      %v890 = vld [vmem:[%s414 + $0x18] sm:$0xff]
      %v891 = vld [vmem:[%s414 + $0x20] sm:$0xff]
      %v892 = vld [vmem:[%s414 + $0x28] sm:$0xff]
      %v893 = vld [vmem:[%s414 + $0x30] sm:$0xff]
      %v894 = vld [vmem:[%s414 + $0x38] sm:$0xff]
      %v895 = vld [vmem:[%s414 + $0x40] sm:$0xff]
      %v896 = vld [vmem:[%s414 + $0x48] sm:$0xff]
      %v897 = vld [vmem:[%s414 + $0x50] sm:$0xff]
      %v898 = vld [vmem:[%s414 + $0x58] sm:$0xff]
      %v899 = vld [vmem:[%s414 + $0x60] sm:$0xff]
      %v900 = vld [vmem:[%s414 + $0x68] sm:$0xff]
      %v901 = vld [vmem:[%s414 + $0x70] sm:$0xff]
      %v902 = vld [vmem:[%s414 + $0x78] sm:$0xff]
      %v903 = vld [vmem:[%s414 + $0x80] sm:$0xff]
      %v904 = vld [vmem:[%s414 + $0x88] sm:$0xff]
      %v905 = vld [vmem:[%s414 + $0x90] sm:$0xff]
      %v906 = vld [vmem:[%s414 + $0x98] sm:$0xff]
      %v907 = vld [vmem:[%s414 + $0xa0] sm:$0xff]
      %v908 = vld [vmem:[%s414 + $0xa8] sm:$0xff]
      %v909 = vld [vmem:[%s414 + $0xb0] sm:$0xff]
      %v910 = vld [vmem:[%s414 + $0xb8] sm:$0xff]
      %v911 = vld [vmem:[%s414 + $0xc0] sm:$0xff]
      %v912 = vld [vmem:[%s414 + $0xc8] sm:$0xff]
      %v913 = vld [vmem:[%s414 + $0xd0] sm:$0xff]
      %v914 = vld [vmem:[%s414 + $0xd8] sm:$0xff]
      %v915 = vld [vmem:[%s414 + $0xe0] sm:$0xff]
      %v916 = vld [vmem:[%s414 + $0xe8] sm:$0xff]
      %v917 = vld [vmem:[%s414 + $0xf0] sm:$0xff]
      %v918 = vld [vmem:[%s414 + $0xf8] sm:$0xff]
      %v919 = vld [vmem:[%s414 + $0x100] sm:$0xff]
      %v920 = vld [vmem:[%s414 + $0x108] sm:$0xff]
      %v921 = vld [vmem:[%s414 + $0x110] sm:$0xff]
      %v922 = vld [vmem:[%s414 + $0x118] sm:$0xff]
      %v923 = vld [vmem:[%s414 + $0x120] sm:$0xff]
      %v924 = vld [vmem:[%s414 + $0x128] sm:$0xff]
      %v925 = vld [vmem:[%s414 + $0x130] sm:$0xff]
      %v926 = vld [vmem:[%s414 + $0x138] sm:$0xff]
      %v927 = vld [vmem:[%s414 + $0x140] sm:$0xff]
      %v928 = vld [vmem:[%s414 + $0x148] sm:$0xff]
      %v929 = vld [vmem:[%s414 + $0x150] sm:$0xff]
      %v930 = vld [vmem:[%s414 + $0x158] sm:$0xff]
      %v931 = vld [vmem:[%s414 + $0x160] sm:$0xff]
      %v932 = vld [vmem:[%s414 + $0x168] sm:$0xff]
      %v933 = vld [vmem:[%s414 + $0x170] sm:$0xff]
      %v934 = vld [vmem:[%s414 + $0x178] sm:$0xff]
      %v935 = vld [vmem:[%s414 + $0x180] sm:$0xff]
      %v936 = vld [vmem:[%s414 + $0x188] sm:$0xff]
      %v937 = vld [vmem:[%s414 + $0x190] sm:$0xff]
      %v938 = vld [vmem:[%s414 + $0x198] sm:$0xff]
      %v939 = vld [vmem:[%s414 + $0x1a0] sm:$0xff]
      %v940 = vld [vmem:[%s414 + $0x1a8] sm:$0xff]
      %v941 = vld [vmem:[%s414 + $0x1b0] sm:$0xff]
      %v942 = vld [vmem:[%s414 + $0x1b8] sm:$0xff]
      %v943 = vld [vmem:[%s414 + $0x1c0] sm:$0xff]
      %v944 = vld [vmem:[%s414 + $0x1c8] sm:$0xff]
      %v945 = vld [vmem:[%s414 + $0x1d0] sm:$0xff]
      %v946 = vld [vmem:[%s414 + $0x1d8] sm:$0xff]
      %v947 = vld [vmem:[%s414 + $0x1e0] sm:$0xff]
      %v948 = vld [vmem:[%s414 + $0x1e8] sm:$0xff]
      %v949 = vld [vmem:[%s414 + $0x1f0] sm:$0xff]
      %v950 = vld [vmem:[%s414 + $0x1f8] sm:$0xff]
      %v951 = vld [vmem:[%s414 + $0x200] sm:$0xff]
      %v952 = vld [vmem:[%s414 + $0x208] sm:$0xff]
      %v953 = vld [vmem:[%s414 + $0x210] sm:$0xff]
      %v954 = vld [vmem:[%s414 + $0x218] sm:$0xff]
      %v955 = vld [vmem:[%s414 + $0x220] sm:$0xff]
      %v956 = vld [vmem:[%s414 + $0x228] sm:$0xff]
      %v957 = vld [vmem:[%s414 + $0x230] sm:$0xff]
      %v958 = vld [vmem:[%s414 + $0x238] sm:$0xff]
      %v959 = vld [vmem:[%s414 + $0x240] sm:$0xff]
      %v960 = vld [vmem:[%s414 + $0x248] sm:$0xff]
      %v961 = vld [vmem:[%s414 + $0x250] sm:$0xff]
      %v962 = vld [vmem:[%s414 + $0x258] sm:$0xff]
      %v963 = vld [vmem:[%s414 + $0x260] sm:$0xff]
      %v964 = vld [vmem:[%s414 + $0x268] sm:$0xff]
      %v965 = vld [vmem:[%s414 + $0x270] sm:$0xff]
      %v966 = vld [vmem:[%s414 + $0x278] sm:$0xff]
      %v967 = vld [vmem:[%s414 + $0x280] sm:$0xff]
      %v968 = vld [vmem:[%s414 + $0x288] sm:$0xff]
      %v969 = vld [vmem:[%s414 + $0x290] sm:$0xff]
      %v970 = vld [vmem:[%s414 + $0x298] sm:$0xff]
      %v971 = vld [vmem:[%s414 + $0x2a0] sm:$0xff]
      %v972 = vld [vmem:[%s414 + $0x2a8] sm:$0xff]
      %v973 = vld [vmem:[%s414 + $0x2b0] sm:$0xff]
      %v974 = vld [vmem:[%s414 + $0x2b8] sm:$0xff]
      %v975 = vld [vmem:[%s414 + $0x2c0] sm:$0xff]
      %v976 = vld [vmem:[%s414 + $0x2c8] sm:$0xff]
      %v977 = vld [vmem:[%s414 + $0x2d0] sm:$0xff]
      %v978 = vld [vmem:[%s414 + $0x2d8] sm:$0xff]
      %v979 = vld [vmem:[%s414 + $0x2e0] sm:$0xff]
      %v980 = vld [vmem:[%s414 + $0x2e8] sm:$0xff]
      %v981 = vld [vmem:[%s414 + $0x2f0] sm:$0xff]
      %v982 = vld [vmem:[%s414 + $0x2f8] sm:$0xff]
      %v983 = vld [vmem:[%s414 + $0x300] sm:$0xff]
      %v984 = vld [vmem:[%s414 + $0x308] sm:$0xff]
      %v985 = vld [vmem:[%s414 + $0x310] sm:$0xff]
      %v986 = vld [vmem:[%s414 + $0x318] sm:$0xff]
      %v987 = vld [vmem:[%s414 + $0x320] sm:$0xff]
      %v988 = vld [vmem:[%s414 + $0x328] sm:$0xff]
      %v989 = vld [vmem:[%s414 + $0x330] sm:$0xff]
      %v990 = vld [vmem:[%s414 + $0x338] sm:$0xff]
      %v991 = vld [vmem:[%s414 + $0x340] sm:$0xff]
      %v992 = vld [vmem:[%s414 + $0x348] sm:$0xff]
      %v993 = vld [vmem:[%s414 + $0x350] sm:$0xff]
      %v994 = vld [vmem:[%s414 + $0x358] sm:$0xff]
      %v995 = vld [vmem:[%s414 + $0x360] sm:$0xff]
      %v996 = vld [vmem:[%s414 + $0x368] sm:$0xff]
      %v997 = vld [vmem:[%s414 + $0x370] sm:$0xff]
      %v998 = vld [vmem:[%s414 + $0x378] sm:$0xff]
      %v999 = vld [vmem:[%s414 + $0x380] sm:$0xff]
      %v1000 = vld [vmem:[%s414 + $0x388] sm:$0xff]
      %v1001 = vld [vmem:[%s414 + $0x390] sm:$0xff]
      %v1002 = vld [vmem:[%s414 + $0x398] sm:$0xff]
      %v1003 = vld [vmem:[%s414 + $0x3a0] sm:$0xff]
      %v1004 = vld [vmem:[%s414 + $0x3a8] sm:$0xff]
      %v1005 = vld [vmem:[%s414 + $0x3b0] sm:$0xff]
      %v1006 = vld [vmem:[%s414 + $0x3b8] sm:$0xff]
      %v1007 = vld [vmem:[%s414 + $0x3c0] sm:$0xff]
      %v1008 = vld [vmem:[%s414 + $0x3c8] sm:$0xff]
      %v1009 = vld [vmem:[%s414 + $0x3d0] sm:$0xff]
      %v1010 = vld [vmem:[%s414 + $0x3d8] sm:$0xff]
      %v1011 = vld [vmem:[%s414 + $0x3e0] sm:$0xff]
      %v1012 = vld [vmem:[%s414 + $0x3e8] sm:$0xff]
      %v1013 = vld [vmem:[%s414 + $0x3f0] sm:$0xff]
      %v1014 = vld [vmem:[%s414 + $0x3f8] sm:$0xff]
      %v1015 = vld [vmem:[%s420] sm:$0xf]
      %v1017 = vlaneseq
      %v1018 = vshrl.u32 %v1017, 7
      %v1019 = vsub.s32 0, %v1018
      %v1020 = vrot.slane %v1015, %v1019
      %v1021 = vlaneseq
      %v1022 = vshrl.u32 %v1021, 7
      %v1023 = vsub.s32 1, %v1022
      %v1024 = vrot.slane %v1015, %v1023
      %v1025 = vlaneseq
      %v1026 = vshrl.u32 %v1025, 7
      %v1027 = vsub.s32 2, %v1026
      %v1028 = vrot.slane %v1015, %v1027
      %v1029 = vlaneseq
      %v1030 = vshrl.u32 %v1029, 7
      %v1031 = vsub.s32 3, %v1030
      %v1032 = vrot.slane %v1015, %v1031
      %v1165 = vunpack.c.l.b16 %v887
      %v1166 = vunpack.c.h.b16 %v887
      %v1167 = vunpack.c.l.b16 %v888
      %v1168 = vunpack.c.h.b16 %v888
      %v1169 = vunpack.c.l.b16 %v889
      %v1170 = vunpack.c.h.b16 %v889
      %v1171 = vunpack.c.l.b16 %v890
      %v1172 = vunpack.c.h.b16 %v890
      %v1173 = vunpack.c.l.b16 %v891
      %v1174 = vunpack.c.h.b16 %v891
      %v1175 = vunpack.c.l.b16 %v892
      %v1176 = vunpack.c.h.b16 %v892
      %v1177 = vunpack.c.l.b16 %v893
      %v1178 = vunpack.c.h.b16 %v893
      %v1179 = vunpack.c.l.b16 %v894
      %v1180 = vunpack.c.h.b16 %v894
      %v1181 = vunpack.c.l.b16 %v895
      %v1182 = vunpack.c.h.b16 %v895
      %v1183 = vunpack.c.l.b16 %v896
      %v1184 = vunpack.c.h.b16 %v896
      %v1185 = vunpack.c.l.b16 %v897
      %v1186 = vunpack.c.h.b16 %v897
      %v1187 = vunpack.c.l.b16 %v898
      %v1188 = vunpack.c.h.b16 %v898
      %v1189 = vunpack.c.l.b16 %v899
      %v1190 = vunpack.c.h.b16 %v899
      %v1191 = vunpack.c.l.b16 %v900
      %v1192 = vunpack.c.h.b16 %v900
      %v1193 = vunpack.c.l.b16 %v901
      %v1194 = vunpack.c.h.b16 %v901
      %v1195 = vunpack.c.l.b16 %v902
      %v1196 = vunpack.c.h.b16 %v902
      %v1197 = vunpack.c.l.b16 %v903
      %v1198 = vunpack.c.h.b16 %v903
      %v1199 = vunpack.c.l.b16 %v904
      %v1200 = vunpack.c.h.b16 %v904
      %v1201 = vunpack.c.l.b16 %v905
      %v1202 = vunpack.c.h.b16 %v905
      %v1203 = vunpack.c.l.b16 %v906
      %v1204 = vunpack.c.h.b16 %v906
      %v1205 = vunpack.c.l.b16 %v907
      %v1206 = vunpack.c.h.b16 %v907
      %v1207 = vunpack.c.l.b16 %v908
      %v1208 = vunpack.c.h.b16 %v908
      %v1209 = vunpack.c.l.b16 %v909
      %v1210 = vunpack.c.h.b16 %v909
      %v1211 = vunpack.c.l.b16 %v910
      %v1212 = vunpack.c.h.b16 %v910
      %v1213 = vunpack.c.l.b16 %v911
      %v1214 = vunpack.c.h.b16 %v911
      %v1215 = vunpack.c.l.b16 %v912
      %v1216 = vunpack.c.h.b16 %v912
      %v1217 = vunpack.c.l.b16 %v913
      %v1218 = vunpack.c.h.b16 %v913
      %v1219 = vunpack.c.l.b16 %v914
      %v1220 = vunpack.c.h.b16 %v914
      %v1221 = vunpack.c.l.b16 %v915
      %v1222 = vunpack.c.h.b16 %v915
      %v1223 = vunpack.c.l.b16 %v916
      %v1224 = vunpack.c.h.b16 %v916
      %v1225 = vunpack.c.l.b16 %v917
      %v1226 = vunpack.c.h.b16 %v917
      %v1227 = vunpack.c.l.b16 %v918
      %v1228 = vunpack.c.h.b16 %v918
      %v1229 = vunpack.c.l.b16 %v919
      %v1230 = vunpack.c.h.b16 %v919
      %v1231 = vunpack.c.l.b16 %v920
      %v1232 = vunpack.c.h.b16 %v920
      %v1233 = vunpack.c.l.b16 %v921
      %v1234 = vunpack.c.h.b16 %v921
      %v1235 = vunpack.c.l.b16 %v922
      %v1236 = vunpack.c.h.b16 %v922
      %v1237 = vunpack.c.l.b16 %v923
      %v1238 = vunpack.c.h.b16 %v923
      %v1239 = vunpack.c.l.b16 %v924
      %v1240 = vunpack.c.h.b16 %v924
      %v1241 = vunpack.c.l.b16 %v925
      %v1242 = vunpack.c.h.b16 %v925
      %v1243 = vunpack.c.l.b16 %v926
      %v1244 = vunpack.c.h.b16 %v926
      %v1245 = vunpack.c.l.b16 %v927
      %v1246 = vunpack.c.h.b16 %v927
      %v1247 = vunpack.c.l.b16 %v928
      %v1248 = vunpack.c.h.b16 %v928
      %v1249 = vunpack.c.l.b16 %v929
      %v1250 = vunpack.c.h.b16 %v929
      %v1251 = vunpack.c.l.b16 %v930
      %v1252 = vunpack.c.h.b16 %v930
      %v1253 = vunpack.c.l.b16 %v931
      %v1254 = vunpack.c.h.b16 %v931
      %v1255 = vunpack.c.l.b16 %v932
      %v1256 = vunpack.c.h.b16 %v932
      %v1257 = vunpack.c.l.b16 %v933
      %v1258 = vunpack.c.h.b16 %v933
      %v1259 = vunpack.c.l.b16 %v934
      %v1260 = vunpack.c.h.b16 %v934
      %v1261 = vunpack.c.l.b16 %v935
      %v1262 = vunpack.c.h.b16 %v935
      %v1263 = vunpack.c.l.b16 %v936
      %v1264 = vunpack.c.h.b16 %v936
      %v1265 = vunpack.c.l.b16 %v937
      %v1266 = vunpack.c.h.b16 %v937
      %v1267 = vunpack.c.l.b16 %v938
      %v1268 = vunpack.c.h.b16 %v938
      %v1269 = vunpack.c.l.b16 %v939
      %v1270 = vunpack.c.h.b16 %v939
      %v1271 = vunpack.c.l.b16 %v940
      %v1272 = vunpack.c.h.b16 %v940
      %v1273 = vunpack.c.l.b16 %v941
      %v1274 = vunpack.c.h.b16 %v941
      %v1275 = vunpack.c.l.b16 %v942
      %v1276 = vunpack.c.h.b16 %v942
      %v1277 = vunpack.c.l.b16 %v943
      %v1278 = vunpack.c.h.b16 %v943
      %v1279 = vunpack.c.l.b16 %v944
      %v1280 = vunpack.c.h.b16 %v944
      %v1281 = vunpack.c.l.b16 %v945
      %v1282 = vunpack.c.h.b16 %v945
      %v1283 = vunpack.c.l.b16 %v946
      %v1284 = vunpack.c.h.b16 %v946
      %v1285 = vunpack.c.l.b16 %v947
      %v1286 = vunpack.c.h.b16 %v947
      %v1287 = vunpack.c.l.b16 %v948
      %v1288 = vunpack.c.h.b16 %v948
      %v1289 = vunpack.c.l.b16 %v949
      %v1290 = vunpack.c.h.b16 %v949
      %v1291 = vunpack.c.l.b16 %v950
      %v1292 = vunpack.c.h.b16 %v950
      %v1293 = vunpack.c.l.b16 %v951
      %v1294 = vunpack.c.h.b16 %v951
      %v1295 = vunpack.c.l.b16 %v952
      %v1296 = vunpack.c.h.b16 %v952
      %v1297 = vunpack.c.l.b16 %v953
      %v1298 = vunpack.c.h.b16 %v953
      %v1299 = vunpack.c.l.b16 %v954
      %v1300 = vunpack.c.h.b16 %v954
      %v1301 = vunpack.c.l.b16 %v955
      %v1302 = vunpack.c.h.b16 %v955
      %v1303 = vunpack.c.l.b16 %v956
      %v1304 = vunpack.c.h.b16 %v956
      %v1305 = vunpack.c.l.b16 %v957
      %v1306 = vunpack.c.h.b16 %v957
      %v1307 = vunpack.c.l.b16 %v958
      %v1308 = vunpack.c.h.b16 %v958
      %v1309 = vunpack.c.l.b16 %v959
      %v1310 = vunpack.c.h.b16 %v959
      %v1311 = vunpack.c.l.b16 %v960
      %v1312 = vunpack.c.h.b16 %v960
      %v1313 = vunpack.c.l.b16 %v961
      %v1314 = vunpack.c.h.b16 %v961
      %v1315 = vunpack.c.l.b16 %v962
      %v1316 = vunpack.c.h.b16 %v962
      %v1317 = vunpack.c.l.b16 %v963
      %v1318 = vunpack.c.h.b16 %v963
      %v1319 = vunpack.c.l.b16 %v964
      %v1320 = vunpack.c.h.b16 %v964
      %v1321 = vunpack.c.l.b16 %v965
      %v1322 = vunpack.c.h.b16 %v965
      %v1323 = vunpack.c.l.b16 %v966
      %v1324 = vunpack.c.h.b16 %v966
      %v1325 = vunpack.c.l.b16 %v967
      %v1326 = vunpack.c.h.b16 %v967
      %v1327 = vunpack.c.l.b16 %v968
      %v1328 = vunpack.c.h.b16 %v968
      %v1329 = vunpack.c.l.b16 %v969
      %v1330 = vunpack.c.h.b16 %v969
      %v1331 = vunpack.c.l.b16 %v970
      %v1332 = vunpack.c.h.b16 %v970
      %v1333 = vunpack.c.l.b16 %v971
      %v1334 = vunpack.c.h.b16 %v971
      %v1335 = vunpack.c.l.b16 %v972
      %v1336 = vunpack.c.h.b16 %v972
      %v1337 = vunpack.c.l.b16 %v973
      %v1338 = vunpack.c.h.b16 %v973
      %v1339 = vunpack.c.l.b16 %v974
      %v1340 = vunpack.c.h.b16 %v974
      %v1341 = vunpack.c.l.b16 %v975
      %v1342 = vunpack.c.h.b16 %v975
      %v1343 = vunpack.c.l.b16 %v976
      %v1344 = vunpack.c.h.b16 %v976
      %v1345 = vunpack.c.l.b16 %v977
      %v1346 = vunpack.c.h.b16 %v977
      %v1347 = vunpack.c.l.b16 %v978
      %v1348 = vunpack.c.h.b16 %v978
      %v1349 = vunpack.c.l.b16 %v979
      %v1350 = vunpack.c.h.b16 %v979
      %v1351 = vunpack.c.l.b16 %v980
      %v1352 = vunpack.c.h.b16 %v980
      %v1353 = vunpack.c.l.b16 %v981
      %v1354 = vunpack.c.h.b16 %v981
      %v1355 = vunpack.c.l.b16 %v982
      %v1356 = vunpack.c.h.b16 %v982
      %v1357 = vunpack.c.l.b16 %v983
      %v1358 = vunpack.c.h.b16 %v983
      %v1359 = vunpack.c.l.b16 %v984
      %v1360 = vunpack.c.h.b16 %v984
      %v1361 = vunpack.c.l.b16 %v985
      %v1362 = vunpack.c.h.b16 %v985
      %v1363 = vunpack.c.l.b16 %v986
      %v1364 = vunpack.c.h.b16 %v986
      %v1365 = vunpack.c.l.b16 %v987
      %v1366 = vunpack.c.h.b16 %v987
      %v1367 = vunpack.c.l.b16 %v988
      %v1368 = vunpack.c.h.b16 %v988
      %v1369 = vunpack.c.l.b16 %v989
      %v1370 = vunpack.c.h.b16 %v989
      %v1371 = vunpack.c.l.b16 %v990
      %v1372 = vunpack.c.h.b16 %v990
      %v1373 = vunpack.c.l.b16 %v991
      %v1374 = vunpack.c.h.b16 %v991
      %v1375 = vunpack.c.l.b16 %v992
      %v1376 = vunpack.c.h.b16 %v992
      %v1377 = vunpack.c.l.b16 %v993
      %v1378 = vunpack.c.h.b16 %v993
      %v1379 = vunpack.c.l.b16 %v994
      %v1380 = vunpack.c.h.b16 %v994
      %v1381 = vunpack.c.l.b16 %v995
      %v1382 = vunpack.c.h.b16 %v995
      %v1383 = vunpack.c.l.b16 %v996
      %v1384 = vunpack.c.h.b16 %v996
      %v1385 = vunpack.c.l.b16 %v997
      %v1386 = vunpack.c.h.b16 %v997
      %v1387 = vunpack.c.l.b16 %v998
      %v1388 = vunpack.c.h.b16 %v998
      %v1389 = vunpack.c.l.b16 %v999
      %v1390 = vunpack.c.h.b16 %v999
      %v1391 = vunpack.c.l.b16 %v1000
      %v1392 = vunpack.c.h.b16 %v1000
      %v1393 = vunpack.c.l.b16 %v1001
      %v1394 = vunpack.c.h.b16 %v1001
      %v1395 = vunpack.c.l.b16 %v1002
      %v1396 = vunpack.c.h.b16 %v1002
      %v1397 = vunpack.c.l.b16 %v1003
      %v1398 = vunpack.c.h.b16 %v1003
      %v1399 = vunpack.c.l.b16 %v1004
      %v1400 = vunpack.c.h.b16 %v1004
      %v1401 = vunpack.c.l.b16 %v1005
      %v1402 = vunpack.c.h.b16 %v1005
      %v1403 = vunpack.c.l.b16 %v1006
      %v1404 = vunpack.c.h.b16 %v1006
      %v1405 = vunpack.c.l.b16 %v1007
      %v1406 = vunpack.c.h.b16 %v1007
      %v1407 = vunpack.c.l.b16 %v1008
      %v1408 = vunpack.c.h.b16 %v1008
      %v1409 = vunpack.c.l.b16 %v1009
      %v1410 = vunpack.c.h.b16 %v1009
      %v1411 = vunpack.c.l.b16 %v1010
      %v1412 = vunpack.c.h.b16 %v1010
      %v1413 = vunpack.c.l.b16 %v1011
      %v1414 = vunpack.c.h.b16 %v1011
      %v1415 = vunpack.c.l.b16 %v1012
      %v1416 = vunpack.c.h.b16 %v1012
      %v1417 = vunpack.c.l.b16 %v1013
      %v1418 = vunpack.c.h.b16 %v1013
      %v1419 = vunpack.c.l.b16 %v1014
      %v1420 = vunpack.c.h.b16 %v1014
      %v1421 = vpack.c.b16 %v1169, %v1165
      %v1422 = vpack.c.b16 %v1170, %v1166
      %v1423 = vpack.c.b16 %v1171, %v1167
      %v1424 = vpack.c.b16 %v1172, %v1168
      %v1425 = vpack.c.b16 %v1177, %v1173
      %v1426 = vpack.c.b16 %v1178, %v1174
      %v1427 = vpack.c.b16 %v1179, %v1175
      %v1428 = vpack.c.b16 %v1180, %v1176
      %v1429 = vpack.c.b16 %v1185, %v1181
      %v1430 = vpack.c.b16 %v1186, %v1182
      %v1431 = vpack.c.b16 %v1187, %v1183
      %v1432 = vpack.c.b16 %v1188, %v1184
      %v1433 = vpack.c.b16 %v1193, %v1189
      %v1434 = vpack.c.b16 %v1194, %v1190
      %v1435 = vpack.c.b16 %v1195, %v1191
      %v1436 = vpack.c.b16 %v1196, %v1192
      %v1437 = vpack.c.b16 %v1201, %v1197
      %v1438 = vpack.c.b16 %v1202, %v1198
      %v1439 = vpack.c.b16 %v1203, %v1199
      %v1440 = vpack.c.b16 %v1204, %v1200
      %v1441 = vpack.c.b16 %v1209, %v1205
      %v1442 = vpack.c.b16 %v1210, %v1206
      %v1443 = vpack.c.b16 %v1211, %v1207
      %v1444 = vpack.c.b16 %v1212, %v1208
      %v1445 = vpack.c.b16 %v1217, %v1213
      %v1446 = vpack.c.b16 %v1218, %v1214
      %v1447 = vpack.c.b16 %v1219, %v1215
      %v1448 = vpack.c.b16 %v1220, %v1216
      %v1449 = vpack.c.b16 %v1225, %v1221
      %v1450 = vpack.c.b16 %v1226, %v1222
      %v1451 = vpack.c.b16 %v1227, %v1223
      %v1452 = vpack.c.b16 %v1228, %v1224
      %v1453 = vpack.c.b16 %v1233, %v1229
      %v1454 = vpack.c.b16 %v1234, %v1230
      %v1455 = vpack.c.b16 %v1235, %v1231
      %v1456 = vpack.c.b16 %v1236, %v1232
      %v1457 = vpack.c.b16 %v1241, %v1237
      %v1458 = vpack.c.b16 %v1242, %v1238
      %v1459 = vpack.c.b16 %v1243, %v1239
      %v1460 = vpack.c.b16 %v1244, %v1240
      %v1461 = vpack.c.b16 %v1249, %v1245
      %v1462 = vpack.c.b16 %v1250, %v1246
      %v1463 = vpack.c.b16 %v1251, %v1247
      %v1464 = vpack.c.b16 %v1252, %v1248
      %v1465 = vpack.c.b16 %v1257, %v1253
      %v1466 = vpack.c.b16 %v1258, %v1254
      %v1467 = vpack.c.b16 %v1259, %v1255
      %v1468 = vpack.c.b16 %v1260, %v1256
      %v1469 = vpack.c.b16 %v1265, %v1261
      %v1470 = vpack.c.b16 %v1266, %v1262
      %v1471 = vpack.c.b16 %v1267, %v1263
      %v1472 = vpack.c.b16 %v1268, %v1264
      %v1473 = vpack.c.b16 %v1273, %v1269
      %v1474 = vpack.c.b16 %v1274, %v1270
      %v1475 = vpack.c.b16 %v1275, %v1271
      %v1476 = vpack.c.b16 %v1276, %v1272
      %v1477 = vpack.c.b16 %v1281, %v1277
      %v1478 = vpack.c.b16 %v1282, %v1278
      %v1479 = vpack.c.b16 %v1283, %v1279
      %v1480 = vpack.c.b16 %v1284, %v1280
      %v1481 = vpack.c.b16 %v1289, %v1285
      %v1482 = vpack.c.b16 %v1290, %v1286
      %v1483 = vpack.c.b16 %v1291, %v1287
      %v1484 = vpack.c.b16 %v1292, %v1288
      %v1485 = vpack.c.b16 %v1297, %v1293
      %v1486 = vpack.c.b16 %v1298, %v1294
      %v1487 = vpack.c.b16 %v1299, %v1295
      %v1488 = vpack.c.b16 %v1300, %v1296
      %v1489 = vpack.c.b16 %v1305, %v1301
      %v1490 = vpack.c.b16 %v1306, %v1302
      %v1491 = vpack.c.b16 %v1307, %v1303
      %v1492 = vpack.c.b16 %v1308, %v1304
      %v1493 = vpack.c.b16 %v1313, %v1309
      %v1494 = vpack.c.b16 %v1314, %v1310
      %v1495 = vpack.c.b16 %v1315, %v1311
      %v1496 = vpack.c.b16 %v1316, %v1312
      %v1497 = vpack.c.b16 %v1321, %v1317
      %v1498 = vpack.c.b16 %v1322, %v1318
      %v1499 = vpack.c.b16 %v1323, %v1319
      %v1500 = vpack.c.b16 %v1324, %v1320
      %v1501 = vpack.c.b16 %v1329, %v1325
      %v1502 = vpack.c.b16 %v1330, %v1326
      %v1503 = vpack.c.b16 %v1331, %v1327
      %v1504 = vpack.c.b16 %v1332, %v1328
      %v1505 = vpack.c.b16 %v1337, %v1333
      %v1506 = vpack.c.b16 %v1338, %v1334
      %v1507 = vpack.c.b16 %v1339, %v1335
      %v1508 = vpack.c.b16 %v1340, %v1336
      %v1509 = vpack.c.b16 %v1345, %v1341
      %v1510 = vpack.c.b16 %v1346, %v1342
      %v1511 = vpack.c.b16 %v1347, %v1343
      %v1512 = vpack.c.b16 %v1348, %v1344
      %v1513 = vpack.c.b16 %v1353, %v1349
      %v1514 = vpack.c.b16 %v1354, %v1350
      %v1515 = vpack.c.b16 %v1355, %v1351
      %v1516 = vpack.c.b16 %v1356, %v1352
      %v1517 = vpack.c.b16 %v1361, %v1357
      %v1518 = vpack.c.b16 %v1362, %v1358
      %v1519 = vpack.c.b16 %v1363, %v1359
      %v1520 = vpack.c.b16 %v1364, %v1360
      %v1521 = vpack.c.b16 %v1369, %v1365
      %v1522 = vpack.c.b16 %v1370, %v1366
      %v1523 = vpack.c.b16 %v1371, %v1367
      %v1524 = vpack.c.b16 %v1372, %v1368
      %v1525 = vpack.c.b16 %v1377, %v1373
      %v1526 = vpack.c.b16 %v1378, %v1374
      %v1527 = vpack.c.b16 %v1379, %v1375
      %v1528 = vpack.c.b16 %v1380, %v1376
      %v1529 = vpack.c.b16 %v1385, %v1381
      %v1530 = vpack.c.b16 %v1386, %v1382
      %v1531 = vpack.c.b16 %v1387, %v1383
      %v1532 = vpack.c.b16 %v1388, %v1384
      %v1533 = vpack.c.b16 %v1393, %v1389
      %v1534 = vpack.c.b16 %v1394, %v1390
      %v1535 = vpack.c.b16 %v1395, %v1391
      %v1536 = vpack.c.b16 %v1396, %v1392
      %v1537 = vpack.c.b16 %v1401, %v1397
      %v1538 = vpack.c.b16 %v1402, %v1398
      %v1539 = vpack.c.b16 %v1403, %v1399
      %v1540 = vpack.c.b16 %v1404, %v1400
      %v1541 = vpack.c.b16 %v1409, %v1405
      %v1542 = vpack.c.b16 %v1410, %v1406
      %v1543 = vpack.c.b16 %v1411, %v1407
      %v1544 = vpack.c.b16 %v1412, %v1408
      %v1545 = vpack.c.b16 %v1417, %v1413
      %v1546 = vpack.c.b16 %v1418, %v1414
      %v1547 = vpack.c.b16 %v1419, %v1415
      %v1548 = vpack.c.b16 %v1420, %v1416
      %1677 = vmatprep.subr.bf16.mxu0 %v1422
      %1678 = vmatpush1.bf16.msra.mxu0 %v1421
      %1679 = vmatprep.subr.bf16.mxu0 %v1426
      %1680 = vmatpush1.bf16.msra.mxu0 %v1425
      %1681 = vmatprep.subr.bf16.mxu0 %v1430
      %1682 = vmatpush1.bf16.msra.mxu0 %v1429
      %1683 = vmatprep.subr.bf16.mxu0 %v1434
      %1684 = vmatpush1.bf16.msra.mxu0 %v1433
      %1685 = vmatprep.subr.bf16.mxu0 %v1438
      %1686 = vmatpush1.bf16.msra.mxu0 %v1437
      %1687 = vmatprep.subr.bf16.mxu0 %v1442
      %1688 = vmatpush1.bf16.msra.mxu0 %v1441
      %1689 = vmatprep.subr.bf16.mxu0 %v1446
      %1690 = vmatpush1.bf16.msra.mxu0 %v1445
      %1691 = vmatprep.subr.bf16.mxu0 %v1450
      %1692 = vmatpush1.bf16.msra.mxu0 %v1449
      %1693 = vmatprep.subr.bf16.mxu0 %v1454
      %1694 = vmatpush1.bf16.msra.mxu0 %v1453
      %1695 = vmatprep.subr.bf16.mxu0 %v1458
      %1696 = vmatpush1.bf16.msra.mxu0 %v1457
      %1697 = vmatprep.subr.bf16.mxu0 %v1462
      %1698 = vmatpush1.bf16.msra.mxu0 %v1461
      %1699 = vmatprep.subr.bf16.mxu0 %v1466
      %1700 = vmatpush1.bf16.msra.mxu0 %v1465
      %1701 = vmatprep.subr.bf16.mxu0 %v1470
      %1702 = vmatpush1.bf16.msra.mxu0 %v1469
      %1703 = vmatprep.subr.bf16.mxu0 %v1474
      %1704 = vmatpush1.bf16.msra.mxu0 %v1473
      %1705 = vmatprep.subr.bf16.mxu0 %v1478
      %1706 = vmatpush1.bf16.msra.mxu0 %v1477
      %1707 = vmatprep.subr.bf16.mxu0 %v1482
      %1708 = vmatpush1.bf16.msra.mxu0 %v1481
      %1709 = vmatprep.mubr.bf16.mxu0 %v868
      %1710 = vmatmul.mubr.bf16.gmra.mrb[0].mxu0 %v867
      %v1711 = vpop.f32.mrb[0].mxu0
      %v1712 = vadd.f32 %v1020, %v1711
      %v1713 = vpop.f32.mrb[0].mxu0
      %v1714 = vadd.f32 %v1024, %v1713
      %v1715 = vpop.f32.mrb[0].mxu0
      %v1716 = vadd.f32 %v1020, %v1715
      %v1717 = vpop.f32.mrb[0].mxu0
      %v1718 = vadd.f32 %v1024, %v1717
      %1719 = vmatprep.mubr.bf16.mxu0 %v872
      %1720 = vmatmul.mubr.bf16.gmra.mrb[0].mxu0 %v871
      %v1721 = vpop.f32.mrb[0].mxu0
      %v1722 = vadd.f32 %v1020, %v1721
      %v1723 = vpop.f32.mrb[0].mxu0
      %v1724 = vadd.f32 %v1024, %v1723
      %v1725 = vpop.f32.mrb[0].mxu0
      %v1726 = vadd.f32 %v1020, %v1725
      %v1727 = vpop.f32.mrb[0].mxu0
      %v1728 = vadd.f32 %v1024, %v1727
      %1729 = vmatprep.mubr.bf16.mxu0 %v876
      %1730 = vmatmul.mubr.bf16.gmra.mrb[0].mxu0 %v875
      %v1731 = vpop.f32.mrb[0].mxu0
      %v1732 = vadd.f32 %v1020, %v1731
      %v1733 = vpop.f32.mrb[0].mxu0
      %v1734 = vadd.f32 %v1024, %v1733
      %v1735 = vpop.f32.mrb[0].mxu0
      %v1736 = vadd.f32 %v1020, %v1735
      %v1737 = vpop.f32.mrb[0].mxu0
      %v1738 = vadd.f32 %v1024, %v1737
      %1739 = vmatprep.mubr.bf16.mxu0 %v880
      %1740 = vmatmul.mubr.bf16.gmra.mrb[0].mxu0 %v879
      %v1741 = vpop.f32.mrb[0].mxu0
      %v1742 = vadd.f32 %v1020, %v1741
      %v1743 = vpop.f32.mrb[0].mxu0
      %v1744 = vadd.f32 %v1024, %v1743
      %v1745 = vpop.f32.mrb[0].mxu0
      %v1746 = vadd.f32 %v1020, %v1745
      %v1747 = vpop.f32.mrb[0].mxu0
      %v1748 = vadd.f32 %v1024, %v1747
      %1749 = vmatprep.mubr.bf16.mxu0 %v884
      %1750 = vmatmul.mubr.bf16.gmra.mrb[0].mxu0 %v883
      %v1751 = vpop.f32.mrb[0].mxu0
      %v1752 = vadd.f32 %v1020, %v1751
      %v1753 = vpop.f32.mrb[0].mxu0
      %v1754 = vadd.f32 %v1024, %v1753
      %v1755 = vpop.f32.mrb[0].mxu0
      %v1756 = vadd.f32 %v1020, %v1755
      %v1757 = vpop.f32.mrb[0].mxu0
      %v1758 = vadd.f32 %v1024, %v1757
      %1759 = vdwg.mxu0
      %1760 = vmatprep.subr.bf16.mxu0 %v1486
      %1761 = vmatpush1.bf16.msra.mxu0 %v1485
      %1762 = vmatprep.subr.bf16.mxu0 %v1490
      %1763 = vmatpush1.bf16.msra.mxu0 %v1489
      %1764 = vmatprep.subr.bf16.mxu0 %v1494
      %1765 = vmatpush1.bf16.msra.mxu0 %v1493
      %1766 = vmatprep.subr.bf16.mxu0 %v1498
      %1767 = vmatpush1.bf16.msra.mxu0 %v1497
      %1768 = vmatprep.subr.bf16.mxu0 %v1502
      %1769 = vmatpush1.bf16.msra.mxu0 %v1501
      %1770 = vmatprep.subr.bf16.mxu0 %v1506
      %1771 = vmatpush1.bf16.msra.mxu0 %v1505
      %1772 = vmatprep.subr.bf16.mxu0 %v1510
      %1773 = vmatpush1.bf16.msra.mxu0 %v1509
      %1774 = vmatprep.subr.bf16.mxu0 %v1514
      %1775 = vmatpush1.bf16.msra.mxu0 %v1513
      %1776 = vmatprep.subr.bf16.mxu0 %v1518
      %1777 = vmatpush1.bf16.msra.mxu0 %v1517
      %1778 = vmatprep.subr.bf16.mxu0 %v1522
      %1779 = vmatpush1.bf16.msra.mxu0 %v1521
      %1780 = vmatprep.subr.bf16.mxu0 %v1526
      %1781 = vmatpush1.bf16.msra.mxu0 %v1525
      %1782 = vmatprep.subr.bf16.mxu0 %v1530
      %1783 = vmatpush1.bf16.msra.mxu0 %v1529
      %1784 = vmatprep.subr.bf16.mxu0 %v1534
      %1785 = vmatpush1.bf16.msra.mxu0 %v1533
      %1786 = vmatprep.subr.bf16.mxu0 %v1538
      %1787 = vmatpush1.bf16.msra.mxu0 %v1537
      %1788 = vmatprep.subr.bf16.mxu0 %v1542
      %1789 = vmatpush1.bf16.msra.mxu0 %v1541
      %1790 = vmatprep.subr.bf16.mxu0 %v1546
      %1791 = vmatpush1.bf16.msra.mxu0 %v1545
      %1792 = vmatprep.mubr.bf16.mxu0 %v870
      %1793 = vmatmul.mubr.bf16.gmra.mrb[0].mxu0 %v869
      %v1794 = vpop.f32.mrb[0].mxu0
      %v1795 = vadd.f32 %v1712, %v1794
      %v1796 = vpop.f32.mrb[0].mxu0
      %v1797 = vadd.f32 %v1714, %v1796
      %v1798 = vpop.f32.mrb[0].mxu0
      %v1799 = vadd.f32 %v1716, %v1798
      %v1800 = vpop.f32.mrb[0].mxu0
      %v1801 = vadd.f32 %v1718, %v1800
      %1802 = vmatprep.mubr.bf16.mxu0 %v874
      %1803 = vmatmul.mubr.bf16.gmra.mrb[0].mxu0 %v873
      %v1804 = vpop.f32.mrb[0].mxu0
      %v1805 = vadd.f32 %v1722, %v1804
      %v1806 = vpop.f32.mrb[0].mxu0
      %v1807 = vadd.f32 %v1724, %v1806
      %v1808 = vpop.f32.mrb[0].mxu0
      %v1809 = vadd.f32 %v1726, %v1808
      %v1810 = vpop.f32.mrb[0].mxu0
      %v1811 = vadd.f32 %v1728, %v1810
      %1812 = vmatprep.mubr.bf16.mxu0 %v878
      %1813 = vmatmul.mubr.bf16.gmra.mrb[0].mxu0 %v877
      %v1814 = vpop.f32.mrb[0].mxu0
      %v1815 = vadd.f32 %v1732, %v1814
      %v1816 = vpop.f32.mrb[0].mxu0
      %v1817 = vadd.f32 %v1734, %v1816
      %v1818 = vpop.f32.mrb[0].mxu0
      %v1819 = vadd.f32 %v1736, %v1818
      %v1820 = vpop.f32.mrb[0].mxu0
      %v1821 = vadd.f32 %v1738, %v1820
      %1822 = vmatprep.mubr.bf16.mxu0 %v882
      %1823 = vmatmul.mubr.bf16.gmra.mrb[0].mxu0 %v881
      %v1824 = vpop.f32.mrb[0].mxu0
      %v1825 = vadd.f32 %v1742, %v1824
      %v1826 = vpop.f32.mrb[0].mxu0
      %v1827 = vadd.f32 %v1744, %v1826
      %v1828 = vpop.f32.mrb[0].mxu0
      %v1829 = vadd.f32 %v1746, %v1828
      %v1830 = vpop.f32.mrb[0].mxu0
      %v1831 = vadd.f32 %v1748, %v1830
      %1832 = vmatprep.mubr.bf16.mxu0 %v886
      %1833 = vmatmul.mubr.bf16.gmra.mrb[0].mxu0 %v885
      %v1834 = vpop.f32.mrb[0].mxu0
      %v1835 = vadd.f32 %v1752, %v1834
      %v1836 = vpop.f32.mrb[0].mxu0
      %v1837 = vadd.f32 %v1754, %v1836
      %v1838 = vpop.f32.mrb[0].mxu0
      %v1839 = vadd.f32 %v1756, %v1838
      %v1840 = vpop.f32.mrb[0].mxu0
      %v1841 = vadd.f32 %v1758, %v1840
      %1842 = vdwg.mxu0
      %1843 = vmatprep.subr.bf16.mxu0 %v1424
      %1844 = vmatpush1.bf16.msra.mxu0 %v1423
      %1845 = vmatprep.subr.bf16.mxu0 %v1428
      %1846 = vmatpush1.bf16.msra.mxu0 %v1427
      %1847 = vmatprep.subr.bf16.mxu0 %v1432
      %1848 = vmatpush1.bf16.msra.mxu0 %v1431
      %1849 = vmatprep.subr.bf16.mxu0 %v1436
      %1850 = vmatpush1.bf16.msra.mxu0 %v1435
      %1851 = vmatprep.subr.bf16.mxu0 %v1440
      %1852 = vmatpush1.bf16.msra.mxu0 %v1439
      %1853 = vmatprep.subr.bf16.mxu0 %v1444
      %1854 = vmatpush1.bf16.msra.mxu0 %v1443
      %1855 = vmatprep.subr.bf16.mxu0 %v1448
      %1856 = vmatpush1.bf16.msra.mxu0 %v1447
      %1857 = vmatprep.subr.bf16.mxu0 %v1452
      %1858 = vmatpush1.bf16.msra.mxu0 %v1451
      %1859 = vmatprep.subr.bf16.mxu0 %v1456
      %1860 = vmatpush1.bf16.msra.mxu0 %v1455
      %1861 = vmatprep.subr.bf16.mxu0 %v1460
      %1862 = vmatpush1.bf16.msra.mxu0 %v1459
      %1863 = vmatprep.subr.bf16.mxu0 %v1464
      %1864 = vmatpush1.bf16.msra.mxu0 %v1463
      %1865 = vmatprep.subr.bf16.mxu0 %v1468
      %1866 = vmatpush1.bf16.msra.mxu0 %v1467
      %1867 = vmatprep.subr.bf16.mxu0 %v1472
      %1868 = vmatpush1.bf16.msra.mxu0 %v1471
      %1869 = vmatprep.subr.bf16.mxu0 %v1476
      %1870 = vmatpush1.bf16.msra.mxu0 %v1475
      %1871 = vmatprep.subr.bf16.mxu0 %v1480
      %1872 = vmatpush1.bf16.msra.mxu0 %v1479
      %1873 = vmatprep.subr.bf16.mxu0 %v1484
      %1874 = vmatpush1.bf16.msra.mxu0 %v1483
      %1875 = vmatprep.mubr.bf16.mxu0 %v868
      %1876 = vmatmul.mubr.bf16.gmra.mrb[0].mxu0 %v867
      %v1877 = vpop.f32.mrb[0].mxu0
      %v1878 = vadd.f32 %v1028, %v1877
      %v1879 = vpop.f32.mrb[0].mxu0
      %v1880 = vadd.f32 %v1032, %v1879
      %v1881 = vpop.f32.mrb[0].mxu0
      %v1882 = vadd.f32 %v1028, %v1881
      %v1883 = vpop.f32.mrb[0].mxu0
      %v1884 = vadd.f32 %v1032, %v1883
      %1885 = vmatprep.mubr.bf16.mxu0 %v872
      %1886 = vmatmul.mubr.bf16.gmra.mrb[0].mxu0 %v871
      %v1887 = vpop.f32.mrb[0].mxu0
      %v1888 = vadd.f32 %v1028, %v1887
      %v1889 = vpop.f32.mrb[0].mxu0
      %v1890 = vadd.f32 %v1032, %v1889
      %v1891 = vpop.f32.mrb[0].mxu0
      %v1892 = vadd.f32 %v1028, %v1891
      %v1893 = vpop.f32.mrb[0].mxu0
      %v1894 = vadd.f32 %v1032, %v1893
      %1895 = vmatprep.mubr.bf16.mxu0 %v876
      %1896 = vmatmul.mubr.bf16.gmra.mrb[0].mxu0 %v875
      %v1897 = vpop.f32.mrb[0].mxu0
      %v1898 = vadd.f32 %v1028, %v1897
      %v1899 = vpop.f32.mrb[0].mxu0
      %v1900 = vadd.f32 %v1032, %v1899
      %v1901 = vpop.f32.mrb[0].mxu0
      %v1902 = vadd.f32 %v1028, %v1901
      %v1903 = vpop.f32.mrb[0].mxu0
      %v1904 = vadd.f32 %v1032, %v1903
      %1905 = vmatprep.mubr.bf16.mxu0 %v880
      %1906 = vmatmul.mubr.bf16.gmra.mrb[0].mxu0 %v879
      %v1907 = vpop.f32.mrb[0].mxu0
      %v1908 = vadd.f32 %v1028, %v1907
      %v1909 = vpop.f32.mrb[0].mxu0
      %v1910 = vadd.f32 %v1032, %v1909
      %v1911 = vpop.f32.mrb[0].mxu0
      %v1912 = vadd.f32 %v1028, %v1911
      %v1913 = vpop.f32.mrb[0].mxu0
      %v1914 = vadd.f32 %v1032, %v1913
      %1915 = vmatprep.mubr.bf16.mxu0 %v884
      %1916 = vmatmul.mubr.bf16.gmra.mrb[0].mxu0 %v883
      %v1917 = vpop.f32.mrb[0].mxu0
      %v1918 = vadd.f32 %v1028, %v1917
      %v1919 = vpop.f32.mrb[0].mxu0
      %v1920 = vadd.f32 %v1032, %v1919
      %v1921 = vpop.f32.mrb[0].mxu0
      %v1922 = vadd.f32 %v1028, %v1921
      %v1923 = vpop.f32.mrb[0].mxu0
      %v1924 = vadd.f32 %v1032, %v1923
      %1925 = vdwg.mxu0
      %1926 = vmatprep.subr.bf16.mxu0 %v1488
      %1927 = vmatpush1.bf16.msra.mxu0 %v1487
      %1928 = vmatprep.subr.bf16.mxu0 %v1492
      %1929 = vmatpush1.bf16.msra.mxu0 %v1491
      %1930 = vmatprep.subr.bf16.mxu0 %v1496
      %1931 = vmatpush1.bf16.msra.mxu0 %v1495
      %1932 = vmatprep.subr.bf16.mxu0 %v1500
      %1933 = vmatpush1.bf16.msra.mxu0 %v1499
      %1934 = vmatprep.subr.bf16.mxu0 %v1504
      %1935 = vmatpush1.bf16.msra.mxu0 %v1503
      %1936 = vmatprep.subr.bf16.mxu0 %v1508
      %1937 = vmatpush1.bf16.msra.mxu0 %v1507
      %1938 = vmatprep.subr.bf16.mxu0 %v1512
      %1939 = vmatpush1.bf16.msra.mxu0 %v1511
      %1940 = vmatprep.subr.bf16.mxu0 %v1516
      %1941 = vmatpush1.bf16.msra.mxu0 %v1515
      %1942 = vmatprep.subr.bf16.mxu0 %v1520
      %1943 = vmatpush1.bf16.msra.mxu0 %v1519
      %1944 = vmatprep.subr.bf16.mxu0 %v1524
      %1945 = vmatpush1.bf16.msra.mxu0 %v1523
      %1946 = vmatprep.subr.bf16.mxu0 %v1528
      %1947 = vmatpush1.bf16.msra.mxu0 %v1527
      %1948 = vmatprep.subr.bf16.mxu0 %v1532
      %1949 = vmatpush1.bf16.msra.mxu0 %v1531
      %1950 = vmatprep.subr.bf16.mxu0 %v1536
      %1951 = vmatpush1.bf16.msra.mxu0 %v1535
      %1952 = vmatprep.subr.bf16.mxu0 %v1540
      %1953 = vmatpush1.bf16.msra.mxu0 %v1539
      %1954 = vmatprep.subr.bf16.mxu0 %v1544
      %1955 = vmatpush1.bf16.msra.mxu0 %v1543
      %1956 = vmatprep.subr.bf16.mxu0 %v1548
      %1957 = vmatpush1.bf16.msra.mxu0 %v1547
      %1958 = vmatprep.mubr.bf16.mxu0 %v870
      %1959 = vmatmul.mubr.bf16.gmra.mrb[0].mxu0 %v869
      %v1960 = vpop.f32.mrb[0].mxu0
      %v1961 = vadd.f32 %v1878, %v1960
      %v1962 = vpop.f32.mrb[0].mxu0
      %v1963 = vadd.f32 %v1880, %v1962
      %v1964 = vpop.f32.mrb[0].mxu0
      %v1965 = vadd.f32 %v1882, %v1964
      %v1966 = vpop.f32.mrb[0].mxu0
      %v1967 = vadd.f32 %v1884, %v1966
      %1968 = vmatprep.mubr.bf16.mxu0 %v874
      %1969 = vmatmul.mubr.bf16.gmra.mrb[0].mxu0 %v873
      %v1970 = vpop.f32.mrb[0].mxu0
      %v1971 = vadd.f32 %v1888, %v1970
      %v1972 = vpop.f32.mrb[0].mxu0
      %v1973 = vadd.f32 %v1890, %v1972
      %v1974 = vpop.f32.mrb[0].mxu0
      %v1975 = vadd.f32 %v1892, %v1974
      %v1976 = vpop.f32.mrb[0].mxu0
      %v1977 = vadd.f32 %v1894, %v1976
      %1978 = vmatprep.mubr.bf16.mxu0 %v878
      %1979 = vmatmul.mubr.bf16.gmra.mrb[0].mxu0 %v877
      %v1980 = vpop.f32.mrb[0].mxu0
      %v1981 = vadd.f32 %v1898, %v1980
      %v1982 = vpop.f32.mrb[0].mxu0
      %v1983 = vadd.f32 %v1900, %v1982
      %v1984 = vpop.f32.mrb[0].mxu0
      %v1985 = vadd.f32 %v1902, %v1984
      %v1986 = vpop.f32.mrb[0].mxu0
      %v1987 = vadd.f32 %v1904, %v1986
      %1988 = vmatprep.mubr.bf16.mxu0 %v882
      %1989 = vmatmul.mubr.bf16.gmra.mrb[0].mxu0 %v881
      %v1990 = vpop.f32.mrb[0].mxu0
      %v1991 = vadd.f32 %v1908, %v1990
      %v1992 = vpop.f32.mrb[0].mxu0
      %v1993 = vadd.f32 %v1910, %v1992
      %v1994 = vpop.f32.mrb[0].mxu0
      %v1995 = vadd.f32 %v1912, %v1994
      %v1996 = vpop.f32.mrb[0].mxu0
      %v1997 = vadd.f32 %v1914, %v1996
      %1998 = vmatprep.mubr.bf16.mxu0 %v886
      %1999 = vmatmul.mubr.bf16.gmra.mrb[0].mxu0 %v885
      %v2000 = vpop.f32.mrb[0].mxu0
      %v2001 = vadd.f32 %v1918, %v2000
      %v2002 = vpop.f32.mrb[0].mxu0
      %v2003 = vadd.f32 %v1920, %v2002
      %v2004 = vpop.f32.mrb[0].mxu0
      %v2005 = vadd.f32 %v1922, %v2004
      %v2006 = vpop.f32.mrb[0].mxu0
      %v2007 = vadd.f32 %v1924, %v2006
      %2008 = vdwg.mxu0
      %v2009 = vadd.f32 %v1795, %v1797
      %v2010 = vadd.f32 %v2009, %v1961
      %v2011 = vadd.f32 %v2010, %v1963
      %2012 = vadd.xlane.f32.xlu0 %v2011
      %v2013 = vpop.xlane.xlu0 %2012
      %v2014 = vadd.f32 %v1799, %v1801
      %v2015 = vadd.f32 %v2014, %v1965
      %v2016 = vadd.f32 %v2015, %v1967
      %2017 = vadd.xlane.f32.xlu0 %v2016
      %v2018 = vpop.xlane.xlu0 %2017
      %v2019 = vadd.f32 %v1805, %v1807
      %v2020 = vadd.f32 %v2019, %v1971
      %v2021 = vadd.f32 %v2020, %v1973
      %2022 = vadd.xlane.f32.xlu0 %v2021
      %v2023 = vpop.xlane.xlu0 %2022
      %v2024 = vadd.f32 %v1809, %v1811
      %v2025 = vadd.f32 %v2024, %v1975
      %v2026 = vadd.f32 %v2025, %v1977
      %2027 = vadd.xlane.f32.xlu0 %v2026
      %v2028 = vpop.xlane.xlu0 %2027
      %v2029 = vadd.f32 %v1815, %v1817
      %v2030 = vadd.f32 %v2029, %v1981
      %v2031 = vadd.f32 %v2030, %v1983
      %2032 = vadd.xlane.f32.xlu0 %v2031
      %v2033 = vpop.xlane.xlu0 %2032
      %v2034 = vadd.f32 %v1819, %v1821
      %v2035 = vadd.f32 %v2034, %v1985
      %v2036 = vadd.f32 %v2035, %v1987
      %2037 = vadd.xlane.f32.xlu0 %v2036
      %v2038 = vpop.xlane.xlu0 %2037
      %v2039 = vadd.f32 %v1825, %v1827
      %v2040 = vadd.f32 %v2039, %v1991
      %v2041 = vadd.f32 %v2040, %v1993
      %2042 = vadd.xlane.f32.xlu0 %v2041
      %v2043 = vpop.xlane.xlu0 %2042
      %v2044 = vadd.f32 %v1829, %v1831
      %v2045 = vadd.f32 %v2044, %v1995
      %v2046 = vadd.f32 %v2045, %v1997
      %2047 = vadd.xlane.f32.xlu0 %v2046
      %v2048 = vpop.xlane.xlu0 %2047
      %v2049 = vadd.f32 %v1835, %v1837
      %v2050 = vadd.f32 %v2049, %v2001
      %v2051 = vadd.f32 %v2050, %v2003
      %2052 = vadd.xlane.f32.xlu0 %v2051
      %v2053 = vpop.xlane.xlu0 %2052
      %v2054 = vadd.f32 %v1839, %v1841
      %v2055 = vadd.f32 %v2054, %v2005
      %v2056 = vadd.f32 %v2055, %v2007
      %2057 = vadd.xlane.f32.xlu0 %v2056
      %v2058 = vpop.xlane.xlu0 %2057
      %v2059 = vmul.f32 %v2013, 0.001953125
      %v2060 = vmul.f32 %v2018, 0.001953125
      %v2061 = vmul.f32 %v2023, 0.001953125
      %v2062 = vmul.f32 %v2028, 0.001953125
      %v2063 = vmul.f32 %v2033, 0.001953125
      %v2064 = vmul.f32 %v2038, 0.001953125
      %v2065 = vmul.f32 %v2043, 0.001953125
      %v2066 = vmul.f32 %v2048, 0.001953125
      %v2067 = vmul.f32 %v2053, 0.001953125
      %v2068 = vmul.f32 %v2058, 0.001953125
      %v2069 = vsub.f32 %v1795, %v2059
      %v2070 = vsub.f32 %v1797, %v2059
      %v2071 = vsub.f32 %v1961, %v2059
      %v2072 = vsub.f32 %v1963, %v2059
      %v2073 = vsub.f32 %v1799, %v2060
      %v2074 = vsub.f32 %v1801, %v2060
      %v2075 = vsub.f32 %v1965, %v2060
      %v2076 = vsub.f32 %v1967, %v2060
      %v2077 = vsub.f32 %v1805, %v2061
      %v2078 = vsub.f32 %v1807, %v2061
      %v2079 = vsub.f32 %v1971, %v2061
      %v2080 = vsub.f32 %v1973, %v2061
      %v2081 = vsub.f32 %v1809, %v2062
      %v2082 = vsub.f32 %v1811, %v2062
      %v2083 = vsub.f32 %v1975, %v2062
      %v2084 = vsub.f32 %v1977, %v2062
      %v2085 = vsub.f32 %v1815, %v2063
      %v2086 = vsub.f32 %v1817, %v2063
      %v2087 = vsub.f32 %v1981, %v2063
      %v2088 = vsub.f32 %v1983, %v2063
      %v2089 = vsub.f32 %v1819, %v2064
      %v2090 = vsub.f32 %v1821, %v2064
      %v2091 = vsub.f32 %v1985, %v2064
      %v2092 = vsub.f32 %v1987, %v2064
      %v2093 = vsub.f32 %v1825, %v2065
      %v2094 = vsub.f32 %v1827, %v2065
      %v2095 = vsub.f32 %v1991, %v2065
      %v2096 = vsub.f32 %v1993, %v2065
      %v2097 = vsub.f32 %v1829, %v2066
      %v2098 = vsub.f32 %v1831, %v2066
      %v2099 = vsub.f32 %v1995, %v2066
      %v2100 = vsub.f32 %v1997, %v2066
      %v2101 = vsub.f32 %v1835, %v2067
      %v2102 = vsub.f32 %v1837, %v2067
      %v2103 = vsub.f32 %v2001, %v2067
      %v2104 = vsub.f32 %v2003, %v2067
      %v2105 = vsub.f32 %v1839, %v2068
      %v2106 = vsub.f32 %v1841, %v2068
      %v2107 = vsub.f32 %v2005, %v2068
      %v2108 = vsub.f32 %v2007, %v2068
      %v2109 = vmul.f32 %v2069, %v2069
      %v2110 = vmul.f32 %v2070, %v2070
      %v2111 = vmul.f32 %v2071, %v2071
      %v2112 = vmul.f32 %v2072, %v2072
      %v2113 = vmul.f32 %v2073, %v2073
      %v2114 = vmul.f32 %v2074, %v2074
      %v2115 = vmul.f32 %v2075, %v2075
      %v2116 = vmul.f32 %v2076, %v2076
      %v2117 = vmul.f32 %v2077, %v2077
      %v2118 = vmul.f32 %v2078, %v2078
      %v2119 = vmul.f32 %v2079, %v2079
      %v2120 = vmul.f32 %v2080, %v2080
      %v2121 = vmul.f32 %v2081, %v2081
      %v2122 = vmul.f32 %v2082, %v2082
      %v2123 = vmul.f32 %v2083, %v2083
      %v2124 = vmul.f32 %v2084, %v2084
      %v2125 = vmul.f32 %v2085, %v2085
      %v2126 = vmul.f32 %v2086, %v2086
      %v2127 = vmul.f32 %v2087, %v2087
      %v2128 = vmul.f32 %v2088, %v2088
      %v2129 = vmul.f32 %v2089, %v2089
      %v2130 = vmul.f32 %v2090, %v2090
      %v2131 = vmul.f32 %v2091, %v2091
      %v2132 = vmul.f32 %v2092, %v2092
      %v2133 = vmul.f32 %v2093, %v2093
      %v2134 = vmul.f32 %v2094, %v2094
      %v2135 = vmul.f32 %v2095, %v2095
      %v2136 = vmul.f32 %v2096, %v2096
      %v2137 = vmul.f32 %v2097, %v2097
      %v2138 = vmul.f32 %v2098, %v2098
      %v2139 = vmul.f32 %v2099, %v2099
      %v2140 = vmul.f32 %v2100, %v2100
      %v2141 = vmul.f32 %v2101, %v2101
      %v2142 = vmul.f32 %v2102, %v2102
      %v2143 = vmul.f32 %v2103, %v2103
      %v2144 = vmul.f32 %v2104, %v2104
      %v2145 = vmul.f32 %v2105, %v2105
      %v2146 = vmul.f32 %v2106, %v2106
      %v2147 = vmul.f32 %v2107, %v2107
      %v2148 = vmul.f32 %v2108, %v2108
      %v2149 = vadd.f32 %v2109, %v2110
      %v2150 = vadd.f32 %v2149, %v2111
      %v2151 = vadd.f32 %v2150, %v2112
      %2152 = vadd.xlane.f32.xlu0 %v2151
      %v2153 = vpop.xlane.xlu0 %2152
      %v2154 = vadd.f32 %v2113, %v2114
      %v2155 = vadd.f32 %v2154, %v2115
      %v2156 = vadd.f32 %v2155, %v2116
      %2157 = vadd.xlane.f32.xlu0 %v2156
      %v2158 = vpop.xlane.xlu0 %2157
      %v2159 = vadd.f32 %v2117, %v2118
      %v2160 = vadd.f32 %v2159, %v2119
      %v2161 = vadd.f32 %v2160, %v2120
      %2162 = vadd.xlane.f32.xlu0 %v2161
      %v2163 = vpop.xlane.xlu0 %2162
      %v2164 = vadd.f32 %v2121, %v2122
      %v2165 = vadd.f32 %v2164, %v2123
      %v2166 = vadd.f32 %v2165, %v2124
      %2167 = vadd.xlane.f32.xlu0 %v2166
      %v2168 = vpop.xlane.xlu0 %2167
      %v2169 = vadd.f32 %v2125, %v2126
      %v2170 = vadd.f32 %v2169, %v2127
      %v2171 = vadd.f32 %v2170, %v2128
      %2172 = vadd.xlane.f32.xlu0 %v2171
      %v2173 = vpop.xlane.xlu0 %2172
      %v2174 = vadd.f32 %v2129, %v2130
      %v2175 = vadd.f32 %v2174, %v2131
      %v2176 = vadd.f32 %v2175, %v2132
      %2177 = vadd.xlane.f32.xlu0 %v2176
      %v2178 = vpop.xlane.xlu0 %2177
      %v2179 = vadd.f32 %v2133, %v2134
      %v2180 = vadd.f32 %v2179, %v2135
      %v2181 = vadd.f32 %v2180, %v2136
      %2182 = vadd.xlane.f32.xlu0 %v2181
      %v2183 = vpop.xlane.xlu0 %2182
      %v2184 = vadd.f32 %v2137, %v2138
      %v2185 = vadd.f32 %v2184, %v2139
      %v2186 = vadd.f32 %v2185, %v2140
      %2187 = vadd.xlane.f32.xlu0 %v2186
      %v2188 = vpop.xlane.xlu0 %2187
      %v2189 = vadd.f32 %v2141, %v2142
      %v2190 = vadd.f32 %v2189, %v2143
      %v2191 = vadd.f32 %v2190, %v2144
      %2192 = vadd.xlane.f32.xlu0 %v2191
      %v2193 = vpop.xlane.xlu0 %2192
      %v2194 = vadd.f32 %v2145, %v2146
      %v2195 = vadd.f32 %v2194, %v2147
      %v2196 = vadd.f32 %v2195, %v2148
      %2197 = vadd.xlane.f32.xlu0 %v2196
      %v2198 = vpop.xlane.xlu0 %2197
      %v2199 = vmul.f32 %v2153, 0.001953125
      %v2200 = vmul.f32 %v2158, 0.001953125
      %v2201 = vmul.f32 %v2163, 0.001953125
      %v2202 = vmul.f32 %v2168, 0.001953125
      %v2203 = vmul.f32 %v2173, 0.001953125
      %v2204 = vmul.f32 %v2178, 0.001953125
      %v2205 = vmul.f32 %v2183, 0.001953125
      %v2206 = vmul.f32 %v2188, 0.001953125
      %v2207 = vmul.f32 %v2193, 0.001953125
      %v2208 = vmul.f32 %v2198, 0.001953125
      %v2209 = vadd.f32 %v2199, 1e-05
      %v2210 = vadd.f32 %v2200, 1e-05
      %v2211 = vadd.f32 %v2201, 1e-05
      %v2212 = vadd.f32 %v2202, 1e-05
      %v2213 = vadd.f32 %v2203, 1e-05
      %v2214 = vadd.f32 %v2204, 1e-05
      %v2215 = vadd.f32 %v2205, 1e-05
      %v2216 = vadd.f32 %v2206, 1e-05
      %v2217 = vadd.f32 %v2207, 1e-05
      %v2218 = vadd.f32 %v2208, 1e-05
      %v2219 = vrsqrt.pop %v2209
      %v2220 = vrsqrt.pop %v2210
      %v2221 = vrsqrt.pop %v2211
      %v2222 = vrsqrt.pop %v2212
      %v2223 = vrsqrt.pop %v2213
      %v2224 = vrsqrt.pop %v2214
      %v2225 = vrsqrt.pop %v2215
      %v2226 = vrsqrt.pop %v2216
      %v2227 = vrsqrt.pop %v2217
      %v2228 = vrsqrt.pop %v2218
      %v2229 = vmul.f32 %v2069, %v2219
      %v2230 = vmul.f32 %v2070, %v2219
      %v2231 = vmul.f32 %v2071, %v2219
      %v2232 = vmul.f32 %v2072, %v2219
      %v2233 = vmul.f32 %v2073, %v2220
      %v2234 = vmul.f32 %v2074, %v2220
      %v2235 = vmul.f32 %v2075, %v2220
      %v2236 = vmul.f32 %v2076, %v2220
      %v2237 = vmul.f32 %v2077, %v2221
      %v2238 = vmul.f32 %v2078, %v2221
      %v2239 = vmul.f32 %v2079, %v2221
      %v2240 = vmul.f32 %v2080, %v2221
      %v2241 = vmul.f32 %v2081, %v2222
      %v2242 = vmul.f32 %v2082, %v2222
      %v2243 = vmul.f32 %v2083, %v2222
      %v2244 = vmul.f32 %v2084, %v2222
      %v2245 = vmul.f32 %v2085, %v2223
      %v2246 = vmul.f32 %v2086, %v2223
      %v2247 = vmul.f32 %v2087, %v2223
      %v2248 = vmul.f32 %v2088, %v2223
      %v2249 = vmul.f32 %v2089, %v2224
      %v2250 = vmul.f32 %v2090, %v2224
      %v2251 = vmul.f32 %v2091, %v2224
      %v2252 = vmul.f32 %v2092, %v2224
      %v2253 = vmul.f32 %v2093, %v2225
      %v2254 = vmul.f32 %v2094, %v2225
      %v2255 = vmul.f32 %v2095, %v2225
      %v2256 = vmul.f32 %v2096, %v2225
      %v2257 = vmul.f32 %v2097, %v2226
      %v2258 = vmul.f32 %v2098, %v2226
      %v2259 = vmul.f32 %v2099, %v2226
      %v2260 = vmul.f32 %v2100, %v2226
      %v2261 = vmul.f32 %v2101, %v2227
      %v2262 = vmul.f32 %v2102, %v2227
      %v2263 = vmul.f32 %v2103, %v2227
      %v2264 = vmul.f32 %v2104, %v2227
      %v2265 = vmul.f32 %v2105, %v2228
      %v2266 = vmul.f32 %v2106, %v2228
      %v2267 = vmul.f32 %v2107, %v2228
      %v2268 = vmul.f32 %v2108, %v2228
      %v2269 = vld [vmem:[%s426] sm:$0xf]
      %v2271 = vlaneseq
      %v2272 = vshrl.u32 %v2271, 7
      %v2273 = vsub.s32 0, %v2272
      %v2274 = vrot.slane %v2269, %v2273
      %v2275 = vlaneseq
      %v2276 = vshrl.u32 %v2275, 7
      %v2277 = vsub.s32 1, %v2276
      %v2278 = vrot.slane %v2269, %v2277
      %v2279 = vlaneseq
      %v2280 = vshrl.u32 %v2279, 7
      %v2281 = vsub.s32 2, %v2280
      %v2282 = vrot.slane %v2269, %v2281
      %v2283 = vlaneseq
      %v2284 = vshrl.u32 %v2283, 7
      %v2285 = vsub.s32 3, %v2284
      %v2286 = vrot.slane %v2269, %v2285
      %v2291 = vmul.f32 %v2229, %v2274
      %v2292 = vmul.f32 %v2230, %v2278
      %v2293 = vmul.f32 %v2231, %v2282
      %v2294 = vmul.f32 %v2232, %v2286
      %v2295 = vmul.f32 %v2233, %v2274
      %v2296 = vmul.f32 %v2234, %v2278
      %v2297 = vmul.f32 %v2235, %v2282
      %v2298 = vmul.f32 %v2236, %v2286
      %v2299 = vmul.f32 %v2237, %v2274
      %v2300 = vmul.f32 %v2238, %v2278
      %v2301 = vmul.f32 %v2239, %v2282
      %v2302 = vmul.f32 %v2240, %v2286
      %v2303 = vmul.f32 %v2241, %v2274
      %v2304 = vmul.f32 %v2242, %v2278
      %v2305 = vmul.f32 %v2243, %v2282
      %v2306 = vmul.f32 %v2244, %v2286
      %v2307 = vmul.f32 %v2245, %v2274
      %v2308 = vmul.f32 %v2246, %v2278
      %v2309 = vmul.f32 %v2247, %v2282
      %v2310 = vmul.f32 %v2248, %v2286
      %v2311 = vmul.f32 %v2249, %v2274
      %v2312 = vmul.f32 %v2250, %v2278
      %v2313 = vmul.f32 %v2251, %v2282
      %v2314 = vmul.f32 %v2252, %v2286
      %v2315 = vmul.f32 %v2253, %v2274
      %v2316 = vmul.f32 %v2254, %v2278
      %v2317 = vmul.f32 %v2255, %v2282
      %v2318 = vmul.f32 %v2256, %v2286
      %v2319 = vmul.f32 %v2257, %v2274
      %v2320 = vmul.f32 %v2258, %v2278
      %v2321 = vmul.f32 %v2259, %v2282
      %v2322 = vmul.f32 %v2260, %v2286
      %v2323 = vmul.f32 %v2261, %v2274
      %v2324 = vmul.f32 %v2262, %v2278
      %v2325 = vmul.f32 %v2263, %v2282
      %v2326 = vmul.f32 %v2264, %v2286
      %v2327 = vmul.f32 %v2265, %v2274
      %v2328 = vmul.f32 %v2266, %v2278
      %v2329 = vmul.f32 %v2267, %v2282
      %v2330 = vmul.f32 %v2268, %v2286
      %v2331 = vld [vmem:[%s432] sm:$0xf]
      %v2333 = vlaneseq
      %v2334 = vshrl.u32 %v2333, 7
      %v2335 = vsub.s32 0, %v2334
      %v2336 = vrot.slane %v2331, %v2335
      %v2337 = vlaneseq
      %v2338 = vshrl.u32 %v2337, 7
      %v2339 = vsub.s32 1, %v2338
      %v2340 = vrot.slane %v2331, %v2339
      %v2341 = vlaneseq
      %v2342 = vshrl.u32 %v2341, 7
      %v2343 = vsub.s32 2, %v2342
      %v2344 = vrot.slane %v2331, %v2343
      %v2345 = vlaneseq
      %v2346 = vshrl.u32 %v2345, 7
      %v2347 = vsub.s32 3, %v2346
      %v2348 = vrot.slane %v2331, %v2347
      %v2353 = vadd.f32 %v2291, %v2336
      %v2354 = vadd.f32 %v2292, %v2340
      %v2355 = vadd.f32 %v2293, %v2344
      %v2356 = vadd.f32 %v2294, %v2348
      %v2357 = vadd.f32 %v2295, %v2336
      %v2358 = vadd.f32 %v2296, %v2340
      %v2359 = vadd.f32 %v2297, %v2344
      %v2360 = vadd.f32 %v2298, %v2348
      %v2361 = vadd.f32 %v2299, %v2336
      %v2362 = vadd.f32 %v2300, %v2340
      %v2363 = vadd.f32 %v2301, %v2344
      %v2364 = vadd.f32 %v2302, %v2348
      %v2365 = vadd.f32 %v2303, %v2336
      %v2366 = vadd.f32 %v2304, %v2340
      %v2367 = vadd.f32 %v2305, %v2344
      %v2368 = vadd.f32 %v2306, %v2348
      %v2369 = vadd.f32 %v2307, %v2336
      %v2370 = vadd.f32 %v2308, %v2340
      %v2371 = vadd.f32 %v2309, %v2344
      %v2372 = vadd.f32 %v2310, %v2348
      %v2373 = vadd.f32 %v2311, %v2336
      %v2374 = vadd.f32 %v2312, %v2340
      %v2375 = vadd.f32 %v2313, %v2344
      %v2376 = vadd.f32 %v2314, %v2348
      %v2377 = vadd.f32 %v2315, %v2336
      %v2378 = vadd.f32 %v2316, %v2340
      %v2379 = vadd.f32 %v2317, %v2344
      %v2380 = vadd.f32 %v2318, %v2348
      %v2381 = vadd.f32 %v2319, %v2336
      %v2382 = vadd.f32 %v2320, %v2340
      %v2383 = vadd.f32 %v2321, %v2344
      %v2384 = vadd.f32 %v2322, %v2348
      %v2385 = vadd.f32 %v2323, %v2336
      %v2386 = vadd.f32 %v2324, %v2340
      %v2387 = vadd.f32 %v2325, %v2344
      %v2388 = vadd.f32 %v2326, %v2348
      %v2389 = vadd.f32 %v2327, %v2336
      %v2390 = vadd.f32 %v2328, %v2340
      %v2391 = vadd.f32 %v2329, %v2344
      %v2392 = vadd.f32 %v2330, %v2348
      %v2393 = vpack.c.bf16 %v2357, %v2353
      %v2394 = vpack.c.bf16 %v2358, %v2354
      %v2395 = vpack.c.bf16 %v2359, %v2355
      %v2396 = vpack.c.bf16 %v2360, %v2356
      %v2397 = vpack.c.bf16 %v2365, %v2361
      %v2398 = vpack.c.bf16 %v2366, %v2362
      %v2399 = vpack.c.bf16 %v2367, %v2363
      %v2400 = vpack.c.bf16 %v2368, %v2364
      %v2401 = vpack.c.bf16 %v2373, %v2369
      %v2402 = vpack.c.bf16 %v2374, %v2370
      %v2403 = vpack.c.bf16 %v2375, %v2371
      %v2404 = vpack.c.bf16 %v2376, %v2372
      %v2405 = vpack.c.bf16 %v2381, %v2377
      %v2406 = vpack.c.bf16 %v2382, %v2378
      %v2407 = vpack.c.bf16 %v2383, %v2379
      %v2408 = vpack.c.bf16 %v2384, %v2380
      %v2409 = vpack.c.bf16 %v2389, %v2385
      %v2410 = vpack.c.bf16 %v2390, %v2386
      %v2411 = vpack.c.bf16 %v2391, %v2387
      %v2412 = vpack.c.bf16 %v2392, %v2388
      %v2433 = vunpack.c.l.b16 %v2393
      %v2434 = vunpack.c.l.b16 %v2394
      %v2435 = vunpack.c.l.b16 %v2395
      %v2436 = vunpack.c.l.b16 %v2396
      %v2437 = vunpack.c.h.b16 %v2393
      %v2438 = vunpack.c.h.b16 %v2394
      %v2439 = vunpack.c.h.b16 %v2395
      %v2440 = vunpack.c.h.b16 %v2396
      %v2441 = vunpack.c.l.b16 %v2397
      %v2442 = vunpack.c.l.b16 %v2398
      %v2443 = vunpack.c.l.b16 %v2399
      %v2444 = vunpack.c.l.b16 %v2400
      %v2445 = vunpack.c.h.b16 %v2397
      %v2446 = vunpack.c.h.b16 %v2398
      %v2447 = vunpack.c.h.b16 %v2399
      %v2448 = vunpack.c.h.b16 %v2400
      %v2449 = vunpack.c.l.b16 %v2401
      %v2450 = vunpack.c.l.b16 %v2402
      %v2451 = vunpack.c.l.b16 %v2403
      %v2452 = vunpack.c.l.b16 %v2404
      %v2453 = vunpack.c.h.b16 %v2401
      %v2454 = vunpack.c.h.b16 %v2402
      %v2455 = vunpack.c.h.b16 %v2403
      %v2456 = vunpack.c.h.b16 %v2404
      %v2457 = vunpack.c.l.b16 %v2405
      %v2458 = vunpack.c.l.b16 %v2406
      %v2459 = vunpack.c.l.b16 %v2407
      %v2460 = vunpack.c.l.b16 %v2408
      %v2461 = vunpack.c.h.b16 %v2405
      %v2462 = vunpack.c.h.b16 %v2406
      %v2463 = vunpack.c.h.b16 %v2407
      %v2464 = vunpack.c.h.b16 %v2408
      %v2465 = vunpack.c.l.b16 %v2409
      %v2466 = vunpack.c.l.b16 %v2410
      %v2467 = vunpack.c.l.b16 %v2411
      %v2468 = vunpack.c.l.b16 %v2412
      %v2469 = vunpack.c.h.b16 %v2409
      %v2470 = vunpack.c.h.b16 %v2410
      %v2471 = vunpack.c.h.b16 %v2411
      %v2472 = vunpack.c.h.b16 %v2412
      %v2473 = vpack.c.b16 %v2434, %v2433
      %v2474 = vpack.c.b16 %v2436, %v2435
      %v2475 = vpack.c.b16 %v2438, %v2437
      %v2476 = vpack.c.b16 %v2440, %v2439
      %v2477 = vpack.c.b16 %v2442, %v2441
      %v2478 = vpack.c.b16 %v2444, %v2443
      %v2479 = vpack.c.b16 %v2446, %v2445
      %v2480 = vpack.c.b16 %v2448, %v2447
      %v2481 = vpack.c.b16 %v2450, %v2449
      %v2482 = vpack.c.b16 %v2452, %v2451
      %v2483 = vpack.c.b16 %v2454, %v2453
      %v2484 = vpack.c.b16 %v2456, %v2455
      %v2485 = vpack.c.b16 %v2458, %v2457
      %v2486 = vpack.c.b16 %v2460, %v2459
      %v2487 = vpack.c.b16 %v2462, %v2461
      %v2488 = vpack.c.b16 %v2464, %v2463
      %v2489 = vpack.c.b16 %v2466, %v2465
      %v2490 = vpack.c.b16 %v2468, %v2467
      %v2491 = vpack.c.b16 %v2470, %v2469
      %v2492 = vpack.c.b16 %v2472, %v2471
      %2513 = vst [vmem:[%s439] sm:$0xff] %v2473
      %2514 = vst [vmem:[%s439 + $0x8] sm:$0xff] %v2474
      %2515 = vst [vmem:[%s439 + $0x10] sm:$0xff] %v2475
      %2516 = vst [vmem:[%s439 + $0x18] sm:$0xff] %v2476
      %2517 = vst [vmem:[%s439 + $0x20] sm:$0xff] %v2477
      %2518 = vst [vmem:[%s439 + $0x28] sm:$0xff] %v2478
      %2519 = vst [vmem:[%s439 + $0x30] sm:$0xff] %v2479
      %2520 = vst [vmem:[%s439 + $0x38] sm:$0xff] %v2480
      %2521 = vst [vmem:[%s439 + $0x40] sm:$0xff] %v2481
      %2522 = vst [vmem:[%s439 + $0x48] sm:$0xff] %v2482
      %2523 = vst [vmem:[%s439 + $0x50] sm:$0xff] %v2483
      %2524 = vst [vmem:[%s439 + $0x58] sm:$0xff] %v2484
      %2525 = vst [vmem:[%s439 + $0x60] sm:$0xff] %v2485
      %2526 = vst [vmem:[%s439 + $0x68] sm:$0xff] %v2486
      %2527 = vst [vmem:[%s439 + $0x70] sm:$0xff] %v2487
      %2528 = vst [vmem:[%s439 + $0x78] sm:$0xff] %v2488
      %2529 = vst [vmem:[%s439 + $0x80] sm:$0xff] %v2489
      %2530 = vst [vmem:[%s439 + $0x88] sm:$0xff] %v2490
      %2531 = vst [vmem:[%s439 + $0x90] sm:$0xff] %v2491
      %2532 = vst [vmem:[%s439 + $0x98] sm:$0xff] %v2492
      %s2533 = smul.u32 10, %s25
      %p2534 = scmp.lt.s32.totalorder %s2533, 29
      %s2535 = scalar_select %p2534, %s2533, 29
      %s2536 = smul.addr %s2535, 4
      %s2537 = smul.addr %s2536, 4
      %s2538 = scalar_lea.vmem %s8, %s2537
      // Predicated region
      $region49: #{graphcast_encoder_embedder.3} parent=47 // pred_check
        %p2539 = pneg %p237
      $region50: #{graphcast_encoder_embedder.3} parent=47 // pred_check_branch
        %2541 = sbr.rel (%p2539) target = $region52
      $region51: #{graphcast_encoder_embedder.3} parent=47 // pred_region
        %s2542 = smul.u32 10, %s25
      $region52: #{graphcast_encoder_embedder.3} parent=47 // pred_fallthru
        _
    $region48: #{graphcast_encoder_embedder.3} parent=5 // pred_fallthru
      _
    %p2543 = scmp.le.s32.totalorder 2, %s20
    // Predicated region
    $region53: #{graphcast_encoder_embedder.3} parent=5 // pred_check
      %p2544 = pneg %p2543
    $region54: #{graphcast_encoder_embedder.3} parent=5 // pred_check_branch
      %2546 = sbr.rel (%p2544) target = $region56
    $region55: #{graphcast_encoder_embedder.3} parent=5 // pred_region
      %s2547 = ssub.s32 %s20, 2
      // Predicated region
      $region57: #{graphcast_encoder_embedder.3} parent=55 // pred_check
        %p2548 = pneg %p243
      $region58: #{graphcast_encoder_embedder.3} parent=55 // pred_check_branch
        %2550 = sbr.rel (%p2548) target = $region60
      $region59: #{graphcast_encoder_embedder.3} parent=55 // pred_region
        %s2551 = smul.u32 10, %s26
        %p2552 = scmp.lt.s32.totalorder %s2551, 29
        %s2553 = scalar_select %p2552, %s2551, 29
        %s2554 = smul.addr %s2553, 4
        %s2555 = smul.addr %s2554, 4
        %s2556 = scalar_lea.vmem %s8, %s2555
      $region60: #{graphcast_encoder_embedder.3} parent=55 // pred_fallthru
        _
    $region56: #{graphcast_encoder_embedder.3} parent=5 // pred_fallthru
      _
  $region6: #{graphcast_encoder_embedder.3} parent=0 // loop_footer
    %s24 = sadd.s32 1, %s20
  $region7: #{graphcast_encoder_embedder.3} parent=0 // loop_footer_branch
    %19 = sbr.rel target = $region3
  $region8: #{graphcast_encoder_embedder.3} parent=0 // loop_exit
    _

// kernel: graphcast_encoder_embedder.2
$region0: #{graphcast_encoder_embedder.2}
  #allocation0 [shape = 'u32[]', space=smem, size = 0x4, offset = 0x4, fixed_abs, tag = 'smem constant byte address 0x4 - core index']
  #allocation1 [shape = 'u32[144,128]{1,0:T(1,128)}', space=vmem, size = 0x12000, scoped, tag = 'internal scratch']
  #allocation2 [shape = 's32[1]{0}', space=sflag, size = 0x4, scoped, tag = 'scoped memory for graphcast_encoder_embedder.2']
  #allocation3 [shape = 's32[1]{0:T(128)S(6)}', space=smem, size = 0x200, scoped, tag = 'prefetched SMEM operand 0']
  %s0 = inlined_call_operand.<no memory space> [shape: s32[1], index: 0, kind: input, shape index: {}]
  %s1 = inlined_call_operand.vmem [shape: bf16[64,16], index: 1, kind: input, shape index: {}]
  %s2 = inlined_call_operand.vmem [shape: bf16[1,16,512], index: 2, kind: input, shape index: {}]
  %s3 = inlined_call_operand.vmem [shape: f32[1,1,512], index: 3, kind: input, shape index: {}]
  %s4 = inlined_call_operand.vmem [shape: bf16[1,512,512], index: 4, kind: input, shape index: {}]
  %s5 = inlined_call_operand.vmem [shape: f32[1,1,512], index: 5, kind: input, shape index: {}]
  %s6 = inlined_call_operand.vmem [shape: f32[1,1,512], index: 6, kind: input, shape index: {}]
  %s7 = inlined_call_operand.vmem [shape: f32[1,1,512], index: 7, kind: input, shape index: {}]
  %s8 = inlined_call_operand.hbm [shape: bf16[64,512], index: 8, kind: output, shape index: {}]
  %s9 = sld [smem:[#allocation0]]
  $region38: #{graphcast_encoder_embedder.2} parent=0
    _
  %s11 = ssub.s32 1, %s9
  %s12 = scalar_select 0, %s11, %s9
  %13 = sst [smem:[#allocation3]] %s0
  $region1: #{graphcast_encoder_embedder.2} parent=0
    #allocation4 [shape = 'u8[65536]{0}', space=vmem, size = 0x10000, scoped, tag = 'output window, operand 0, single buffered']
    #allocation5 [shape = 's32[1]{0}', space=sflag, size = 0x4, scoped, tag = 'scoped memory for graphcast_encoder_embedder.2']
    %14 = vsyncpa [#allocation5], 0
    // Predicated region
    $region2: #{graphcast_encoder_embedder.2} parent=1 // pred_check
      _
    $region3: #{graphcast_encoder_embedder.2} parent=1 // pred_check_branch
      %16 = sbr.rel (0) target = $region5
    $region4: #{graphcast_encoder_embedder.2} parent=1 // pred_region
      _
    $region5: #{graphcast_encoder_embedder.2} parent=1 // pred_fallthru
      _
    // Predicated region
    $region6: #{graphcast_encoder_embedder.2} parent=1 // pred_check
      _
    $region7: #{graphcast_encoder_embedder.2} parent=1 // pred_check_branch
      %18 = sbr.rel (0) target = $region9
    $region8: #{graphcast_encoder_embedder.2} parent=1 // pred_region
      %s19 = sld [smem:[#allocation3]]
      %p20 = scmp.lt.s32.totalorder %s19, 0
      %s21 = scalar_select %p20, %s19, 0
      %s22 = smul.addr %s21, 8
      %s23 = smul.addr %s22, 4
      %s24 = scalar_lea.vmem %s2, %s23
      %s25 = sld [smem:[#allocation3]]
    $region9: #{graphcast_encoder_embedder.2} parent=1 // pred_fallthru
      _
    // Predicated region
    $region10: #{graphcast_encoder_embedder.2} parent=1 // pred_check
      _
    $region11: #{graphcast_encoder_embedder.2} parent=1 // pred_check_branch
      %27 = sbr.rel (0) target = $region13
    $region12: #{graphcast_encoder_embedder.2} parent=1 // pred_region
      %s28 = sld [smem:[#allocation3]]
      %p29 = scmp.lt.s32.totalorder %s28, 0
      %s30 = scalar_select %p29, %s28, 0
      %s31 = smul.addr %s30, 4
      %s32 = scalar_lea.vmem %s3, %s31
      %s33 = sld [smem:[#allocation3]]
    $region13: #{graphcast_encoder_embedder.2} parent=1 // pred_fallthru
      _
    // Predicated region
    $region14: #{graphcast_encoder_embedder.2} parent=1 // pred_check
      _
    $region15: #{graphcast_encoder_embedder.2} parent=1 // pred_check_branch
      %35 = sbr.rel (0) target = $region17
    $region16: #{graphcast_encoder_embedder.2} parent=1 // pred_region
      %s36 = sld [smem:[#allocation3]]
      %p37 = scmp.lt.s32.totalorder %s36, 0
      %s38 = scalar_select %p37, %s36, 0
      %s39 = smul.addr %s38, 256
      %s40 = smul.addr %s39, 4
      %s41 = scalar_lea.vmem %s4, %s40
      %s42 = sld [smem:[#allocation3]]
    $region17: #{graphcast_encoder_embedder.2} parent=1 // pred_fallthru
      _
    // Predicated region
    $region18: #{graphcast_encoder_embedder.2} parent=1 // pred_check
      _
    $region19: #{graphcast_encoder_embedder.2} parent=1 // pred_check_branch
      %44 = sbr.rel (0) target = $region21
    $region20: #{graphcast_encoder_embedder.2} parent=1 // pred_region
      %s45 = sld [smem:[#allocation3]]
      %p46 = scmp.lt.s32.totalorder %s45, 0
      %s47 = scalar_select %p46, %s45, 0
      %s48 = smul.addr %s47, 4
      %s49 = scalar_lea.vmem %s5, %s48
      %s50 = sld [smem:[#allocation3]]
    $region21: #{graphcast_encoder_embedder.2} parent=1 // pred_fallthru
      _
    // Predicated region
    $region22: #{graphcast_encoder_embedder.2} parent=1 // pred_check
      _
    $region23: #{graphcast_encoder_embedder.2} parent=1 // pred_check_branch
      %52 = sbr.rel (0) target = $region25
    $region24: #{graphcast_encoder_embedder.2} parent=1 // pred_region
      %s53 = sld [smem:[#allocation3]]
      %p54 = scmp.lt.s32.totalorder %s53, 0
      %s55 = scalar_select %p54, %s53, 0
      %s56 = smul.addr %s55, 4
      %s57 = scalar_lea.vmem %s6, %s56
      %s58 = sld [smem:[#allocation3]]
    $region25: #{graphcast_encoder_embedder.2} parent=1 // pred_fallthru
      _
    // Predicated region
    $region26: #{graphcast_encoder_embedder.2} parent=1 // pred_check
      _
    $region27: #{graphcast_encoder_embedder.2} parent=1 // pred_check_branch
      %60 = sbr.rel (0) target = $region29
    $region28: #{graphcast_encoder_embedder.2} parent=1 // pred_region
      %s61 = sld [smem:[#allocation3]]
      %p62 = scmp.lt.s32.totalorder %s61, 0
      %s63 = scalar_select %p62, %s61, 0
      %s64 = smul.addr %s63, 4
      %s65 = scalar_lea.vmem %s7, %s64
      %s66 = sld [smem:[#allocation3]]
    $region29: #{graphcast_encoder_embedder.2} parent=1 // pred_fallthru
      _
    %s67 = sld [smem:[#allocation3]]
    %p68 = scmp.lt.s32.totalorder %s67, 0
    %s69 = scalar_select %p68, %s67, 0
    %s70 = smul.addr %s69, 8
    %s71 = smul.addr %s70, 4
    %s72 = scalar_lea.vmem %s2, %s71
    %s73 = sld [smem:[#allocation3]]
    %p74 = scmp.lt.s32.totalorder %s73, 0
    %s75 = scalar_select %p74, %s73, 0
    %s76 = smul.addr %s75, 4
    %s77 = scalar_lea.vmem %s3, %s76
    %s78 = sld [smem:[#allocation3]]
    %p79 = scmp.lt.s32.totalorder %s78, 0
    %s80 = scalar_select %p79, %s78, 0
    %s81 = smul.addr %s80, 256
    %s82 = smul.addr %s81, 4
    %s83 = scalar_lea.vmem %s4, %s82
    %s84 = sld [smem:[#allocation3]]
    %p85 = scmp.lt.s32.totalorder %s84, 0
    %s86 = scalar_select %p85, %s84, 0
    %s87 = smul.addr %s86, 4
    %s88 = scalar_lea.vmem %s5, %s87
    %s89 = sld [smem:[#allocation3]]
    %p90 = scmp.lt.s32.totalorder %s89, 0
    %s91 = scalar_select %p90, %s89, 0
    %s92 = smul.addr %s91, 4
    %s93 = scalar_lea.vmem %s6, %s92
    %s94 = sld [smem:[#allocation3]]
    %p95 = scmp.lt.s32.totalorder %s94, 0
    %s96 = scalar_select %p95, %s94, 0
    %s97 = smul.addr %s96, 4
    %s98 = scalar_lea.vmem %s7, %s97
    %s99 = sld [smem:[#allocation3]]
    %p100 = scmp.lt.s32.totalorder %s99, 0
    %s101 = scalar_select %p100, %s99, 0
    %s102 = smul.addr %s101, 8
    %s103 = smul.addr %s102, 4
    %s104 = scalar_lea.vmem %s2, %s103
    %s105 = sld [smem:[#allocation3]]
    %s106 = sld [smem:[#allocation3]]
    %p107 = scmp.lt.s32.totalorder %s106, 0
    %s108 = scalar_select %p107, %s106, 0
    %s109 = smul.addr %s108, 4
    %s110 = scalar_lea.vmem %s3, %s109
    %s111 = sld [smem:[#allocation3]]
    %s112 = sld [smem:[#allocation3]]
    %p113 = scmp.lt.s32.totalorder %s112, 0
    %s114 = scalar_select %p113, %s112, 0
    %s115 = smul.addr %s114, 256
    %s116 = smul.addr %s115, 4
    %s117 = scalar_lea.vmem %s4, %s116
    %s118 = sld [smem:[#allocation3]]
    %s119 = sld [smem:[#allocation3]]
    %p120 = scmp.lt.s32.totalorder %s119, 0
    %s121 = scalar_select %p120, %s119, 0
    %s122 = smul.addr %s121, 4
    %s123 = scalar_lea.vmem %s5, %s122
    %s124 = sld [smem:[#allocation3]]
    %s125 = sld [smem:[#allocation3]]
    %p126 = scmp.lt.s32.totalorder %s125, 0
    %s127 = scalar_select %p126, %s125, 0
    %s128 = smul.addr %s127, 4
    %s129 = scalar_lea.vmem %s6, %s128
    %s130 = sld [smem:[#allocation3]]
    %s131 = sld [smem:[#allocation3]]
    %p132 = scmp.lt.s32.totalorder %s131, 0
    %s133 = scalar_select %p132, %s131, 0
    %s134 = smul.addr %s133, 4
    %s135 = scalar_lea.vmem %s7, %s134
    %s136 = sld [smem:[#allocation3]]
    %v139 = vld [vmem:[%s1] sm:$0xf]
    %v140 = vld [vmem:[%s1 + $0x4] sm:$0xf]
    %v141 = vld [vmem:[%s1 + $0x8] sm:$0xf]
    %v142 = vld [vmem:[%s1 + $0xc] sm:$0xf]
    %v143 = vld [vmem:[%s1 + $0x10] sm:$0xf]
    %v144 = vld [vmem:[%s1 + $0x14] sm:$0xf]
    %v145 = vld [vmem:[%s1 + $0x18] sm:$0xf]
    %v146 = vld [vmem:[%s1 + $0x1c] sm:$0xf]
    %v147 = vld [vmem:[%s104] sm:$0xff]
    %v148 = vld [vmem:[%s104 + $0x8] sm:$0xff]
    %v149 = vld [vmem:[%s104 + $0x10] sm:$0xff]
    %v150 = vld [vmem:[%s104 + $0x18] sm:$0xff]
    %v151 = vld [vmem:[%s110] sm:$0xf]
    %v153 = vlaneseq
    %v154 = vshrl.u32 %v153, 7
    %v155 = vsub.s32 0, %v154
    %v156 = vrot.slane %v151, %v155
    %v157 = vlaneseq
    %v158 = vshrl.u32 %v157, 7
    %v159 = vsub.s32 1, %v158
    %v160 = vrot.slane %v151, %v159
    %v161 = vlaneseq
    %v162 = vshrl.u32 %v161, 7
    %v163 = vsub.s32 2, %v162
    %v164 = vrot.slane %v151, %v163
    %v165 = vlaneseq
    %v166 = vshrl.u32 %v165, 7
    %v167 = vsub.s32 3, %v166
    %v168 = vrot.slane %v151, %v167
    %v181 = vunpack.c.l.b16 %v139
    %v182 = vunpack.c.l.b16 %v140
    %v183 = vunpack.c.l.b16 %v141
    %v184 = vunpack.c.l.b16 %v142
    %v185 = vunpack.c.l.b16 %v143
    %v186 = vunpack.c.l.b16 %v144
    %v187 = vunpack.c.l.b16 %v145
    %v188 = vunpack.c.l.b16 %v146
    %v189 = vpack.c.b16 %v182, %v181
    %v190 = vpack.c.b16 %v184, %v183
    %v191 = vpack.c.b16 %v186, %v185
    %v192 = vpack.c.b16 %v188, %v187
    %v197 = vunpack.c.l.b16 %v147
    %v198 = vunpack.c.h.b16 %v147
    %v199 = vunpack.c.l.b16 %v148
    %v200 = vunpack.c.h.b16 %v148
    %v201 = vunpack.c.l.b16 %v149
    %v202 = vunpack.c.h.b16 %v149
    %v203 = vunpack.c.l.b16 %v150
    %v204 = vunpack.c.h.b16 %v150
    %v205 = vpack.c.b16 %v201, %v197
    %v206 = vpack.c.b16 %v202, %v198
    %v207 = vpack.c.b16 %v203, %v199
    %v208 = vpack.c.b16 %v204, %v200
    %vm213 = vcmask 130048
    %v215 = vsel %vm213, %v189, 0
    %v218 = vsel %vm213, %v190, 0
    %v221 = vsel %vm213, %v191, 0
    %v224 = vsel %vm213, %v192, 0
    %226 = vmatprep.subr.bf16.mxu0 %v206
    %227 = vmatpush1.bf16.msra.mxu0 %v205
    %228 = vmatprep.subr.bf16.mxu0 0
    %229 = vmatpush1.bf16.msra.mxu0 0
    %230 = vmatprep.subr.bf16.mxu0 0
    %231 = vmatpush1.bf16.msra.mxu0 0
    %232 = vmatprep.subr.bf16.mxu0 0
    %233 = vmatpush1.bf16.msra.mxu0 0
    %234 = vmatprep.subr.bf16.mxu0 0
    %235 = vmatpush1.bf16.msra.mxu0 0
    %236 = vmatprep.subr.bf16.mxu0 0
    %237 = vmatpush1.bf16.msra.mxu0 0
    %238 = vmatprep.subr.bf16.mxu0 0
    %239 = vmatpush1.bf16.msra.mxu0 0
    %240 = vmatprep.subr.bf16.mxu0 0
    %241 = vmatpush1.bf16.msra.mxu0 0
    %242 = vmatprep.subr.bf16.mxu0 0
    %243 = vmatpush1.bf16.msra.mxu0 0
    %244 = vmatprep.subr.bf16.mxu0 0
    %245 = vmatpush1.bf16.msra.mxu0 0
    %246 = vmatprep.subr.bf16.mxu0 0
    %247 = vmatpush1.bf16.msra.mxu0 0
    %248 = vmatprep.subr.bf16.mxu0 0
    %249 = vmatpush1.bf16.msra.mxu0 0
    %250 = vmatprep.subr.bf16.mxu0 0
    %251 = vmatpush1.bf16.msra.mxu0 0
    %252 = vmatprep.subr.bf16.mxu0 0
    %253 = vmatpush1.bf16.msra.mxu0 0
    %254 = vmatprep.subr.bf16.mxu0 0
    %255 = vmatpush1.bf16.msra.mxu0 0
    %256 = vmatprep.subr.bf16.mxu0 0
    %257 = vmatpush1.bf16.msra.mxu0 0
    %258 = vmatprep.mubr.bf16.mxu0 0
    %259 = vmatmul.mubr.bf16.gmra.mrb[0].mxu0 %v215
    %v260 = vpop.f32.mrb[0].mxu0
    %v261 = vadd.f32 %v156, %v260
    %v262 = vpop.f32.mrb[0].mxu0
    %v263 = vadd.f32 %v160, %v262
    %v264 = vpop.f32.mrb[0].mxu0
    %v265 = vadd.f32 %v156, %v264
    %v266 = vpop.f32.mrb[0].mxu0
    %v267 = vadd.f32 %v160, %v266
    %268 = vmatprep.mubr.bf16.mxu0 0
    %269 = vmatmul.mubr.bf16.gmra.mrb[0].mxu0 %v218
    %v270 = vpop.f32.mrb[0].mxu0
    %v271 = vadd.f32 %v156, %v270
    %v272 = vpop.f32.mrb[0].mxu0
    %v273 = vadd.f32 %v160, %v272
    %v274 = vpop.f32.mrb[0].mxu0
    %v275 = vadd.f32 %v156, %v274
    %v276 = vpop.f32.mrb[0].mxu0
    %v277 = vadd.f32 %v160, %v276
    %278 = vmatprep.mubr.bf16.mxu0 0
    %279 = vmatmul.mubr.bf16.gmra.mrb[0].mxu0 %v221
    %v280 = vpop.f32.mrb[0].mxu0
    %v281 = vadd.f32 %v156, %v280
    %v282 = vpop.f32.mrb[0].mxu0
    %v283 = vadd.f32 %v160, %v282
    %v284 = vpop.f32.mrb[0].mxu0
    %v285 = vadd.f32 %v156, %v284
    %v286 = vpop.f32.mrb[0].mxu0
    %v287 = vadd.f32 %v160, %v286
    %288 = vmatprep.mubr.bf16.mxu0 0
    %289 = vmatmul.mubr.bf16.gmra.mrb[0].mxu0 %v224
    %v290 = vpop.f32.mrb[0].mxu0
    %v291 = vadd.f32 %v156, %v290
    %v292 = vpop.f32.mrb[0].mxu0
    %v293 = vadd.f32 %v160, %v292
    %v294 = vpop.f32.mrb[0].mxu0
    %v295 = vadd.f32 %v156, %v294
    %v296 = vpop.f32.mrb[0].mxu0
    %v297 = vadd.f32 %v160, %v296
    %298 = vdwg.mxu0
    %299 = vmatprep.subr.bf16.mxu0 %v208
    %300 = vmatpush1.bf16.msra.mxu0 %v207
    %301 = vmatprep.subr.bf16.mxu0 0
    %302 = vmatpush1.bf16.msra.mxu0 0
    %303 = vmatprep.subr.bf16.mxu0 0
    %304 = vmatpush1.bf16.msra.mxu0 0
    %305 = vmatprep.subr.bf16.mxu0 0
    %306 = vmatpush1.bf16.msra.mxu0 0
    %307 = vmatprep.subr.bf16.mxu0 0
    %308 = vmatpush1.bf16.msra.mxu0 0
    %309 = vmatprep.subr.bf16.mxu0 0
    %310 = vmatpush1.bf16.msra.mxu0 0
    %311 = vmatprep.subr.bf16.mxu0 0
    %312 = vmatpush1.bf16.msra.mxu0 0
    %313 = vmatprep.subr.bf16.mxu0 0
    %314 = vmatpush1.bf16.msra.mxu0 0
    %315 = vmatprep.subr.bf16.mxu0 0
    %316 = vmatpush1.bf16.msra.mxu0 0
    %317 = vmatprep.subr.bf16.mxu0 0
    %318 = vmatpush1.bf16.msra.mxu0 0
    %319 = vmatprep.subr.bf16.mxu0 0
    %320 = vmatpush1.bf16.msra.mxu0 0
    %321 = vmatprep.subr.bf16.mxu0 0
    %322 = vmatpush1.bf16.msra.mxu0 0
    %323 = vmatprep.subr.bf16.mxu0 0
    %324 = vmatpush1.bf16.msra.mxu0 0
    %325 = vmatprep.subr.bf16.mxu0 0
    %326 = vmatpush1.bf16.msra.mxu0 0
    %327 = vmatprep.subr.bf16.mxu0 0
    %328 = vmatpush1.bf16.msra.mxu0 0
    %329 = vmatprep.subr.bf16.mxu0 0
    %330 = vmatpush1.bf16.msra.mxu0 0
    %331 = vmatprep.mubr.bf16.mxu0 0
    %332 = vmatmul.mubr.bf16.gmra.mrb[0].mxu0 %v215
    %v333 = vpop.f32.mrb[0].mxu0
    %v334 = vadd.f32 %v164, %v333
    %v335 = vpop.f32.mrb[0].mxu0
    %v336 = vadd.f32 %v168, %v335
    %v337 = vpop.f32.mrb[0].mxu0
    %v338 = vadd.f32 %v164, %v337
    %v339 = vpop.f32.mrb[0].mxu0
    %v340 = vadd.f32 %v168, %v339
    %341 = vmatprep.mubr.bf16.mxu0 0
    %342 = vmatmul.mubr.bf16.gmra.mrb[0].mxu0 %v218
    %v343 = vpop.f32.mrb[0].mxu0
    %v344 = vadd.f32 %v164, %v343
    %v345 = vpop.f32.mrb[0].mxu0
    %v346 = vadd.f32 %v168, %v345
    %v347 = vpop.f32.mrb[0].mxu0
    %v348 = vadd.f32 %v164, %v347
    %v349 = vpop.f32.mrb[0].mxu0
    %v350 = vadd.f32 %v168, %v349
    %351 = vmatprep.mubr.bf16.mxu0 0
    %352 = vmatmul.mubr.bf16.gmra.mrb[0].mxu0 %v221
    %v353 = vpop.f32.mrb[0].mxu0
    %v354 = vadd.f32 %v164, %v353
    %v355 = vpop.f32.mrb[0].mxu0
    %v356 = vadd.f32 %v168, %v355
    %v357 = vpop.f32.mrb[0].mxu0
    %v358 = vadd.f32 %v164, %v357
    %v359 = vpop.f32.mrb[0].mxu0
    %v360 = vadd.f32 %v168, %v359
    %361 = vmatprep.mubr.bf16.mxu0 0
    %362 = vmatmul.mubr.bf16.gmra.mrb[0].mxu0 %v224
    %v363 = vpop.f32.mrb[0].mxu0
    %v364 = vadd.f32 %v164, %v363
    %v365 = vpop.f32.mrb[0].mxu0
    %v366 = vadd.f32 %v168, %v365
    %v367 = vpop.f32.mrb[0].mxu0
    %v368 = vadd.f32 %v164, %v367
    %v369 = vpop.f32.mrb[0].mxu0
    %v370 = vadd.f32 %v168, %v369
    %371 = vdwg.mxu0
    %v372 = vpack.c.bf16 %v265, %v261
    %v373 = vpack.c.bf16 %v267, %v263
    %v374 = vpack.c.bf16 %v338, %v334
    %v375 = vpack.c.bf16 %v340, %v336
    %v376 = vpack.c.bf16 %v275, %v271
    %v377 = vpack.c.bf16 %v277, %v273
    %v378 = vpack.c.bf16 %v348, %v344
    %v379 = vpack.c.bf16 %v350, %v346
    %v380 = vpack.c.bf16 %v285, %v281
    %v381 = vpack.c.bf16 %v287, %v283
    %v382 = vpack.c.bf16 %v358, %v354
    %v383 = vpack.c.bf16 %v360, %v356
    %v384 = vpack.c.bf16 %v295, %v291
    %v385 = vpack.c.bf16 %v297, %v293
    %v386 = vpack.c.bf16 %v368, %v364
    %v387 = vpack.c.bf16 %v370, %v366
    %v388 = vxor.u32 %v372, 2147516416
    %v389 = vxor.u32 %v373, 2147516416
    %v390 = vxor.u32 %v374, 2147516416
    %v391 = vxor.u32 %v375, 2147516416
    %v392 = vxor.u32 %v376, 2147516416
    %v393 = vxor.u32 %v377, 2147516416
    %v394 = vxor.u32 %v378, 2147516416
    %v395 = vxor.u32 %v379, 2147516416
    %v396 = vxor.u32 %v380, 2147516416
    %v397 = vxor.u32 %v381, 2147516416
    %v398 = vxor.u32 %v382, 2147516416
    %v399 = vxor.u32 %v383, 2147516416
    %v400 = vxor.u32 %v384, 2147516416
    %v401 = vxor.u32 %v385, 2147516416
    %v402 = vxor.u32 %v386, 2147516416
    %v403 = vxor.u32 %v387, 2147516416
    %v405 = vmul.bf16 %v388, 1069105081
    %v406 = vpow.bf16.pop %v405
    %v408 = vmul.bf16 %v389, 1069105081
    %v409 = vpow.bf16.pop %v408
    %v411 = vmul.bf16 %v390, 1069105081
    %v412 = vpow.bf16.pop %v411
    %v414 = vmul.bf16 %v391, 1069105081
    %v415 = vpow.bf16.pop %v414
    %v417 = vmul.bf16 %v392, 1069105081
    %v418 = vpow.bf16.pop %v417
    %v420 = vmul.bf16 %v393, 1069105081
    %v421 = vpow.bf16.pop %v420
    %v423 = vmul.bf16 %v394, 1069105081
    %v424 = vpow.bf16.pop %v423
    %v426 = vmul.bf16 %v395, 1069105081
    %v427 = vpow.bf16.pop %v426
    %v429 = vmul.bf16 %v396, 1069105081
    %v430 = vpow.bf16.pop %v429
    %v432 = vmul.bf16 %v397, 1069105081
    %v433 = vpow.bf16.pop %v432
    %v435 = vmul.bf16 %v398, 1069105081
    %v436 = vpow.bf16.pop %v435
    %v438 = vmul.bf16 %v399, 1069105081
    %v439 = vpow.bf16.pop %v438
    %v441 = vmul.bf16 %v400, 1069105081
    %v442 = vpow.bf16.pop %v441
    %v444 = vmul.bf16 %v401, 1069105081
    %v445 = vpow.bf16.pop %v444
    %v447 = vmul.bf16 %v402, 1069105081
    %v448 = vpow.bf16.pop %v447
    %v450 = vmul.bf16 %v403, 1069105081
    %v451 = vpow.bf16.pop %v450
    %v452 = vadd.bf16 %v406, 1065369472
    %v453 = vadd.bf16 %v409, 1065369472
    %v454 = vadd.bf16 %v412, 1065369472
    %v455 = vadd.bf16 %v415, 1065369472
    %v456 = vadd.bf16 %v418, 1065369472
    %v457 = vadd.bf16 %v421, 1065369472
    %v458 = vadd.bf16 %v424, 1065369472
    %v459 = vadd.bf16 %v427, 1065369472
    %v460 = vadd.bf16 %v430, 1065369472
    %v461 = vadd.bf16 %v433, 1065369472
    %v462 = vadd.bf16 %v436, 1065369472
    %v463 = vadd.bf16 %v439, 1065369472
    %v464 = vadd.bf16 %v442, 1065369472
    %v465 = vadd.bf16 %v445, 1065369472
    %v466 = vadd.bf16 %v448, 1065369472
    %v467 = vadd.bf16 %v451, 1065369472
    %v468 = vrcp.bf16.pop %v452
    %v469 = vmul.bf16 1065369472, %v468
    %v470 = vrcp.bf16.pop %v453
    %v471 = vmul.bf16 1065369472, %v470
    %v472 = vrcp.bf16.pop %v454
    %v473 = vmul.bf16 1065369472, %v472
    %v474 = vrcp.bf16.pop %v455
    %v475 = vmul.bf16 1065369472, %v474
    %v476 = vrcp.bf16.pop %v456
    %v477 = vmul.bf16 1065369472, %v476
    %v478 = vrcp.bf16.pop %v457
    %v479 = vmul.bf16 1065369472, %v478
    %v480 = vrcp.bf16.pop %v458
    %v481 = vmul.bf16 1065369472, %v480
    %v482 = vrcp.bf16.pop %v459
    %v483 = vmul.bf16 1065369472, %v482
    %v484 = vrcp.bf16.pop %v460
    %v485 = vmul.bf16 1065369472, %v484
    %v486 = vrcp.bf16.pop %v461
    %v487 = vmul.bf16 1065369472, %v486
    %v488 = vrcp.bf16.pop %v462
    %v489 = vmul.bf16 1065369472, %v488
    %v490 = vrcp.bf16.pop %v463
    %v491 = vmul.bf16 1065369472, %v490
    %v492 = vrcp.bf16.pop %v464
    %v493 = vmul.bf16 1065369472, %v492
    %v494 = vrcp.bf16.pop %v465
    %v495 = vmul.bf16 1065369472, %v494
    %v496 = vrcp.bf16.pop %v466
    %v497 = vmul.bf16 1065369472, %v496
    %v498 = vrcp.bf16.pop %v467
    %v499 = vmul.bf16 1065369472, %v498
    %v500 = vmul.bf16 %v372, %v469
    %v501 = vmul.bf16 %v373, %v471
    %v502 = vmul.bf16 %v374, %v473
    %v503 = vmul.bf16 %v375, %v475
    %v504 = vmul.bf16 %v376, %v477
    %v505 = vmul.bf16 %v377, %v479
    %v506 = vmul.bf16 %v378, %v481
    %v507 = vmul.bf16 %v379, %v483
    %v508 = vmul.bf16 %v380, %v485
    %v509 = vmul.bf16 %v381, %v487
    %v510 = vmul.bf16 %v382, %v489
    %v511 = vmul.bf16 %v383, %v491
    %v512 = vmul.bf16 %v384, %v493
    %v513 = vmul.bf16 %v385, %v495
    %v514 = vmul.bf16 %v386, %v497
    %v515 = vmul.bf16 %v387, %v499
    %v516 = vld [vmem:[%s117] sm:$0xff]
    %v517 = vld [vmem:[%s117 + $0x8] sm:$0xff]
    %v518 = vld [vmem:[%s117 + $0x10] sm:$0xff]
    %v519 = vld [vmem:[%s117 + $0x18] sm:$0xff]
    %v520 = vld [vmem:[%s117 + $0x20] sm:$0xff]
    %v521 = vld [vmem:[%s117 + $0x28] sm:$0xff]
    %v522 = vld [vmem:[%s117 + $0x30] sm:$0xff]
    %v523 = vld [vmem:[%s117 + $0x38] sm:$0xff]
    %v524 = vld [vmem:[%s117 + $0x40] sm:$0xff]
    %v525 = vld [vmem:[%s117 + $0x48] sm:$0xff]
    %v526 = vld [vmem:[%s117 + $0x50] sm:$0xff]
    %v527 = vld [vmem:[%s117 + $0x58] sm:$0xff]
    %v528 = vld [vmem:[%s117 + $0x60] sm:$0xff]
    %v529 = vld [vmem:[%s117 + $0x68] sm:$0xff]
    %v530 = vld [vmem:[%s117 + $0x70] sm:$0xff]
    %v531 = vld [vmem:[%s117 + $0x78] sm:$0xff]
    %v532 = vld [vmem:[%s117 + $0x80] sm:$0xff]
    %v533 = vld [vmem:[%s117 + $0x88] sm:$0xff]
    %v534 = vld [vmem:[%s117 + $0x90] sm:$0xff]
    %v535 = vld [vmem:[%s117 + $0x98] sm:$0xff]
    %v536 = vld [vmem:[%s117 + $0xa0] sm:$0xff]
    %v537 = vld [vmem:[%s117 + $0xa8] sm:$0xff]
    %v538 = vld [vmem:[%s117 + $0xb0] sm:$0xff]
    %v539 = vld [vmem:[%s117 + $0xb8] sm:$0xff]
    %v540 = vld [vmem:[%s117 + $0xc0] sm:$0xff]
    %v541 = vld [vmem:[%s117 + $0xc8] sm:$0xff]
    %v542 = vld [vmem:[%s117 + $0xd0] sm:$0xff]
    %v543 = vld [vmem:[%s117 + $0xd8] sm:$0xff]
    %v544 = vld [vmem:[%s117 + $0xe0] sm:$0xff]
    %v545 = vld [vmem:[%s117 + $0xe8] sm:$0xff]
    %v546 = vld [vmem:[%s117 + $0xf0] sm:$0xff]
    %v547 = vld [vmem:[%s117 + $0xf8] sm:$0xff]
    %v548 = vld [vmem:[%s117 + $0x100] sm:$0xff]
    %v549 = vld [vmem:[%s117 + $0x108] sm:$0xff]
    %v550 = vld [vmem:[%s117 + $0x110] sm:$0xff]
    %v551 = vld [vmem:[%s117 + $0x118] sm:$0xff]
    %v552 = vld [vmem:[%s117 + $0x120] sm:$0xff]
    %v553 = vld [vmem:[%s117 + $0x128] sm:$0xff]
    %v554 = vld [vmem:[%s117 + $0x130] sm:$0xff]
    %v555 = vld [vmem:[%s117 + $0x138] sm:$0xff]
    %v556 = vld [vmem:[%s117 + $0x140] sm:$0xff]
    %v557 = vld [vmem:[%s117 + $0x148] sm:$0xff]
    %v558 = vld [vmem:[%s117 + $0x150] sm:$0xff]
    %v559 = vld [vmem:[%s117 + $0x158] sm:$0xff]
    %v560 = vld [vmem:[%s117 + $0x160] sm:$0xff]
    %v561 = vld [vmem:[%s117 + $0x168] sm:$0xff]
    %v562 = vld [vmem:[%s117 + $0x170] sm:$0xff]
    %v563 = vld [vmem:[%s117 + $0x178] sm:$0xff]
    %v564 = vld [vmem:[%s117 + $0x180] sm:$0xff]
    %v565 = vld [vmem:[%s117 + $0x188] sm:$0xff]
    %v566 = vld [vmem:[%s117 + $0x190] sm:$0xff]
    %v567 = vld [vmem:[%s117 + $0x198] sm:$0xff]
    %v568 = vld [vmem:[%s117 + $0x1a0] sm:$0xff]
    %v569 = vld [vmem:[%s117 + $0x1a8] sm:$0xff]
    %v570 = vld [vmem:[%s117 + $0x1b0] sm:$0xff]
    %v571 = vld [vmem:[%s117 + $0x1b8] sm:$0xff]
    %v572 = vld [vmem:[%s117 + $0x1c0] sm:$0xff]
    %v573 = vld [vmem:[%s117 + $0x1c8] sm:$0xff]
    %v574 = vld [vmem:[%s117 + $0x1d0] sm:$0xff]
    %v575 = vld [vmem:[%s117 + $0x1d8] sm:$0xff]
    %v576 = vld [vmem:[%s117 + $0x1e0] sm:$0xff]
    %v577 = vld [vmem:[%s117 + $0x1e8] sm:$0xff]
    %v578 = vld [vmem:[%s117 + $0x1f0] sm:$0xff]
    %v579 = vld [vmem:[%s117 + $0x1f8] sm:$0xff]
    %v580 = vld [vmem:[%s117 + $0x200] sm:$0xff]
    %v581 = vld [vmem:[%s117 + $0x208] sm:$0xff]
    %v582 = vld [vmem:[%s117 + $0x210] sm:$0xff]
    %v583 = vld [vmem:[%s117 + $0x218] sm:$0xff]
    %v584 = vld [vmem:[%s117 + $0x220] sm:$0xff]
    %v585 = vld [vmem:[%s117 + $0x228] sm:$0xff]
    %v586 = vld [vmem:[%s117 + $0x230] sm:$0xff]
    %v587 = vld [vmem:[%s117 + $0x238] sm:$0xff]
    %v588 = vld [vmem:[%s117 + $0x240] sm:$0xff]
    %v589 = vld [vmem:[%s117 + $0x248] sm:$0xff]
    %v590 = vld [vmem:[%s117 + $0x250] sm:$0xff]
    %v591 = vld [vmem:[%s117 + $0x258] sm:$0xff]
    %v592 = vld [vmem:[%s117 + $0x260] sm:$0xff]
    %v593 = vld [vmem:[%s117 + $0x268] sm:$0xff]
    %v594 = vld [vmem:[%s117 + $0x270] sm:$0xff]
    %v595 = vld [vmem:[%s117 + $0x278] sm:$0xff]
    %v596 = vld [vmem:[%s117 + $0x280] sm:$0xff]
    %v597 = vld [vmem:[%s117 + $0x288] sm:$0xff]
    %v598 = vld [vmem:[%s117 + $0x290] sm:$0xff]
    %v599 = vld [vmem:[%s117 + $0x298] sm:$0xff]
    %v600 = vld [vmem:[%s117 + $0x2a0] sm:$0xff]
    %v601 = vld [vmem:[%s117 + $0x2a8] sm:$0xff]
    %v602 = vld [vmem:[%s117 + $0x2b0] sm:$0xff]
    %v603 = vld [vmem:[%s117 + $0x2b8] sm:$0xff]
    %v604 = vld [vmem:[%s117 + $0x2c0] sm:$0xff]
    %v605 = vld [vmem:[%s117 + $0x2c8] sm:$0xff]
    %v606 = vld [vmem:[%s117 + $0x2d0] sm:$0xff]
    %v607 = vld [vmem:[%s117 + $0x2d8] sm:$0xff]
    %v608 = vld [vmem:[%s117 + $0x2e0] sm:$0xff]
    %v609 = vld [vmem:[%s117 + $0x2e8] sm:$0xff]
    %v610 = vld [vmem:[%s117 + $0x2f0] sm:$0xff]
    %v611 = vld [vmem:[%s117 + $0x2f8] sm:$0xff]
    %v612 = vld [vmem:[%s117 + $0x300] sm:$0xff]
    %v613 = vld [vmem:[%s117 + $0x308] sm:$0xff]
    %v614 = vld [vmem:[%s117 + $0x310] sm:$0xff]
    %v615 = vld [vmem:[%s117 + $0x318] sm:$0xff]
    %v616 = vld [vmem:[%s117 + $0x320] sm:$0xff]
    %v617 = vld [vmem:[%s117 + $0x328] sm:$0xff]
    %v618 = vld [vmem:[%s117 + $0x330] sm:$0xff]
    %v619 = vld [vmem:[%s117 + $0x338] sm:$0xff]
    %v620 = vld [vmem:[%s117 + $0x340] sm:$0xff]
    %v621 = vld [vmem:[%s117 + $0x348] sm:$0xff]
    %v622 = vld [vmem:[%s117 + $0x350] sm:$0xff]
    %v623 = vld [vmem:[%s117 + $0x358] sm:$0xff]
    %v624 = vld [vmem:[%s117 + $0x360] sm:$0xff]
    %v625 = vld [vmem:[%s117 + $0x368] sm:$0xff]
    %v626 = vld [vmem:[%s117 + $0x370] sm:$0xff]
    %v627 = vld [vmem:[%s117 + $0x378] sm:$0xff]
    %v628 = vld [vmem:[%s117 + $0x380] sm:$0xff]
    %v629 = vld [vmem:[%s117 + $0x388] sm:$0xff]
    %v630 = vld [vmem:[%s117 + $0x390] sm:$0xff]
    %v631 = vld [vmem:[%s117 + $0x398] sm:$0xff]
    %v632 = vld [vmem:[%s117 + $0x3a0] sm:$0xff]
    %v633 = vld [vmem:[%s117 + $0x3a8] sm:$0xff]
    %v634 = vld [vmem:[%s117 + $0x3b0] sm:$0xff]
    %v635 = vld [vmem:[%s117 + $0x3b8] sm:$0xff]
    %v636 = vld [vmem:[%s117 + $0x3c0] sm:$0xff]
    %v637 = vld [vmem:[%s117 + $0x3c8] sm:$0xff]
    %v638 = vld [vmem:[%s117 + $0x3d0] sm:$0xff]
    %v639 = vld [vmem:[%s117 + $0x3d8] sm:$0xff]
    %v640 = vld [vmem:[%s117 + $0x3e0] sm:$0xff]
    %v641 = vld [vmem:[%s117 + $0x3e8] sm:$0xff]
    %v642 = vld [vmem:[%s117 + $0x3f0] sm:$0xff]
    %v643 = vld [vmem:[%s117 + $0x3f8] sm:$0xff]
    %v644 = vld [vmem:[%s123] sm:$0xf]
    %v646 = vlaneseq
    %v647 = vshrl.u32 %v646, 7
    %v648 = vsub.s32 0, %v647
    %v649 = vrot.slane %v644, %v648
    %v650 = vlaneseq
    %v651 = vshrl.u32 %v650, 7
    %v652 = vsub.s32 1, %v651
    %v653 = vrot.slane %v644, %v652
    %v654 = vlaneseq
    %v655 = vshrl.u32 %v654, 7
    %v656 = vsub.s32 2, %v655
    %v657 = vrot.slane %v644, %v656
    %v658 = vlaneseq
    %v659 = vshrl.u32 %v658, 7
    %v660 = vsub.s32 3, %v659
    %v661 = vrot.slane %v644, %v660
    %v794 = vunpack.c.l.b16 %v516
    %v795 = vunpack.c.h.b16 %v516
    %v796 = vunpack.c.l.b16 %v517
    %v797 = vunpack.c.h.b16 %v517
    %v798 = vunpack.c.l.b16 %v518
    %v799 = vunpack.c.h.b16 %v518
    %v800 = vunpack.c.l.b16 %v519
    %v801 = vunpack.c.h.b16 %v519
    %v802 = vunpack.c.l.b16 %v520
    %v803 = vunpack.c.h.b16 %v520
    %v804 = vunpack.c.l.b16 %v521
    %v805 = vunpack.c.h.b16 %v521
    %v806 = vunpack.c.l.b16 %v522
    %v807 = vunpack.c.h.b16 %v522
    %v808 = vunpack.c.l.b16 %v523
    %v809 = vunpack.c.h.b16 %v523
    %v810 = vunpack.c.l.b16 %v524
    %v811 = vunpack.c.h.b16 %v524
    %v812 = vunpack.c.l.b16 %v525
    %v813 = vunpack.c.h.b16 %v525
    %v814 = vunpack.c.l.b16 %v526
    %v815 = vunpack.c.h.b16 %v526
    %v816 = vunpack.c.l.b16 %v527
    %v817 = vunpack.c.h.b16 %v527
    %v818 = vunpack.c.l.b16 %v528
    %v819 = vunpack.c.h.b16 %v528
    %v820 = vunpack.c.l.b16 %v529
    %v821 = vunpack.c.h.b16 %v529
    %v822 = vunpack.c.l.b16 %v530
    %v823 = vunpack.c.h.b16 %v530
    %v824 = vunpack.c.l.b16 %v531
    %v825 = vunpack.c.h.b16 %v531
    %v826 = vunpack.c.l.b16 %v532
    %v827 = vunpack.c.h.b16 %v532
    %v828 = vunpack.c.l.b16 %v533
    %v829 = vunpack.c.h.b16 %v533
    %v830 = vunpack.c.l.b16 %v534
    %v831 = vunpack.c.h.b16 %v534
    %v832 = vunpack.c.l.b16 %v535
    %v833 = vunpack.c.h.b16 %v535
    %v834 = vunpack.c.l.b16 %v536
    %v835 = vunpack.c.h.b16 %v536
    %v836 = vunpack.c.l.b16 %v537
    %v837 = vunpack.c.h.b16 %v537
    %v838 = vunpack.c.l.b16 %v538
    %v839 = vunpack.c.h.b16 %v538
    %v840 = vunpack.c.l.b16 %v539
    %v841 = vunpack.c.h.b16 %v539
    %v842 = vunpack.c.l.b16 %v540
    %v843 = vunpack.c.h.b16 %v540
    %v844 = vunpack.c.l.b16 %v541
    %v845 = vunpack.c.h.b16 %v541
    %v846 = vunpack.c.l.b16 %v542
    %v847 = vunpack.c.h.b16 %v542
    %v848 = vunpack.c.l.b16 %v543
    %v849 = vunpack.c.h.b16 %v543
    %v850 = vunpack.c.l.b16 %v544
    %v851 = vunpack.c.h.b16 %v544
    %v852 = vunpack.c.l.b16 %v545
    %v853 = vunpack.c.h.b16 %v545
    %v854 = vunpack.c.l.b16 %v546
    %v855 = vunpack.c.h.b16 %v546
    %v856 = vunpack.c.l.b16 %v547
    %v857 = vunpack.c.h.b16 %v547
    %v858 = vunpack.c.l.b16 %v548
    %v859 = vunpack.c.h.b16 %v548
    %v860 = vunpack.c.l.b16 %v549
    %v861 = vunpack.c.h.b16 %v549
    %v862 = vunpack.c.l.b16 %v550
    %v863 = vunpack.c.h.b16 %v550
    %v864 = vunpack.c.l.b16 %v551
    %v865 = vunpack.c.h.b16 %v551
    %v866 = vunpack.c.l.b16 %v552
    %v867 = vunpack.c.h.b16 %v552
    %v868 = vunpack.c.l.b16 %v553
    %v869 = vunpack.c.h.b16 %v553
    %v870 = vunpack.c.l.b16 %v554
    %v871 = vunpack.c.h.b16 %v554
    %v872 = vunpack.c.l.b16 %v555
    %v873 = vunpack.c.h.b16 %v555
    %v874 = vunpack.c.l.b16 %v556
    %v875 = vunpack.c.h.b16 %v556
    %v876 = vunpack.c.l.b16 %v557
    %v877 = vunpack.c.h.b16 %v557
    %v878 = vunpack.c.l.b16 %v558
    %v879 = vunpack.c.h.b16 %v558
    %v880 = vunpack.c.l.b16 %v559
    %v881 = vunpack.c.h.b16 %v559
    %v882 = vunpack.c.l.b16 %v560
    %v883 = vunpack.c.h.b16 %v560
    %v884 = vunpack.c.l.b16 %v561
    %v885 = vunpack.c.h.b16 %v561
    %v886 = vunpack.c.l.b16 %v562
    %v887 = vunpack.c.h.b16 %v562
    %v888 = vunpack.c.l.b16 %v563
    %v889 = vunpack.c.h.b16 %v563
    %v890 = vunpack.c.l.b16 %v564
    %v891 = vunpack.c.h.b16 %v564
    %v892 = vunpack.c.l.b16 %v565
    %v893 = vunpack.c.h.b16 %v565
    %v894 = vunpack.c.l.b16 %v566
    %v895 = vunpack.c.h.b16 %v566
    %v896 = vunpack.c.l.b16 %v567
    %v897 = vunpack.c.h.b16 %v567
    %v898 = vunpack.c.l.b16 %v568
    %v899 = vunpack.c.h.b16 %v568
    %v900 = vunpack.c.l.b16 %v569
    %v901 = vunpack.c.h.b16 %v569
    %v902 = vunpack.c.l.b16 %v570
    %v903 = vunpack.c.h.b16 %v570
    %v904 = vunpack.c.l.b16 %v571
    %v905 = vunpack.c.h.b16 %v571
    %v906 = vunpack.c.l.b16 %v572
    %v907 = vunpack.c.h.b16 %v572
    %v908 = vunpack.c.l.b16 %v573
    %v909 = vunpack.c.h.b16 %v573
    %v910 = vunpack.c.l.b16 %v574
    %v911 = vunpack.c.h.b16 %v574
    %v912 = vunpack.c.l.b16 %v575
    %v913 = vunpack.c.h.b16 %v575
    %v914 = vunpack.c.l.b16 %v576
    %v915 = vunpack.c.h.b16 %v576
    %v916 = vunpack.c.l.b16 %v577
    %v917 = vunpack.c.h.b16 %v577
    %v918 = vunpack.c.l.b16 %v578
    %v919 = vunpack.c.h.b16 %v578
    %v920 = vunpack.c.l.b16 %v579
    %v921 = vunpack.c.h.b16 %v579
    %v922 = vunpack.c.l.b16 %v580
    %v923 = vunpack.c.h.b16 %v580
    %v924 = vunpack.c.l.b16 %v581
    %v925 = vunpack.c.h.b16 %v581
    %v926 = vunpack.c.l.b16 %v582
    %v927 = vunpack.c.h.b16 %v582
    %v928 = vunpack.c.l.b16 %v583
    %v929 = vunpack.c.h.b16 %v583
    %v930 = vunpack.c.l.b16 %v584
    %v931 = vunpack.c.h.b16 %v584
    %v932 = vunpack.c.l.b16 %v585
    %v933 = vunpack.c.h.b16 %v585
    %v934 = vunpack.c.l.b16 %v586
    %v935 = vunpack.c.h.b16 %v586
    %v936 = vunpack.c.l.b16 %v587
    %v937 = vunpack.c.h.b16 %v587
    %v938 = vunpack.c.l.b16 %v588
    %v939 = vunpack.c.h.b16 %v588
    %v940 = vunpack.c.l.b16 %v589
    %v941 = vunpack.c.h.b16 %v589
    %v942 = vunpack.c.l.b16 %v590
    %v943 = vunpack.c.h.b16 %v590
    %v944 = vunpack.c.l.b16 %v591
    %v945 = vunpack.c.h.b16 %v591
    %v946 = vunpack.c.l.b16 %v592
    %v947 = vunpack.c.h.b16 %v592
    %v948 = vunpack.c.l.b16 %v593
    %v949 = vunpack.c.h.b16 %v593
    %v950 = vunpack.c.l.b16 %v594
    %v951 = vunpack.c.h.b16 %v594
    %v952 = vunpack.c.l.b16 %v595
    %v953 = vunpack.c.h.b16 %v595
    %v954 = vunpack.c.l.b16 %v596
    %v955 = vunpack.c.h.b16 %v596
    %v956 = vunpack.c.l.b16 %v597
    %v957 = vunpack.c.h.b16 %v597
    %v958 = vunpack.c.l.b16 %v598
    %v959 = vunpack.c.h.b16 %v598
    %v960 = vunpack.c.l.b16 %v599
    %v961 = vunpack.c.h.b16 %v599
    %v962 = vunpack.c.l.b16 %v600
    %v963 = vunpack.c.h.b16 %v600
    %v964 = vunpack.c.l.b16 %v601
    %v965 = vunpack.c.h.b16 %v601
    %v966 = vunpack.c.l.b16 %v602
    %v967 = vunpack.c.h.b16 %v602
    %v968 = vunpack.c.l.b16 %v603
    %v969 = vunpack.c.h.b16 %v603
    %v970 = vunpack.c.l.b16 %v604
    %v971 = vunpack.c.h.b16 %v604
    %v972 = vunpack.c.l.b16 %v605
    %v973 = vunpack.c.h.b16 %v605
    %v974 = vunpack.c.l.b16 %v606
    %v975 = vunpack.c.h.b16 %v606
    %v976 = vunpack.c.l.b16 %v607
    %v977 = vunpack.c.h.b16 %v607
    %v978 = vunpack.c.l.b16 %v608
    %v979 = vunpack.c.h.b16 %v608
    %v980 = vunpack.c.l.b16 %v609
    %v981 = vunpack.c.h.b16 %v609
    %v982 = vunpack.c.l.b16 %v610
    %v983 = vunpack.c.h.b16 %v610
    %v984 = vunpack.c.l.b16 %v611
    %v985 = vunpack.c.h.b16 %v611
    %v986 = vunpack.c.l.b16 %v612
    %v987 = vunpack.c.h.b16 %v612
    %v988 = vunpack.c.l.b16 %v613
    %v989 = vunpack.c.h.b16 %v613
    %v990 = vunpack.c.l.b16 %v614
    %v991 = vunpack.c.h.b16 %v614
    %v992 = vunpack.c.l.b16 %v615
    %v993 = vunpack.c.h.b16 %v615
    %v994 = vunpack.c.l.b16 %v616
    %v995 = vunpack.c.h.b16 %v616
    %v996 = vunpack.c.l.b16 %v617
    %v997 = vunpack.c.h.b16 %v617
    %v998 = vunpack.c.l.b16 %v618
    %v999 = vunpack.c.h.b16 %v618
    %v1000 = vunpack.c.l.b16 %v619
    %v1001 = vunpack.c.h.b16 %v619
    %v1002 = vunpack.c.l.b16 %v620
    %v1003 = vunpack.c.h.b16 %v620
    %v1004 = vunpack.c.l.b16 %v621
    %v1005 = vunpack.c.h.b16 %v621
    %v1006 = vunpack.c.l.b16 %v622
    %v1007 = vunpack.c.h.b16 %v622
    %v1008 = vunpack.c.l.b16 %v623
    %v1009 = vunpack.c.h.b16 %v623
    %v1010 = vunpack.c.l.b16 %v624
    %v1011 = vunpack.c.h.b16 %v624
    %v1012 = vunpack.c.l.b16 %v625
    %v1013 = vunpack.c.h.b16 %v625
    %v1014 = vunpack.c.l.b16 %v626
    %v1015 = vunpack.c.h.b16 %v626
    %v1016 = vunpack.c.l.b16 %v627
    %v1017 = vunpack.c.h.b16 %v627
    %v1018 = vunpack.c.l.b16 %v628
    %v1019 = vunpack.c.h.b16 %v628
    %v1020 = vunpack.c.l.b16 %v629
    %v1021 = vunpack.c.h.b16 %v629
    %v1022 = vunpack.c.l.b16 %v630
    %v1023 = vunpack.c.h.b16 %v630
    %v1024 = vunpack.c.l.b16 %v631
    %v1025 = vunpack.c.h.b16 %v631
    %v1026 = vunpack.c.l.b16 %v632
    %v1027 = vunpack.c.h.b16 %v632
    %v1028 = vunpack.c.l.b16 %v633
    %v1029 = vunpack.c.h.b16 %v633
    %v1030 = vunpack.c.l.b16 %v634
    %v1031 = vunpack.c.h.b16 %v634
    %v1032 = vunpack.c.l.b16 %v635
    %v1033 = vunpack.c.h.b16 %v635
    %v1034 = vunpack.c.l.b16 %v636
    %v1035 = vunpack.c.h.b16 %v636
    %v1036 = vunpack.c.l.b16 %v637
    %v1037 = vunpack.c.h.b16 %v637
    %v1038 = vunpack.c.l.b16 %v638
    %v1039 = vunpack.c.h.b16 %v638
    %v1040 = vunpack.c.l.b16 %v639
    %v1041 = vunpack.c.h.b16 %v639
    %v1042 = vunpack.c.l.b16 %v640
    %v1043 = vunpack.c.h.b16 %v640
    %v1044 = vunpack.c.l.b16 %v641
    %v1045 = vunpack.c.h.b16 %v641
    %v1046 = vunpack.c.l.b16 %v642
    %v1047 = vunpack.c.h.b16 %v642
    %v1048 = vunpack.c.l.b16 %v643
    %v1049 = vunpack.c.h.b16 %v643
    %v1050 = vpack.c.b16 %v798, %v794
    %v1051 = vpack.c.b16 %v799, %v795
    %v1052 = vpack.c.b16 %v800, %v796
    %v1053 = vpack.c.b16 %v801, %v797
    %v1054 = vpack.c.b16 %v806, %v802
    %v1055 = vpack.c.b16 %v807, %v803
    %v1056 = vpack.c.b16 %v808, %v804
    %v1057 = vpack.c.b16 %v809, %v805
    %v1058 = vpack.c.b16 %v814, %v810
    %v1059 = vpack.c.b16 %v815, %v811
    %v1060 = vpack.c.b16 %v816, %v812
    %v1061 = vpack.c.b16 %v817, %v813
    %v1062 = vpack.c.b16 %v822, %v818
    %v1063 = vpack.c.b16 %v823, %v819
    %v1064 = vpack.c.b16 %v824, %v820
    %v1065 = vpack.c.b16 %v825, %v821
    %v1066 = vpack.c.b16 %v830, %v826
    %v1067 = vpack.c.b16 %v831, %v827
    %v1068 = vpack.c.b16 %v832, %v828
    %v1069 = vpack.c.b16 %v833, %v829
    %v1070 = vpack.c.b16 %v838, %v834
    %v1071 = vpack.c.b16 %v839, %v835
    %v1072 = vpack.c.b16 %v840, %v836
    %v1073 = vpack.c.b16 %v841, %v837
    %v1074 = vpack.c.b16 %v846, %v842
    %v1075 = vpack.c.b16 %v847, %v843
    %v1076 = vpack.c.b16 %v848, %v844
    %v1077 = vpack.c.b16 %v849, %v845
    %v1078 = vpack.c.b16 %v854, %v850
    %v1079 = vpack.c.b16 %v855, %v851
    %v1080 = vpack.c.b16 %v856, %v852
    %v1081 = vpack.c.b16 %v857, %v853
    %v1082 = vpack.c.b16 %v862, %v858
    %v1083 = vpack.c.b16 %v863, %v859
    %v1084 = vpack.c.b16 %v864, %v860
    %v1085 = vpack.c.b16 %v865, %v861
    %v1086 = vpack.c.b16 %v870, %v866
    %v1087 = vpack.c.b16 %v871, %v867
    %v1088 = vpack.c.b16 %v872, %v868
    %v1089 = vpack.c.b16 %v873, %v869
    %v1090 = vpack.c.b16 %v878, %v874
    %v1091 = vpack.c.b16 %v879, %v875
    %v1092 = vpack.c.b16 %v880, %v876
    %v1093 = vpack.c.b16 %v881, %v877
    %v1094 = vpack.c.b16 %v886, %v882
    %v1095 = vpack.c.b16 %v887, %v883
    %v1096 = vpack.c.b16 %v888, %v884
    %v1097 = vpack.c.b16 %v889, %v885
    %v1098 = vpack.c.b16 %v894, %v890
    %v1099 = vpack.c.b16 %v895, %v891
    %v1100 = vpack.c.b16 %v896, %v892
    %v1101 = vpack.c.b16 %v897, %v893
    %v1102 = vpack.c.b16 %v902, %v898
    %v1103 = vpack.c.b16 %v903, %v899
    %v1104 = vpack.c.b16 %v904, %v900
    %v1105 = vpack.c.b16 %v905, %v901
    %v1106 = vpack.c.b16 %v910, %v906
    %v1107 = vpack.c.b16 %v911, %v907
    %v1108 = vpack.c.b16 %v912, %v908
    %v1109 = vpack.c.b16 %v913, %v909
    %v1110 = vpack.c.b16 %v918, %v914
    %v1111 = vpack.c.b16 %v919, %v915
    %v1112 = vpack.c.b16 %v920, %v916
    %v1113 = vpack.c.b16 %v921, %v917
    %v1114 = vpack.c.b16 %v926, %v922
    %v1115 = vpack.c.b16 %v927, %v923
    %v1116 = vpack.c.b16 %v928, %v924
    %v1117 = vpack.c.b16 %v929, %v925
    %v1118 = vpack.c.b16 %v934, %v930
    %v1119 = vpack.c.b16 %v935, %v931
    %v1120 = vpack.c.b16 %v936, %v932
    %v1121 = vpack.c.b16 %v937, %v933
    %v1122 = vpack.c.b16 %v942, %v938
    %v1123 = vpack.c.b16 %v943, %v939
    %v1124 = vpack.c.b16 %v944, %v940
    %v1125 = vpack.c.b16 %v945, %v941
    %v1126 = vpack.c.b16 %v950, %v946
    %v1127 = vpack.c.b16 %v951, %v947
    %v1128 = vpack.c.b16 %v952, %v948
    %v1129 = vpack.c.b16 %v953, %v949
    %v1130 = vpack.c.b16 %v958, %v954
    %v1131 = vpack.c.b16 %v959, %v955
    %v1132 = vpack.c.b16 %v960, %v956
    %v1133 = vpack.c.b16 %v961, %v957
    %v1134 = vpack.c.b16 %v966, %v962
    %v1135 = vpack.c.b16 %v967, %v963
    %v1136 = vpack.c.b16 %v968, %v964
    %v1137 = vpack.c.b16 %v969, %v965
    %v1138 = vpack.c.b16 %v974, %v970
    %v1139 = vpack.c.b16 %v975, %v971
    %v1140 = vpack.c.b16 %v976, %v972
    %v1141 = vpack.c.b16 %v977, %v973
    %v1142 = vpack.c.b16 %v982, %v978
    %v1143 = vpack.c.b16 %v983, %v979
    %v1144 = vpack.c.b16 %v984, %v980
    %v1145 = vpack.c.b16 %v985, %v981
    %v1146 = vpack.c.b16 %v990, %v986
    %v1147 = vpack.c.b16 %v991, %v987
    %v1148 = vpack.c.b16 %v992, %v988
    %v1149 = vpack.c.b16 %v993, %v989
    %v1150 = vpack.c.b16 %v998, %v994
    %v1151 = vpack.c.b16 %v999, %v995
    %v1152 = vpack.c.b16 %v1000, %v996
    %v1153 = vpack.c.b16 %v1001, %v997
    %v1154 = vpack.c.b16 %v1006, %v1002
    %v1155 = vpack.c.b16 %v1007, %v1003
    %v1156 = vpack.c.b16 %v1008, %v1004
    %v1157 = vpack.c.b16 %v1009, %v1005
    %v1158 = vpack.c.b16 %v1014, %v1010
    %v1159 = vpack.c.b16 %v1015, %v1011
    %v1160 = vpack.c.b16 %v1016, %v1012
    %v1161 = vpack.c.b16 %v1017, %v1013
    %v1162 = vpack.c.b16 %v1022, %v1018
    %v1163 = vpack.c.b16 %v1023, %v1019
    %v1164 = vpack.c.b16 %v1024, %v1020
    %v1165 = vpack.c.b16 %v1025, %v1021
    %v1166 = vpack.c.b16 %v1030, %v1026
    %v1167 = vpack.c.b16 %v1031, %v1027
    %v1168 = vpack.c.b16 %v1032, %v1028
    %v1169 = vpack.c.b16 %v1033, %v1029
    %v1170 = vpack.c.b16 %v1038, %v1034
    %v1171 = vpack.c.b16 %v1039, %v1035
    %v1172 = vpack.c.b16 %v1040, %v1036
    %v1173 = vpack.c.b16 %v1041, %v1037
    %v1174 = vpack.c.b16 %v1046, %v1042
    %v1175 = vpack.c.b16 %v1047, %v1043
    %v1176 = vpack.c.b16 %v1048, %v1044
    %v1177 = vpack.c.b16 %v1049, %v1045
    %1306 = vmatprep.subr.bf16.mxu0 %v1051
    %1307 = vmatpush1.bf16.msra.mxu0 %v1050
    %1308 = vmatprep.subr.bf16.mxu0 %v1055
    %1309 = vmatpush1.bf16.msra.mxu0 %v1054
    %1310 = vmatprep.subr.bf16.mxu0 %v1059
    %1311 = vmatpush1.bf16.msra.mxu0 %v1058
    %1312 = vmatprep.subr.bf16.mxu0 %v1063
    %1313 = vmatpush1.bf16.msra.mxu0 %v1062
    %1314 = vmatprep.subr.bf16.mxu0 %v1067
    %1315 = vmatpush1.bf16.msra.mxu0 %v1066
    %1316 = vmatprep.subr.bf16.mxu0 %v1071
    %1317 = vmatpush1.bf16.msra.mxu0 %v1070
    %1318 = vmatprep.subr.bf16.mxu0 %v1075
    %1319 = vmatpush1.bf16.msra.mxu0 %v1074
    %1320 = vmatprep.subr.bf16.mxu0 %v1079
    %1321 = vmatpush1.bf16.msra.mxu0 %v1078
    %1322 = vmatprep.subr.bf16.mxu0 %v1083
    %1323 = vmatpush1.bf16.msra.mxu0 %v1082
    %1324 = vmatprep.subr.bf16.mxu0 %v1087
    %1325 = vmatpush1.bf16.msra.mxu0 %v1086
    %1326 = vmatprep.subr.bf16.mxu0 %v1091
    %1327 = vmatpush1.bf16.msra.mxu0 %v1090
    %1328 = vmatprep.subr.bf16.mxu0 %v1095
    %1329 = vmatpush1.bf16.msra.mxu0 %v1094
    %1330 = vmatprep.subr.bf16.mxu0 %v1099
    %1331 = vmatpush1.bf16.msra.mxu0 %v1098
    %1332 = vmatprep.subr.bf16.mxu0 %v1103
    %1333 = vmatpush1.bf16.msra.mxu0 %v1102
    %1334 = vmatprep.subr.bf16.mxu0 %v1107
    %1335 = vmatpush1.bf16.msra.mxu0 %v1106
    %1336 = vmatprep.subr.bf16.mxu0 %v1111
    %1337 = vmatpush1.bf16.msra.mxu0 %v1110
    %1338 = vmatprep.mubr.bf16.mxu0 %v501
    %1339 = vmatmul.mubr.bf16.gmra.mrb[0].mxu0 %v500
    %v1340 = vpop.f32.mrb[0].mxu0
    %v1341 = vadd.f32 %v649, %v1340
    %v1342 = vpop.f32.mrb[0].mxu0
    %v1343 = vadd.f32 %v653, %v1342
    %v1344 = vpop.f32.mrb[0].mxu0
    %v1345 = vadd.f32 %v649, %v1344
    %v1346 = vpop.f32.mrb[0].mxu0
    %v1347 = vadd.f32 %v653, %v1346
    %1348 = vmatprep.mubr.bf16.mxu0 %v505
    %1349 = vmatmul.mubr.bf16.gmra.mrb[0].mxu0 %v504
    %v1350 = vpop.f32.mrb[0].mxu0
    %v1351 = vadd.f32 %v649, %v1350
    %v1352 = vpop.f32.mrb[0].mxu0
    %v1353 = vadd.f32 %v653, %v1352
    %v1354 = vpop.f32.mrb[0].mxu0
    %v1355 = vadd.f32 %v649, %v1354
    %v1356 = vpop.f32.mrb[0].mxu0
    %v1357 = vadd.f32 %v653, %v1356
    %1358 = vmatprep.mubr.bf16.mxu0 %v509
    %1359 = vmatmul.mubr.bf16.gmra.mrb[0].mxu0 %v508
    %v1360 = vpop.f32.mrb[0].mxu0
    %v1361 = vadd.f32 %v649, %v1360
    %v1362 = vpop.f32.mrb[0].mxu0
    %v1363 = vadd.f32 %v653, %v1362
    %v1364 = vpop.f32.mrb[0].mxu0
    %v1365 = vadd.f32 %v649, %v1364
    %v1366 = vpop.f32.mrb[0].mxu0
    %v1367 = vadd.f32 %v653, %v1366
    %1368 = vmatprep.mubr.bf16.mxu0 %v513
    %1369 = vmatmul.mubr.bf16.gmra.mrb[0].mxu0 %v512
    %v1370 = vpop.f32.mrb[0].mxu0
    %v1371 = vadd.f32 %v649, %v1370
    %v1372 = vpop.f32.mrb[0].mxu0
    %v1373 = vadd.f32 %v653, %v1372
    %v1374 = vpop.f32.mrb[0].mxu0
    %v1375 = vadd.f32 %v649, %v1374
    %v1376 = vpop.f32.mrb[0].mxu0
    %v1377 = vadd.f32 %v653, %v1376
    %1378 = vdwg.mxu0
    %1379 = vmatprep.subr.bf16.mxu0 %v1115
    %1380 = vmatpush1.bf16.msra.mxu0 %v1114
    %1381 = vmatprep.subr.bf16.mxu0 %v1119
    %1382 = vmatpush1.bf16.msra.mxu0 %v1118
    %1383 = vmatprep.subr.bf16.mxu0 %v1123
    %1384 = vmatpush1.bf16.msra.mxu0 %v1122
    %1385 = vmatprep.subr.bf16.mxu0 %v1127
    %1386 = vmatpush1.bf16.msra.mxu0 %v1126
    %1387 = vmatprep.subr.bf16.mxu0 %v1131
    %1388 = vmatpush1.bf16.msra.mxu0 %v1130
    %1389 = vmatprep.subr.bf16.mxu0 %v1135
    %1390 = vmatpush1.bf16.msra.mxu0 %v1134
    %1391 = vmatprep.subr.bf16.mxu0 %v1139
    %1392 = vmatpush1.bf16.msra.mxu0 %v1138
    %1393 = vmatprep.subr.bf16.mxu0 %v1143
    %1394 = vmatpush1.bf16.msra.mxu0 %v1142
    %1395 = vmatprep.subr.bf16.mxu0 %v1147
    %1396 = vmatpush1.bf16.msra.mxu0 %v1146
    %1397 = vmatprep.subr.bf16.mxu0 %v1151
    %1398 = vmatpush1.bf16.msra.mxu0 %v1150
    %1399 = vmatprep.subr.bf16.mxu0 %v1155
    %1400 = vmatpush1.bf16.msra.mxu0 %v1154
    %1401 = vmatprep.subr.bf16.mxu0 %v1159
    %1402 = vmatpush1.bf16.msra.mxu0 %v1158
    %1403 = vmatprep.subr.bf16.mxu0 %v1163
    %1404 = vmatpush1.bf16.msra.mxu0 %v1162
    %1405 = vmatprep.subr.bf16.mxu0 %v1167
    %1406 = vmatpush1.bf16.msra.mxu0 %v1166
    %1407 = vmatprep.subr.bf16.mxu0 %v1171
    %1408 = vmatpush1.bf16.msra.mxu0 %v1170
    %1409 = vmatprep.subr.bf16.mxu0 %v1175
    %1410 = vmatpush1.bf16.msra.mxu0 %v1174
    %1411 = vmatprep.mubr.bf16.mxu0 %v503
    %1412 = vmatmul.mubr.bf16.gmra.mrb[0].mxu0 %v502
    %v1413 = vpop.f32.mrb[0].mxu0
    %v1414 = vadd.f32 %v1341, %v1413
    %v1415 = vpop.f32.mrb[0].mxu0
    %v1416 = vadd.f32 %v1343, %v1415
    %v1417 = vpop.f32.mrb[0].mxu0
    %v1418 = vadd.f32 %v1345, %v1417
    %v1419 = vpop.f32.mrb[0].mxu0
    %v1420 = vadd.f32 %v1347, %v1419
    %1421 = vmatprep.mubr.bf16.mxu0 %v507
    %1422 = vmatmul.mubr.bf16.gmra.mrb[0].mxu0 %v506
    %v1423 = vpop.f32.mrb[0].mxu0
    %v1424 = vadd.f32 %v1351, %v1423
    %v1425 = vpop.f32.mrb[0].mxu0
    %v1426 = vadd.f32 %v1353, %v1425
    %v1427 = vpop.f32.mrb[0].mxu0
    %v1428 = vadd.f32 %v1355, %v1427
    %v1429 = vpop.f32.mrb[0].mxu0
    %v1430 = vadd.f32 %v1357, %v1429
    %1431 = vmatprep.mubr.bf16.mxu0 %v511
    %1432 = vmatmul.mubr.bf16.gmra.mrb[0].mxu0 %v510
    %v1433 = vpop.f32.mrb[0].mxu0
    %v1434 = vadd.f32 %v1361, %v1433
    %v1435 = vpop.f32.mrb[0].mxu0
    %v1436 = vadd.f32 %v1363, %v1435
    %v1437 = vpop.f32.mrb[0].mxu0
    %v1438 = vadd.f32 %v1365, %v1437
    %v1439 = vpop.f32.mrb[0].mxu0
    %v1440 = vadd.f32 %v1367, %v1439
    %1441 = vmatprep.mubr.bf16.mxu0 %v515
    %1442 = vmatmul.mubr.bf16.gmra.mrb[0].mxu0 %v514
    %v1443 = vpop.f32.mrb[0].mxu0
    %v1444 = vadd.f32 %v1371, %v1443
    %v1445 = vpop.f32.mrb[0].mxu0
    %v1446 = vadd.f32 %v1373, %v1445
    %v1447 = vpop.f32.mrb[0].mxu0
    %v1448 = vadd.f32 %v1375, %v1447
    %v1449 = vpop.f32.mrb[0].mxu0
    %v1450 = vadd.f32 %v1377, %v1449
    %1451 = vdwg.mxu0
    %1452 = vmatprep.subr.bf16.mxu0 %v1053
    %1453 = vmatpush1.bf16.msra.mxu0 %v1052
    %1454 = vmatprep.subr.bf16.mxu0 %v1057
    %1455 = vmatpush1.bf16.msra.mxu0 %v1056
    %1456 = vmatprep.subr.bf16.mxu0 %v1061
    %1457 = vmatpush1.bf16.msra.mxu0 %v1060
    %1458 = vmatprep.subr.bf16.mxu0 %v1065
    %1459 = vmatpush1.bf16.msra.mxu0 %v1064
    %1460 = vmatprep.subr.bf16.mxu0 %v1069
    %1461 = vmatpush1.bf16.msra.mxu0 %v1068
    %1462 = vmatprep.subr.bf16.mxu0 %v1073
    %1463 = vmatpush1.bf16.msra.mxu0 %v1072
    %1464 = vmatprep.subr.bf16.mxu0 %v1077
    %1465 = vmatpush1.bf16.msra.mxu0 %v1076
    %1466 = vmatprep.subr.bf16.mxu0 %v1081
    %1467 = vmatpush1.bf16.msra.mxu0 %v1080
    %1468 = vmatprep.subr.bf16.mxu0 %v1085
    %1469 = vmatpush1.bf16.msra.mxu0 %v1084
    %1470 = vmatprep.subr.bf16.mxu0 %v1089
    %1471 = vmatpush1.bf16.msra.mxu0 %v1088
    %1472 = vmatprep.subr.bf16.mxu0 %v1093
    %1473 = vmatpush1.bf16.msra.mxu0 %v1092
    %1474 = vmatprep.subr.bf16.mxu0 %v1097
    %1475 = vmatpush1.bf16.msra.mxu0 %v1096
    %1476 = vmatprep.subr.bf16.mxu0 %v1101
    %1477 = vmatpush1.bf16.msra.mxu0 %v1100
    %1478 = vmatprep.subr.bf16.mxu0 %v1105
    %1479 = vmatpush1.bf16.msra.mxu0 %v1104
    %1480 = vmatprep.subr.bf16.mxu0 %v1109
    %1481 = vmatpush1.bf16.msra.mxu0 %v1108
    %1482 = vmatprep.subr.bf16.mxu0 %v1113
    %1483 = vmatpush1.bf16.msra.mxu0 %v1112
    %1484 = vmatprep.mubr.bf16.mxu0 %v501
    %1485 = vmatmul.mubr.bf16.gmra.mrb[0].mxu0 %v500
    %v1486 = vpop.f32.mrb[0].mxu0
    %v1487 = vadd.f32 %v657, %v1486
    %v1488 = vpop.f32.mrb[0].mxu0
    %v1489 = vadd.f32 %v661, %v1488
    %v1490 = vpop.f32.mrb[0].mxu0
    %v1491 = vadd.f32 %v657, %v1490
    %v1492 = vpop.f32.mrb[0].mxu0
    %v1493 = vadd.f32 %v661, %v1492
    %1494 = vmatprep.mubr.bf16.mxu0 %v505
    %1495 = vmatmul.mubr.bf16.gmra.mrb[0].mxu0 %v504
    %v1496 = vpop.f32.mrb[0].mxu0
    %v1497 = vadd.f32 %v657, %v1496
    %v1498 = vpop.f32.mrb[0].mxu0
    %v1499 = vadd.f32 %v661, %v1498
    %v1500 = vpop.f32.mrb[0].mxu0
    %v1501 = vadd.f32 %v657, %v1500
    %v1502 = vpop.f32.mrb[0].mxu0
    %v1503 = vadd.f32 %v661, %v1502
    %1504 = vmatprep.mubr.bf16.mxu0 %v509
    %1505 = vmatmul.mubr.bf16.gmra.mrb[0].mxu0 %v508
    %v1506 = vpop.f32.mrb[0].mxu0
    %v1507 = vadd.f32 %v657, %v1506
    %v1508 = vpop.f32.mrb[0].mxu0
    %v1509 = vadd.f32 %v661, %v1508
    %v1510 = vpop.f32.mrb[0].mxu0
    %v1511 = vadd.f32 %v657, %v1510
    %v1512 = vpop.f32.mrb[0].mxu0
    %v1513 = vadd.f32 %v661, %v1512
    %1514 = vmatprep.mubr.bf16.mxu0 %v513
    %1515 = vmatmul.mubr.bf16.gmra.mrb[0].mxu0 %v512
    %v1516 = vpop.f32.mrb[0].mxu0
    %v1517 = vadd.f32 %v657, %v1516
    %v1518 = vpop.f32.mrb[0].mxu0
    %v1519 = vadd.f32 %v661, %v1518
    %v1520 = vpop.f32.mrb[0].mxu0
    %v1521 = vadd.f32 %v657, %v1520
    %v1522 = vpop.f32.mrb[0].mxu0
    %v1523 = vadd.f32 %v661, %v1522
    %1524 = vdwg.mxu0
    %1525 = vmatprep.subr.bf16.mxu0 %v1117
    %1526 = vmatpush1.bf16.msra.mxu0 %v1116
    %1527 = vmatprep.subr.bf16.mxu0 %v1121
    %1528 = vmatpush1.bf16.msra.mxu0 %v1120
    %1529 = vmatprep.subr.bf16.mxu0 %v1125
    %1530 = vmatpush1.bf16.msra.mxu0 %v1124
    %1531 = vmatprep.subr.bf16.mxu0 %v1129
    %1532 = vmatpush1.bf16.msra.mxu0 %v1128
    %1533 = vmatprep.subr.bf16.mxu0 %v1133
    %1534 = vmatpush1.bf16.msra.mxu0 %v1132
    %1535 = vmatprep.subr.bf16.mxu0 %v1137
    %1536 = vmatpush1.bf16.msra.mxu0 %v1136
    %1537 = vmatprep.subr.bf16.mxu0 %v1141
    %1538 = vmatpush1.bf16.msra.mxu0 %v1140
    %1539 = vmatprep.subr.bf16.mxu0 %v1145
    %1540 = vmatpush1.bf16.msra.mxu0 %v1144
    %1541 = vmatprep.subr.bf16.mxu0 %v1149
    %1542 = vmatpush1.bf16.msra.mxu0 %v1148
    %1543 = vmatprep.subr.bf16.mxu0 %v1153
    %1544 = vmatpush1.bf16.msra.mxu0 %v1152
    %1545 = vmatprep.subr.bf16.mxu0 %v1157
    %1546 = vmatpush1.bf16.msra.mxu0 %v1156
    %1547 = vmatprep.subr.bf16.mxu0 %v1161
    %1548 = vmatpush1.bf16.msra.mxu0 %v1160
    %1549 = vmatprep.subr.bf16.mxu0 %v1165
    %1550 = vmatpush1.bf16.msra.mxu0 %v1164
    %1551 = vmatprep.subr.bf16.mxu0 %v1169
    %1552 = vmatpush1.bf16.msra.mxu0 %v1168
    %1553 = vmatprep.subr.bf16.mxu0 %v1173
    %1554 = vmatpush1.bf16.msra.mxu0 %v1172
    %1555 = vmatprep.subr.bf16.mxu0 %v1177
    %1556 = vmatpush1.bf16.msra.mxu0 %v1176
    %1557 = vmatprep.mubr.bf16.mxu0 %v503
    %1558 = vmatmul.mubr.bf16.gmra.mrb[0].mxu0 %v502
    %v1559 = vpop.f32.mrb[0].mxu0
    %v1560 = vadd.f32 %v1487, %v1559
    %v1561 = vpop.f32.mrb[0].mxu0
    %v1562 = vadd.f32 %v1489, %v1561
    %v1563 = vpop.f32.mrb[0].mxu0
    %v1564 = vadd.f32 %v1491, %v1563
    %v1565 = vpop.f32.mrb[0].mxu0
    %v1566 = vadd.f32 %v1493, %v1565
    %1567 = vmatprep.mubr.bf16.mxu0 %v507
    %1568 = vmatmul.mubr.bf16.gmra.mrb[0].mxu0 %v506
    %v1569 = vpop.f32.mrb[0].mxu0
    %v1570 = vadd.f32 %v1497, %v1569
    %v1571 = vpop.f32.mrb[0].mxu0
    %v1572 = vadd.f32 %v1499, %v1571
    %v1573 = vpop.f32.mrb[0].mxu0
    %v1574 = vadd.f32 %v1501, %v1573
    %v1575 = vpop.f32.mrb[0].mxu0
    %v1576 = vadd.f32 %v1503, %v1575
    %1577 = vmatprep.mubr.bf16.mxu0 %v511
    %1578 = vmatmul.mubr.bf16.gmra.mrb[0].mxu0 %v510
    %v1579 = vpop.f32.mrb[0].mxu0
    %v1580 = vadd.f32 %v1507, %v1579
    %v1581 = vpop.f32.mrb[0].mxu0
    %v1582 = vadd.f32 %v1509, %v1581
    %v1583 = vpop.f32.mrb[0].mxu0
    %v1584 = vadd.f32 %v1511, %v1583
    %v1585 = vpop.f32.mrb[0].mxu0
    %v1586 = vadd.f32 %v1513, %v1585
    %1587 = vmatprep.mubr.bf16.mxu0 %v515
    %1588 = vmatmul.mubr.bf16.gmra.mrb[0].mxu0 %v514
    %v1589 = vpop.f32.mrb[0].mxu0
    %v1590 = vadd.f32 %v1517, %v1589
    %v1591 = vpop.f32.mrb[0].mxu0
    %v1592 = vadd.f32 %v1519, %v1591
    %v1593 = vpop.f32.mrb[0].mxu0
    %v1594 = vadd.f32 %v1521, %v1593
    %v1595 = vpop.f32.mrb[0].mxu0
    %v1596 = vadd.f32 %v1523, %v1595
    %1597 = vdwg.mxu0
    %v1598 = vadd.f32 %v1414, %v1416
    %v1599 = vadd.f32 %v1598, %v1560
    %v1600 = vadd.f32 %v1599, %v1562
    %1601 = vadd.xlane.f32.xlu0 %v1600
    %v1602 = vpop.xlane.xlu0 %1601
    %v1603 = vadd.f32 %v1418, %v1420
    %v1604 = vadd.f32 %v1603, %v1564
    %v1605 = vadd.f32 %v1604, %v1566
    %1606 = vadd.xlane.f32.xlu0 %v1605
    %v1607 = vpop.xlane.xlu0 %1606
    %v1608 = vadd.f32 %v1424, %v1426
    %v1609 = vadd.f32 %v1608, %v1570
    %v1610 = vadd.f32 %v1609, %v1572
    %1611 = vadd.xlane.f32.xlu0 %v1610
    %v1612 = vpop.xlane.xlu0 %1611
    %v1613 = vadd.f32 %v1428, %v1430
    %v1614 = vadd.f32 %v1613, %v1574
    %v1615 = vadd.f32 %v1614, %v1576
    %1616 = vadd.xlane.f32.xlu0 %v1615
    %v1617 = vpop.xlane.xlu0 %1616
    %v1618 = vadd.f32 %v1434, %v1436
    %v1619 = vadd.f32 %v1618, %v1580
    %v1620 = vadd.f32 %v1619, %v1582
    %1621 = vadd.xlane.f32.xlu0 %v1620
    %v1622 = vpop.xlane.xlu0 %1621
    %v1623 = vadd.f32 %v1438, %v1440
    %v1624 = vadd.f32 %v1623, %v1584
    %v1625 = vadd.f32 %v1624, %v1586
    %1626 = vadd.xlane.f32.xlu0 %v1625
    %v1627 = vpop.xlane.xlu0 %1626
    %v1628 = vadd.f32 %v1444, %v1446
    %v1629 = vadd.f32 %v1628, %v1590
    %v1630 = vadd.f32 %v1629, %v1592
    %1631 = vadd.xlane.f32.xlu0 %v1630
    %v1632 = vpop.xlane.xlu0 %1631
    %v1633 = vadd.f32 %v1448, %v1450
    %v1634 = vadd.f32 %v1633, %v1594
    %v1635 = vadd.f32 %v1634, %v1596
    %1636 = vadd.xlane.f32.xlu0 %v1635
    %v1637 = vpop.xlane.xlu0 %1636
    %v1638 = vmul.f32 %v1602, 0.001953125
    %v1639 = vmul.f32 %v1607, 0.001953125
    %v1640 = vmul.f32 %v1612, 0.001953125
    %v1641 = vmul.f32 %v1617, 0.001953125
    %v1642 = vmul.f32 %v1622, 0.001953125
    %v1643 = vmul.f32 %v1627, 0.001953125
    %v1644 = vmul.f32 %v1632, 0.001953125
    %v1645 = vmul.f32 %v1637, 0.001953125
    %v1646 = vsub.f32 %v1414, %v1638
    %v1647 = vsub.f32 %v1416, %v1638
    %v1648 = vsub.f32 %v1560, %v1638
    %v1649 = vsub.f32 %v1562, %v1638
    %v1650 = vsub.f32 %v1418, %v1639
    %v1651 = vsub.f32 %v1420, %v1639
    %v1652 = vsub.f32 %v1564, %v1639
    %v1653 = vsub.f32 %v1566, %v1639
    %v1654 = vsub.f32 %v1424, %v1640
    %v1655 = vsub.f32 %v1426, %v1640
    %v1656 = vsub.f32 %v1570, %v1640
    %v1657 = vsub.f32 %v1572, %v1640
    %v1658 = vsub.f32 %v1428, %v1641
    %v1659 = vsub.f32 %v1430, %v1641
    %v1660 = vsub.f32 %v1574, %v1641
    %v1661 = vsub.f32 %v1576, %v1641
    %v1662 = vsub.f32 %v1434, %v1642
    %v1663 = vsub.f32 %v1436, %v1642
    %v1664 = vsub.f32 %v1580, %v1642
    %v1665 = vsub.f32 %v1582, %v1642
    %v1666 = vsub.f32 %v1438, %v1643
    %v1667 = vsub.f32 %v1440, %v1643
    %v1668 = vsub.f32 %v1584, %v1643
    %v1669 = vsub.f32 %v1586, %v1643
    %v1670 = vsub.f32 %v1444, %v1644
    %v1671 = vsub.f32 %v1446, %v1644
    %v1672 = vsub.f32 %v1590, %v1644
    %v1673 = vsub.f32 %v1592, %v1644
    %v1674 = vsub.f32 %v1448, %v1645
    %v1675 = vsub.f32 %v1450, %v1645
    %v1676 = vsub.f32 %v1594, %v1645
    %v1677 = vsub.f32 %v1596, %v1645
    %v1678 = vmul.f32 %v1646, %v1646
    %v1679 = vmul.f32 %v1647, %v1647
    %v1680 = vmul.f32 %v1648, %v1648
    %v1681 = vmul.f32 %v1649, %v1649
    %v1682 = vmul.f32 %v1650, %v1650
    %v1683 = vmul.f32 %v1651, %v1651
    %v1684 = vmul.f32 %v1652, %v1652
    %v1685 = vmul.f32 %v1653, %v1653
    %v1686 = vmul.f32 %v1654, %v1654
    %v1687 = vmul.f32 %v1655, %v1655
    %v1688 = vmul.f32 %v1656, %v1656
    %v1689 = vmul.f32 %v1657, %v1657
    %v1690 = vmul.f32 %v1658, %v1658
    %v1691 = vmul.f32 %v1659, %v1659
    %v1692 = vmul.f32 %v1660, %v1660
    %v1693 = vmul.f32 %v1661, %v1661
    %v1694 = vmul.f32 %v1662, %v1662
    %v1695 = vmul.f32 %v1663, %v1663
    %v1696 = vmul.f32 %v1664, %v1664
    %v1697 = vmul.f32 %v1665, %v1665
    %v1698 = vmul.f32 %v1666, %v1666
    %v1699 = vmul.f32 %v1667, %v1667
    %v1700 = vmul.f32 %v1668, %v1668
    %v1701 = vmul.f32 %v1669, %v1669
    %v1702 = vmul.f32 %v1670, %v1670
    %v1703 = vmul.f32 %v1671, %v1671
    %v1704 = vmul.f32 %v1672, %v1672
    %v1705 = vmul.f32 %v1673, %v1673
    %v1706 = vmul.f32 %v1674, %v1674
    %v1707 = vmul.f32 %v1675, %v1675
    %v1708 = vmul.f32 %v1676, %v1676
    %v1709 = vmul.f32 %v1677, %v1677
    %v1710 = vadd.f32 %v1678, %v1679
    %v1711 = vadd.f32 %v1710, %v1680
    %v1712 = vadd.f32 %v1711, %v1681
    %1713 = vadd.xlane.f32.xlu0 %v1712
    %v1714 = vpop.xlane.xlu0 %1713
    %v1715 = vadd.f32 %v1682, %v1683
    %v1716 = vadd.f32 %v1715, %v1684
    %v1717 = vadd.f32 %v1716, %v1685
    %1718 = vadd.xlane.f32.xlu0 %v1717
    %v1719 = vpop.xlane.xlu0 %1718
    %v1720 = vadd.f32 %v1686, %v1687
    %v1721 = vadd.f32 %v1720, %v1688
    %v1722 = vadd.f32 %v1721, %v1689
    %1723 = vadd.xlane.f32.xlu0 %v1722
    %v1724 = vpop.xlane.xlu0 %1723
    %v1725 = vadd.f32 %v1690, %v1691
    %v1726 = vadd.f32 %v1725, %v1692
    %v1727 = vadd.f32 %v1726, %v1693
    %1728 = vadd.xlane.f32.xlu0 %v1727
    %v1729 = vpop.xlane.xlu0 %1728
    %v1730 = vadd.f32 %v1694, %v1695
    %v1731 = vadd.f32 %v1730, %v1696
    %v1732 = vadd.f32 %v1731, %v1697
    %1733 = vadd.xlane.f32.xlu0 %v1732
    %v1734 = vpop.xlane.xlu0 %1733
    %v1735 = vadd.f32 %v1698, %v1699
    %v1736 = vadd.f32 %v1735, %v1700
    %v1737 = vadd.f32 %v1736, %v1701
    %1738 = vadd.xlane.f32.xlu0 %v1737
    %v1739 = vpop.xlane.xlu0 %1738
    %v1740 = vadd.f32 %v1702, %v1703
    %v1741 = vadd.f32 %v1740, %v1704
    %v1742 = vadd.f32 %v1741, %v1705
    %1743 = vadd.xlane.f32.xlu0 %v1742
    %v1744 = vpop.xlane.xlu0 %1743
    %v1745 = vadd.f32 %v1706, %v1707
    %v1746 = vadd.f32 %v1745, %v1708
    %v1747 = vadd.f32 %v1746, %v1709
    %1748 = vadd.xlane.f32.xlu0 %v1747
    %v1749 = vpop.xlane.xlu0 %1748
    %v1750 = vmul.f32 %v1714, 0.001953125
    %v1751 = vmul.f32 %v1719, 0.001953125
    %v1752 = vmul.f32 %v1724, 0.001953125
    %v1753 = vmul.f32 %v1729, 0.001953125
    %v1754 = vmul.f32 %v1734, 0.001953125
    %v1755 = vmul.f32 %v1739, 0.001953125
    %v1756 = vmul.f32 %v1744, 0.001953125
    %v1757 = vmul.f32 %v1749, 0.001953125
    %v1758 = vadd.f32 %v1750, 1e-05
    %v1759 = vadd.f32 %v1751, 1e-05
    %v1760 = vadd.f32 %v1752, 1e-05
    %v1761 = vadd.f32 %v1753, 1e-05
    %v1762 = vadd.f32 %v1754, 1e-05
    %v1763 = vadd.f32 %v1755, 1e-05
    %v1764 = vadd.f32 %v1756, 1e-05
    %v1765 = vadd.f32 %v1757, 1e-05
    %v1766 = vrsqrt.pop %v1758
    %v1767 = vrsqrt.pop %v1759
    %v1768 = vrsqrt.pop %v1760
    %v1769 = vrsqrt.pop %v1761
    %v1770 = vrsqrt.pop %v1762
    %v1771 = vrsqrt.pop %v1763
    %v1772 = vrsqrt.pop %v1764
    %v1773 = vrsqrt.pop %v1765
    %v1774 = vmul.f32 %v1646, %v1766
    %v1775 = vmul.f32 %v1647, %v1766
    %v1776 = vmul.f32 %v1648, %v1766
    %v1777 = vmul.f32 %v1649, %v1766
    %v1778 = vmul.f32 %v1650, %v1767
    %v1779 = vmul.f32 %v1651, %v1767
    %v1780 = vmul.f32 %v1652, %v1767
    %v1781 = vmul.f32 %v1653, %v1767
    %v1782 = vmul.f32 %v1654, %v1768
    %v1783 = vmul.f32 %v1655, %v1768
    %v1784 = vmul.f32 %v1656, %v1768
    %v1785 = vmul.f32 %v1657, %v1768
    %v1786 = vmul.f32 %v1658, %v1769
    %v1787 = vmul.f32 %v1659, %v1769
    %v1788 = vmul.f32 %v1660, %v1769
    %v1789 = vmul.f32 %v1661, %v1769
    %v1790 = vmul.f32 %v1662, %v1770
    %v1791 = vmul.f32 %v1663, %v1770
    %v1792 = vmul.f32 %v1664, %v1770
    %v1793 = vmul.f32 %v1665, %v1770
    %v1794 = vmul.f32 %v1666, %v1771
    %v1795 = vmul.f32 %v1667, %v1771
    %v1796 = vmul.f32 %v1668, %v1771
    %v1797 = vmul.f32 %v1669, %v1771
    %v1798 = vmul.f32 %v1670, %v1772
    %v1799 = vmul.f32 %v1671, %v1772
    %v1800 = vmul.f32 %v1672, %v1772
    %v1801 = vmul.f32 %v1673, %v1772
    %v1802 = vmul.f32 %v1674, %v1773
    %v1803 = vmul.f32 %v1675, %v1773
    %v1804 = vmul.f32 %v1676, %v1773
    %v1805 = vmul.f32 %v1677, %v1773
    %v1806 = vld [vmem:[%s129] sm:$0xf]
    %v1808 = vlaneseq
    %v1809 = vshrl.u32 %v1808, 7
    %v1810 = vsub.s32 0, %v1809
    %v1811 = vrot.slane %v1806, %v1810
    %v1812 = vlaneseq
    %v1813 = vshrl.u32 %v1812, 7
    %v1814 = vsub.s32 1, %v1813
    %v1815 = vrot.slane %v1806, %v1814
    %v1816 = vlaneseq
    %v1817 = vshrl.u32 %v1816, 7
    %v1818 = vsub.s32 2, %v1817
    %v1819 = vrot.slane %v1806, %v1818
    %v1820 = vlaneseq
    %v1821 = vshrl.u32 %v1820, 7
    %v1822 = vsub.s32 3, %v1821
    %v1823 = vrot.slane %v1806, %v1822
    %v1828 = vmul.f32 %v1774, %v1811
    %v1829 = vmul.f32 %v1775, %v1815
    %v1830 = vmul.f32 %v1776, %v1819
    %v1831 = vmul.f32 %v1777, %v1823
    %v1832 = vmul.f32 %v1778, %v1811
    %v1833 = vmul.f32 %v1779, %v1815
    %v1834 = vmul.f32 %v1780, %v1819
    %v1835 = vmul.f32 %v1781, %v1823
    %v1836 = vmul.f32 %v1782, %v1811
    %v1837 = vmul.f32 %v1783, %v1815
    %v1838 = vmul.f32 %v1784, %v1819
    %v1839 = vmul.f32 %v1785, %v1823
    %v1840 = vmul.f32 %v1786, %v1811
    %v1841 = vmul.f32 %v1787, %v1815
    %v1842 = vmul.f32 %v1788, %v1819
    %v1843 = vmul.f32 %v1789, %v1823
    %v1844 = vmul.f32 %v1790, %v1811
    %v1845 = vmul.f32 %v1791, %v1815
    %v1846 = vmul.f32 %v1792, %v1819
    %v1847 = vmul.f32 %v1793, %v1823
    %v1848 = vmul.f32 %v1794, %v1811
    %v1849 = vmul.f32 %v1795, %v1815
    %v1850 = vmul.f32 %v1796, %v1819
    %v1851 = vmul.f32 %v1797, %v1823
    %v1852 = vmul.f32 %v1798, %v1811
    %v1853 = vmul.f32 %v1799, %v1815
    %v1854 = vmul.f32 %v1800, %v1819
    %v1855 = vmul.f32 %v1801, %v1823
    %v1856 = vmul.f32 %v1802, %v1811
    %v1857 = vmul.f32 %v1803, %v1815
    %v1858 = vmul.f32 %v1804, %v1819
    %v1859 = vmul.f32 %v1805, %v1823
    %v1860 = vld [vmem:[%s135] sm:$0xf]
    %v1862 = vlaneseq
    %v1863 = vshrl.u32 %v1862, 7
    %v1864 = vsub.s32 0, %v1863
    %v1865 = vrot.slane %v1860, %v1864
    %v1866 = vlaneseq
    %v1867 = vshrl.u32 %v1866, 7
    %v1868 = vsub.s32 1, %v1867
    %v1869 = vrot.slane %v1860, %v1868
    %v1870 = vlaneseq
    %v1871 = vshrl.u32 %v1870, 7
    %v1872 = vsub.s32 2, %v1871
    %v1873 = vrot.slane %v1860, %v1872
    %v1874 = vlaneseq
    %v1875 = vshrl.u32 %v1874, 7
    %v1876 = vsub.s32 3, %v1875
    %v1877 = vrot.slane %v1860, %v1876
    %v1882 = vadd.f32 %v1828, %v1865
    %v1883 = vadd.f32 %v1829, %v1869
    %v1884 = vadd.f32 %v1830, %v1873
    %v1885 = vadd.f32 %v1831, %v1877
    %v1886 = vadd.f32 %v1832, %v1865
    %v1887 = vadd.f32 %v1833, %v1869
    %v1888 = vadd.f32 %v1834, %v1873
    %v1889 = vadd.f32 %v1835, %v1877
    %v1890 = vadd.f32 %v1836, %v1865
    %v1891 = vadd.f32 %v1837, %v1869
    %v1892 = vadd.f32 %v1838, %v1873
    %v1893 = vadd.f32 %v1839, %v1877
    %v1894 = vadd.f32 %v1840, %v1865
    %v1895 = vadd.f32 %v1841, %v1869
    %v1896 = vadd.f32 %v1842, %v1873
    %v1897 = vadd.f32 %v1843, %v1877
    %v1898 = vadd.f32 %v1844, %v1865
    %v1899 = vadd.f32 %v1845, %v1869
    %v1900 = vadd.f32 %v1846, %v1873
    %v1901 = vadd.f32 %v1847, %v1877
    %v1902 = vadd.f32 %v1848, %v1865
    %v1903 = vadd.f32 %v1849, %v1869
    %v1904 = vadd.f32 %v1850, %v1873
    %v1905 = vadd.f32 %v1851, %v1877
    %v1906 = vadd.f32 %v1852, %v1865
    %v1907 = vadd.f32 %v1853, %v1869
    %v1908 = vadd.f32 %v1854, %v1873
    %v1909 = vadd.f32 %v1855, %v1877
    %v1910 = vadd.f32 %v1856, %v1865
    %v1911 = vadd.f32 %v1857, %v1869
    %v1912 = vadd.f32 %v1858, %v1873
    %v1913 = vadd.f32 %v1859, %v1877
    %v1914 = vpack.c.bf16 %v1886, %v1882
    %v1915 = vpack.c.bf16 %v1887, %v1883
    %v1916 = vpack.c.bf16 %v1888, %v1884
    %v1917 = vpack.c.bf16 %v1889, %v1885
    %v1918 = vpack.c.bf16 %v1894, %v1890
    %v1919 = vpack.c.bf16 %v1895, %v1891
    %v1920 = vpack.c.bf16 %v1896, %v1892
    %v1921 = vpack.c.bf16 %v1897, %v1893
    %v1922 = vpack.c.bf16 %v1902, %v1898
    %v1923 = vpack.c.bf16 %v1903, %v1899
    %v1924 = vpack.c.bf16 %v1904, %v1900
    %v1925 = vpack.c.bf16 %v1905, %v1901
    %v1926 = vpack.c.bf16 %v1910, %v1906
    %v1927 = vpack.c.bf16 %v1911, %v1907
    %v1928 = vpack.c.bf16 %v1912, %v1908
    %v1929 = vpack.c.bf16 %v1913, %v1909
    %v1946 = vunpack.c.l.b16 %v1914
    %v1947 = vunpack.c.l.b16 %v1915
    %v1948 = vunpack.c.l.b16 %v1916
    %v1949 = vunpack.c.l.b16 %v1917
    %v1950 = vunpack.c.h.b16 %v1914
    %v1951 = vunpack.c.h.b16 %v1915
    %v1952 = vunpack.c.h.b16 %v1916
    %v1953 = vunpack.c.h.b16 %v1917
    %v1954 = vunpack.c.l.b16 %v1918
    %v1955 = vunpack.c.l.b16 %v1919
    %v1956 = vunpack.c.l.b16 %v1920
    %v1957 = vunpack.c.l.b16 %v1921
    %v1958 = vunpack.c.h.b16 %v1918
    %v1959 = vunpack.c.h.b16 %v1919
    %v1960 = vunpack.c.h.b16 %v1920
    %v1961 = vunpack.c.h.b16 %v1921
    %v1962 = vunpack.c.l.b16 %v1922
    %v1963 = vunpack.c.l.b16 %v1923
    %v1964 = vunpack.c.l.b16 %v1924
    %v1965 = vunpack.c.l.b16 %v1925
    %v1966 = vunpack.c.h.b16 %v1922
    %v1967 = vunpack.c.h.b16 %v1923
    %v1968 = vunpack.c.h.b16 %v1924
    %v1969 = vunpack.c.h.b16 %v1925
    %v1970 = vunpack.c.l.b16 %v1926
    %v1971 = vunpack.c.l.b16 %v1927
    %v1972 = vunpack.c.l.b16 %v1928
    %v1973 = vunpack.c.l.b16 %v1929
    %v1974 = vunpack.c.h.b16 %v1926
    %v1975 = vunpack.c.h.b16 %v1927
    %v1976 = vunpack.c.h.b16 %v1928
    %v1977 = vunpack.c.h.b16 %v1929
    %v1978 = vpack.c.b16 %v1947, %v1946
    %v1979 = vpack.c.b16 %v1949, %v1948
    %v1980 = vpack.c.b16 %v1951, %v1950
    %v1981 = vpack.c.b16 %v1953, %v1952
    %v1982 = vpack.c.b16 %v1955, %v1954
    %v1983 = vpack.c.b16 %v1957, %v1956
    %v1984 = vpack.c.b16 %v1959, %v1958
    %v1985 = vpack.c.b16 %v1961, %v1960
    %v1986 = vpack.c.b16 %v1963, %v1962
    %v1987 = vpack.c.b16 %v1965, %v1964
    %v1988 = vpack.c.b16 %v1967, %v1966
    %v1989 = vpack.c.b16 %v1969, %v1968
    %v1990 = vpack.c.b16 %v1971, %v1970
    %v1991 = vpack.c.b16 %v1973, %v1972
    %v1992 = vpack.c.b16 %v1975, %v1974
    %v1993 = vpack.c.b16 %v1977, %v1976
    %2010 = vst [vmem:[#allocation4] sm:$0xff] %v1978
    %2011 = vst [vmem:[#allocation4 + $0x8] sm:$0xff] %v1979
    %2012 = vst [vmem:[#allocation4 + $0x10] sm:$0xff] %v1980
    %2013 = vst [vmem:[#allocation4 + $0x18] sm:$0xff] %v1981
    %2014 = vst [vmem:[#allocation4 + $0x20] sm:$0xff] %v1982
    %2015 = vst [vmem:[#allocation4 + $0x28] sm:$0xff] %v1983
    %2016 = vst [vmem:[#allocation4 + $0x30] sm:$0xff] %v1984
    %2017 = vst [vmem:[#allocation4 + $0x38] sm:$0xff] %v1985
    %2018 = vst [vmem:[#allocation4 + $0x40] sm:$0xff] %v1986
    %2019 = vst [vmem:[#allocation4 + $0x48] sm:$0xff] %v1987
    %2020 = vst [vmem:[#allocation4 + $0x50] sm:$0xff] %v1988
    %2021 = vst [vmem:[#allocation4 + $0x58] sm:$0xff] %v1989
    %2022 = vst [vmem:[#allocation4 + $0x60] sm:$0xff] %v1990
    %2023 = vst [vmem:[#allocation4 + $0x68] sm:$0xff] %v1991
    %2024 = vst [vmem:[#allocation4 + $0x70] sm:$0xff] %v1992
    %2025 = vst [vmem:[#allocation4 + $0x78] sm:$0xff] %v1993
    // Predicated region
    $region30: #{graphcast_encoder_embedder.2} parent=1 // pred_check
      _
    $region31: #{graphcast_encoder_embedder.2} parent=1 // pred_check_branch
      %2027 = sbr.rel (0) target = $region33
    $region32: #{graphcast_encoder_embedder.2} parent=1 // pred_region
      %s2029 = ssub.s32 2048, 2048
      %2030 = vsyncadd [#allocation5], %s2029
      %s2031 = sshll.u32 [#allocation4], 4
      %s2032 = int_to_ptr.vmem [resolvable:$true] %s2031
      %2037 = dma.vmem_to_hbm [thread:$0]  %s2032, 2048, %s8, [#allocation5], 256, 256, 16
    $region33: #{graphcast_encoder_embedder.2} parent=1 // pred_fallthru
      _
    // Predicated region
    $region34: #{graphcast_encoder_embedder.2} parent=1 // pred_check
      _
    $region35: #{graphcast_encoder_embedder.2} parent=1 // pred_check_branch
      %2039 = sbr.rel (0) target = $region37
    $region36: #{graphcast_encoder_embedder.2} parent=1 // pred_region
      %2040 = dma.done [#allocation5], 2048
    $region37: #{graphcast_encoder_embedder.2} parent=1 // pred_fallthru
      _
    %2041 = vsyncpa [#allocation5], 1

</llo_original>
